<compile_context>
chip_gen: v6e
topology: v6e:2x2x1
jax: 0.10.0
libtpu: 0.0.40
codegen_flags: <defaults>
</compile_context>

<pallas_src>
import numpy as np
import jax
import jax.numpy as jnp
from jax import lax
from jax.experimental import pallas as pl
from jax.experimental.pallas import tpu as pltpu

# ----------------------------------------------------------------------------
# Options (mirrors the char_cnn section of the ELMo options file);
# lstm.projection_dim chosen small (32) for the demo.
# ----------------------------------------------------------------------------
D_CHAR = 4
MAX_CHARS = 50
N_CHARS = 262
FILTERS = ((1, 4), (2, 8), (3, 16), (4, 32), (5, 64))
N_FILTERS = sum(n for _, n in FILTERS)            # 124 (real)
NF_PAD = 128                                      # padded filter/lane count
MAX_W = max(w for w, _ in FILTERS)                # 5
K_REAL = MAX_W * D_CHAR                           # 20  (widest window, flattened)
K_SLOT = 32                                       # per-timestep lane slot (20 real)
T_PACK = 4                                        # timesteps packed per 128 lanes
K_PACK = T_PACK * K_SLOT                          # 128 input lanes per slab
N_CONV_OUT = T_PACK * NF_PAD                      # 512 conv output lanes per slab
N_SLABS = -(-MAX_CHARS // T_PACK)                 # 13
T_TIME = T_PACK * (N_SLABS - 1) + (T_PACK - 1) + (MAX_W - 1) + 1   # 56
FIRST_MASKED_SLAB = (MAX_CHARS - MAX_W + 1) // T_PACK               # 11
N_MASKED_SLABS = N_SLABS - FIRST_MASKED_SLAB                        # 2
N_HIGHWAY = 2
OUT_DIM = 32
MASK_VAL = -1e30
TN_MAX = 256                                      # token tile upper bound


def _round_up(x, m):
    return ((x + m - 1) // m) * m


# ----------------------------------------------------------------------------
# Pallas kernel: fused conv-max-relu + 2 highway layers + projection.
# x_ref holds the packed im2col block (N_SLABS, TN, 128) in bf16; slab s,
# lane group j (32 lanes) carries timestep 4s+j's flattened window.  Each
# slab feeds one (TN,128) x (128,512) bf16 MXU matmul (block-diagonal conv
# weight); the temporal-validity mask is added only for the last two slabs.
# ----------------------------------------------------------------------------
def _elmo_char_kernel(x_ref, wc_ref, cmask_ref, bc_ref,
                      hw0w_ref, hw0b_ref, hw1w_ref, hw1b_ref,
                      pw_ref, pb_ref, out_ref):
    wc = wc_ref[...]                                         # (128, 512) bf16

    # --- char CNN: packed im2col matmuls + running max over time -------------
    m = None
    for s in range(N_SLABS):
        y = jnp.dot(x_ref[s], wc, preferred_element_type=jnp.float32)  # (TN,512)
        if s >= FIRST_MASKED_SLAB:                           # trace-time constant
            k = s - FIRST_MASKED_SLAB
            y = y + cmask_ref[k:k + 1, :]                    # invalid-time mask
        for j in range(T_PACK):                              # lane-aligned slices
            yj = y[:, j * NF_PAD:(j + 1) * NF_PAD]
            m = yj if m is None else jnp.maximum(m, yj)
    h = jnp.maximum(m + bc_ref[...], 0.0)                    # relu, (TN, 128) f32

    # --- highway layers: gate*x + (1-gate)*relu(Wn x + bn); [wn|wg] fused ----
    for w_ref, b_ref in ((hw0w_ref, hw0b_ref), (hw1w_ref, hw1b_ref)):
        ng = jnp.dot(h.astype(jnp.bfloat16), w_ref[...],
                     preferred_element_type=jnp.float32) + b_ref[...]   # (TN,256)
        nonlin = jnp.maximum(ng[:, :NF_PAD], 0.0)
        gate = 1.0 / (1.0 + jnp.exp(-ng[:, NF_PAD:]))        # exact sigmoid
        h = nonlin + gate * (h - nonlin)

    # --- final linear projection (output padded to 128 lanes) ----------------
    out = jnp.dot(h.astype(jnp.bfloat16), pw_ref[...],
                  preferred_element_type=jnp.float32) + pb_ref[...]
    out_ref[...] = out.astype(out_ref.dtype)


def _full(shape):
    return pl.BlockSpec(shape, lambda i: (0, 0))


def elmo_token_embedding_pallas(x_packed, params, tn):
    """x_packed: (N_SLABS, n_pad, 128) bf16 -> (n_pad, NF_PAD) f32."""
    _, n_pad, _ = x_packed.shape
    grid = (n_pad // tn,)
    in_specs = [
        pl.BlockSpec((N_SLABS, tn, K_PACK), lambda i: (0, i, 0)),
        _full((K_PACK, N_CONV_OUT)),                 # block-diag conv weight
        _full((N_MASKED_SLABS, N_CONV_OUT)),         # temporal-validity mask
        _full((1, NF_PAD)),                          # conv bias
        _full((NF_PAD, 2 * NF_PAD)), _full((1, 2 * NF_PAD)),
        _full((NF_PAD, 2 * NF_PAD)), _full((1, 2 * NF_PAD)),
        _full((NF_PAD, NF_PAD)), _full((1, NF_PAD)),
    ]
    out_spec = pl.BlockSpec((tn, NF_PAD), lambda i: (i, 0))
    fn = pl.pallas_call(
        _elmo_char_kernel,
        out_shape=jax.ShapeDtypeStruct((n_pad, NF_PAD), jnp.float32),
        grid_spec=pltpu.PrefetchScalarGridSpec(
            num_scalar_prefetch=0, grid=grid,
            in_specs=in_specs, out_specs=out_spec),
        compiler_params=pltpu.CompilerParams(
            dimension_semantics=("parallel",),
            vmem_limit_bytes=32 * 1024 * 1024),
    )
    hw0, hw1 = params['hw']
    return fn(x_packed, params['w_conv'], params['conv_mask'], params['b_conv'],
              hw0[0], hw0[1], hw1[0], hw1[1], params['pw'], params['pb'])


# ----------------------------------------------------------------------------
# Deterministic parameter construction (shapes implied by __init__),
# pre-fused / zero-padded into the kernel-friendly layouts.
# ----------------------------------------------------------------------------
def _make_bos_eos(char_id):
    # ELMoCharacterMapper: [bow, <S|/S>, eow, pad, ...] then +1 (0 = padding).
    ids = np.full((MAX_CHARS,), 260, dtype=np.int32)
    ids[0], ids[1], ids[2] = 258, char_id, 259
    return jnp.asarray(ids + 1)


def init_params(key):
    keys = jax.random.split(key, 20)
    emb = 0.1 * jax.random.normal(keys[0], (N_CHARS + 1, D_CHAR), jnp.float32)
    emb = emb.at[0].set(0.0)                     # padding row stays zero

    # Per-timestep (32, 128) conv weight: rows 0..19 = flattened (dt-major,
    # channel-minor) window weights, rows 20..31 and cols 124..127 are zero.
    w_small = np.zeros((K_SLOT, NF_PAD), np.float32)
    b_conv = np.zeros((1, NF_PAD), np.float32)
    col = 0
    for i, (w, num) in enumerate(FILTERS):
        # torch Conv1d weight shape: (num, D_CHAR, w)
        wt = np.asarray(jax.random.normal(keys[1 + i], (num, D_CHAR, w),
                                          jnp.float32)) / np.sqrt(w * D_CHAR)
        b = 0.1 * np.asarray(jax.random.normal(keys[6 + i], (num,), jnp.float32))
        w_small[: w * D_CHAR, col: col + num] = (
            np.transpose(wt, (2, 1, 0)).reshape(w * D_CHAR, num))
        b_conv[0, col: col + num] = b
        col += num

    # Block-diagonal (128, 512) weight: lane group j of the input maps to
    # output columns [128j, 128j+128) (4 timesteps per matmul).
    w_conv = np.zeros((K_PACK, N_CONV_OUT), np.float32)
    for j in range(T_PACK):
        w_conv[j * K_SLOT:(j + 1) * K_SLOT, j * NF_PAD:(j + 1) * NF_PAD] = w_small

    # Additive temporal-validity mask for the trailing slabs only: timestep
    # t = 4s+j is invalid for width w iff t > MAX_CHARS - w; timesteps >= 50
    # are pure padding and masked for every lane.
    conv_mask = np.zeros((N_MASKED_SLABS, N_CONV_OUT), np.float32)
    for s in range(FIRST_MASKED_SLAB, N_SLABS):
        for j in range(T_PACK):
            t = T_PACK * s + j
            base = j * NF_PAD
            if t >= MAX_CHARS:
                conv_mask[s - FIRST_MASKED_SLAB, base:base + NF_PAD] = MASK_VAL
            else:
                c = 0
                for (w, num) in FILTERS:
                    if t > MAX_CHARS - w:
                        conv_mask[s - FIRST_MASKED_SLAB, base + c:base + c + num] = MASK_VAL
                    c += num

    hw = []
    for k in range(N_HIGHWAY):
        kk = jax.random.split(keys[11 + k], 4)
        s = 1.0 / np.sqrt(N_FILTERS)
        wn = s * np.asarray(jax.random.normal(kk[0], (N_FILTERS, N_FILTERS), jnp.float32))
        bn = 0.1 * np.asarray(jax.random.normal(kk[1], (N_FILTERS,), jnp.float32))
        wg = s * np.asarray(jax.random.normal(kk[2], (N_FILTERS, N_FILTERS), jnp.float32))
        bg = 0.1 * np.asarray(jax.random.normal(kk[3], (N_FILTERS,), jnp.float32))
        wf = np.zeros((NF_PAD, 2 * NF_PAD), np.float32)   # [wn | wg] fused
        bf = np.zeros((1, 2 * NF_PAD), np.float32)
        wf[:N_FILTERS, :N_FILTERS] = wn
        wf[:N_FILTERS, NF_PAD:NF_PAD + N_FILTERS] = wg
        bf[0, :N_FILTERS] = bn
        bf[0, NF_PAD:NF_PAD + N_FILTERS] = bg
        hw.append((jnp.asarray(wf, jnp.bfloat16), jnp.asarray(bf)))

    pw = np.zeros((NF_PAD, NF_PAD), np.float32)           # output padded to 128 lanes
    pb = np.zeros((1, NF_PAD), np.float32)
    pw[:N_FILTERS, :OUT_DIM] = (1.0 / np.sqrt(N_FILTERS)) * np.asarray(
        jax.random.normal(keys[13], (N_FILTERS, OUT_DIM), jnp.float32))
    pb[0, :OUT_DIM] = 0.1 * np.asarray(
        jax.random.normal(keys[14], (OUT_DIM,), jnp.float32))

    return dict(char_emb=emb,
                w_conv=jnp.asarray(w_conv, jnp.bfloat16),
                b_conv=jnp.asarray(b_conv),
                conv_mask=jnp.asarray(conv_mask),
                hw=hw,
                pw=jnp.asarray(pw, jnp.bfloat16),
                pb=jnp.asarray(pb),
                bos=_make_bos_eos(256), eos=_make_bos_eos(257))


# ----------------------------------------------------------------------------
# Forward pass (glue in plain JAX, hot path in the Pallas kernel).
# ----------------------------------------------------------------------------
def custom_elmo_character_encoder(inputs, params):
    """inputs: (B, S, 50) int32 char ids -> dict(mask, token_embedding)."""
    B, S, C = inputs.shape
    assert C == MAX_CHARS
    mask = ((inputs > 0).astype(jnp.int32).sum(axis=-1) > 0).astype(jnp.int32)
    lengths = mask.sum(axis=1)

    # add_sentence_boundary_token_ids (data-dependent scatter; kept in JAX glue)
    ids = jnp.zeros((B, S + 2, C), dtype=inputs.dtype)
    ids = ids.at[:, 1:-1, :].set(inputs)
    ids = ids.at[:, 0, :].set(params['bos'][None, :])
    ids = ids.at[jnp.arange(B), lengths + 1, :].set(params['eos'][None, :])
    mask_bos_eos = ((ids > 0).astype(jnp.int32).sum(axis=-1) > 0).astype(jnp.int32)

    n = B * (S + 2)
    n16 = _round_up(n, 16)                     # 16-align for bf16 sublane packing
    # keep >= 2 grid steps when possible so v7x uses both TensorCores
    tn = min(TN_MAX, max(16, _round_up((n16 + 1) // 2, 16)))
    n_pad = _round_up(n16, tn)

    # Time-major char-embedding gather.  Only the small int32 id matrix is
    # transposed; the expanded window tensor is built directly in the kernel
    # layout.  Padded ids (0) hit the zero embedding row.
    # TODO(synk): the embedding gather has no clean rectangular-BlockSpec
    # Pallas form; it stays in XLA here.
    ids_flat = ids.reshape(n, C)
    ids_flat = jnp.pad(ids_flat, ((0, n_pad - n), (0, T_TIME - C)))
    ids_tm = jnp.transpose(ids_flat, (1, 0))                       # (T_TIME, n_pad)
    emb_tm = jnp.take(params['char_emb'].astype(jnp.bfloat16),
                      ids_tm, axis=0)                              # (T_TIME, n_pad, 4)

    # Packed im2col: slab s, lane group j (32 lanes) holds timestep 4s+j's
    # flattened window (dt-major, channel-minor, 20 real + 12 zero lanes).
    pieces = []
    zpad = jnp.zeros((N_SLABS, n_pad, K_SLOT - K_REAL), jnp.bfloat16)
    limit_extra = T_PACK * (N_SLABS - 1) + 1
    for j in range(T_PACK):
        for dt in range(MAX_W):
            start = j + dt
            pieces.append(lax.slice_in_dim(emb_tm, start, start + limit_extra,
                                           stride=T_PACK, axis=0))  # (N_SLABS, n_pad, 4)
        pieces.append(zpad)
    x_packed = jnp.concatenate(pieces, axis=-1)                     # (N_SLABS, n_pad, 128)

    out = elmo_token_embedding_pallas(x_packed, params, tn)         # (n_pad, 128) f32
    token_embedding = out[:n, :OUT_DIM].reshape(B, S + 2, OUT_DIM)
    return dict(mask=mask_bos_eos, token_embedding=token_embedding)


if __name__ == "__main__":
    key = jax.random.PRNGKey(0)
    k_ids, k_params = jax.random.split(key)
    B, S = 2, 8
    inputs = jax.random.randint(k_ids, (B, S, MAX_CHARS), 1, N_CHARS + 1,
                                dtype=jnp.int32)
    # variable sequence lengths / token lengths to exercise BOS/EOS + masking
    inputs = inputs.at[1, 6:, :].set(0)      # batch 1 has only 6 real tokens
    inputs = inputs.at[0, :, 12:].set(0)     # batch 0 tokens use only 12 chars

    params = init_params(k_params)
    forward = jax.jit(custom_elmo_character_encoder)
    out = forward(inputs, params)
    jax.block_until_ready(out['token_embedding'])
    jax.block_until_ready(out['mask'])
    assert out['token_embedding'].shape == (B, S + 2, OUT_DIM)
    assert out['mask'].shape == (B, S + 2)
    assert bool(jnp.all(jnp.isfinite(out['token_embedding'])))
    print("KERNEL_OK")
</pallas_src>

<mosaic_0001>
module attributes {stable_mosaic.version = 11 : i64} {
  func.func @_elmo_char_kernel(%arg0: i32, %arg1: memref<13x16x128xbf16, #tpu.memory_space<vmem>>, %arg2: memref<128x512xbf16, #tpu.memory_space<vmem>>, %arg3: memref<2x512xf32, #tpu.memory_space<vmem>>, %arg4: memref<1x128xf32, #tpu.memory_space<vmem>>, %arg5: memref<128x256xbf16, #tpu.memory_space<vmem>>, %arg6: memref<1x256xf32, #tpu.memory_space<vmem>>, %arg7: memref<128x256xbf16, #tpu.memory_space<vmem>>, %arg8: memref<1x256xf32, #tpu.memory_space<vmem>>, %arg9: memref<128x128xbf16, #tpu.memory_space<vmem>>, %arg10: memref<1x128xf32, #tpu.memory_space<vmem>>, %arg11: memref<16x128xf32, #tpu.memory_space<vmem>>) attributes {dimension_semantics = [#tpu.dimension_semantics<parallel>], iteration_bounds = array<i64: 2>, scalar_prefetch = 0 : i64, scratch_operands = 0 : i64, tpu.core_type = #tpu.core_type<tc>, window_params = [{transform_indices = @transform_0, window_bounds = array<i64: 13, 16, 128>}, {pipeline_mode = #tpu.pipeline_mode<synchronous>, transform_indices = @transform_1, window_bounds = array<i64: 128, 512>}, {pipeline_mode = #tpu.pipeline_mode<synchronous>, transform_indices = @transform_2, window_bounds = array<i64: 2, 512>}, {pipeline_mode = #tpu.pipeline_mode<synchronous>, transform_indices = @transform_3, window_bounds = array<i64: 1, 128>}, {pipeline_mode = #tpu.pipeline_mode<synchronous>, transform_indices = @transform_4, window_bounds = array<i64: 128, 256>}, {pipeline_mode = #tpu.pipeline_mode<synchronous>, transform_indices = @transform_5, window_bounds = array<i64: 1, 256>}, {pipeline_mode = #tpu.pipeline_mode<synchronous>, transform_indices = @transform_6, window_bounds = array<i64: 128, 256>}, {pipeline_mode = #tpu.pipeline_mode<synchronous>, transform_indices = @transform_7, window_bounds = array<i64: 1, 256>}, {pipeline_mode = #tpu.pipeline_mode<synchronous>, transform_indices = @transform_8, window_bounds = array<i64: 128, 128>}, {pipeline_mode = #tpu.pipeline_mode<synchronous>, transform_indices = @transform_9, window_bounds = array<i64: 1, 128>}, {transform_indices = @transform_10, window_bounds = array<i64: 16, 128>}]} {
    %c0 = arith.constant 0 : index
    %c0_0 = arith.constant 0 : index
    %0 = vector.load %arg2[%c0, %c0_0] : memref<128x512xbf16, #tpu.memory_space<vmem>>, vector<128x512xbf16>
    %c0_1 = arith.constant 0 : index
    %c0_2 = arith.constant 0 : index
    %c0_3 = arith.constant 0 : index
    %1 = vector.load %arg1[%c0_1, %c0_2, %c0_3] : memref<13x16x128xbf16, #tpu.memory_space<vmem>>, vector<1x16x128xbf16>
    %2 = vector.shape_cast %1 : vector<1x16x128xbf16> to vector<16x128xbf16>
    %cst = arith.constant dense<0.000000e+00> : vector<16x512xf32>
    %3 = tpu.matmul %2, %0, %cst {dimension_numbers = #tpu.dot_dimension_numbers<[1], [0], [0], [1], [0, 0, 1, 1], [], []>} : vector<16x128xbf16>, vector<128x512xbf16>, vector<16x512xf32> -> vector<16x512xf32>
    %4 = vector.extract_strided_slice %3 {offsets = [0, 0], sizes = [16, 128], strides = [1, 1]} : vector<16x512xf32> to vector<16x128xf32>
    %5 = vector.extract_strided_slice %3 {offsets = [0, 128], sizes = [16, 128], strides = [1, 1]} : vector<16x512xf32> to vector<16x128xf32>
    %6 = arith.maximumf %4, %5 : vector<16x128xf32>
    %7 = vector.extract_strided_slice %3 {offsets = [0, 256], sizes = [16, 128], strides = [1, 1]} : vector<16x512xf32> to vector<16x128xf32>
    %8 = arith.maximumf %6, %7 : vector<16x128xf32>
    %9 = vector.extract_strided_slice %3 {offsets = [0, 384], sizes = [16, 128], strides = [1, 1]} : vector<16x512xf32> to vector<16x128xf32>
    %10 = arith.maximumf %8, %9 : vector<16x128xf32>
    %c1 = arith.constant 1 : index
    %c0_4 = arith.constant 0 : index
    %c0_5 = arith.constant 0 : index
    %11 = vector.load %arg1[%c1, %c0_4, %c0_5] : memref<13x16x128xbf16, #tpu.memory_space<vmem>>, vector<1x16x128xbf16>
    %12 = vector.shape_cast %11 : vector<1x16x128xbf16> to vector<16x128xbf16>
    %cst_6 = arith.constant dense<0.000000e+00> : vector<16x512xf32>
    %13 = tpu.matmul %12, %0, %cst_6 {dimension_numbers = #tpu.dot_dimension_numbers<[1], [0], [0], [1], [0, 0, 1, 1], [], []>} : vector<16x128xbf16>, vector<128x512xbf16>, vector<16x512xf32> -> vector<16x512xf32>
    %14 = vector.extract_strided_slice %13 {offsets = [0, 0], sizes = [16, 128], strides = [1, 1]} : vector<16x512xf32> to vector<16x128xf32>
    %15 = arith.maximumf %10, %14 : vector<16x128xf32>
    %16 = vector.extract_strided_slice %13 {offsets = [0, 128], sizes = [16, 128], strides = [1, 1]} : vector<16x512xf32> to vector<16x128xf32>
    %17 = arith.maximumf %15, %16 : vector<16x128xf32>
    %18 = vector.extract_strided_slice %13 {offsets = [0, 256], sizes = [16, 128], strides = [1, 1]} : vector<16x512xf32> to vector<16x128xf32>
    %19 = arith.maximumf %17, %18 : vector<16x128xf32>
    %20 = vector.extract_strided_slice %13 {offsets = [0, 384], sizes = [16, 128], strides = [1, 1]} : vector<16x512xf32> to vector<16x128xf32>
    %21 = arith.maximumf %19, %20 : vector<16x128xf32>
    %c2 = arith.constant 2 : index
    %c0_7 = arith.constant 0 : index
    %c0_8 = arith.constant 0 : index
    %22 = vector.load %arg1[%c2, %c0_7, %c0_8] : memref<13x16x128xbf16, #tpu.memory_space<vmem>>, vector<1x16x128xbf16>
    %23 = vector.shape_cast %22 : vector<1x16x128xbf16> to vector<16x128xbf16>
    %cst_9 = arith.constant dense<0.000000e+00> : vector<16x512xf32>
    %24 = tpu.matmul %23, %0, %cst_9 {dimension_numbers = #tpu.dot_dimension_numbers<[1], [0], [0], [1], [0, 0, 1, 1], [], []>} : vector<16x128xbf16>, vector<128x512xbf16>, vector<16x512xf32> -> vector<16x512xf32>
    %25 = vector.extract_strided_slice %24 {offsets = [0, 0], sizes = [16, 128], strides = [1, 1]} : vector<16x512xf32> to vector<16x128xf32>
    %26 = arith.maximumf %21, %25 : vector<16x128xf32>
    %27 = vector.extract_strided_slice %24 {offsets = [0, 128], sizes = [16, 128], strides = [1, 1]} : vector<16x512xf32> to vector<16x128xf32>
    %28 = arith.maximumf %26, %27 : vector<16x128xf32>
    %29 = vector.extract_strided_slice %24 {offsets = [0, 256], sizes = [16, 128], strides = [1, 1]} : vector<16x512xf32> to vector<16x128xf32>
    %30 = arith.maximumf %28, %29 : vector<16x128xf32>
    %31 = vector.extract_strided_slice %24 {offsets = [0, 384], sizes = [16, 128], strides = [1, 1]} : vector<16x512xf32> to vector<16x128xf32>
    %32 = arith.maximumf %30, %31 : vector<16x128xf32>
    %c3 = arith.constant 3 : index
    %c0_10 = arith.constant 0 : index
    %c0_11 = arith.constant 0 : index
    %33 = vector.load %arg1[%c3, %c0_10, %c0_11] : memref<13x16x128xbf16, #tpu.memory_space<vmem>>, vector<1x16x128xbf16>
    %34 = vector.shape_cast %33 : vector<1x16x128xbf16> to vector<16x128xbf16>
    %cst_12 = arith.constant dense<0.000000e+00> : vector<16x512xf32>
    %35 = tpu.matmul %34, %0, %cst_12 {dimension_numbers = #tpu.dot_dimension_numbers<[1], [0], [0], [1], [0, 0, 1, 1], [], []>} : vector<16x128xbf16>, vector<128x512xbf16>, vector<16x512xf32> -> vector<16x512xf32>
    %36 = vector.extract_strided_slice %35 {offsets = [0, 0], sizes = [16, 128], strides = [1, 1]} : vector<16x512xf32> to vector<16x128xf32>
    %37 = arith.maximumf %32, %36 : vector<16x128xf32>
    %38 = vector.extract_strided_slice %35 {offsets = [0, 128], sizes = [16, 128], strides = [1, 1]} : vector<16x512xf32> to vector<16x128xf32>
    %39 = arith.maximumf %37, %38 : vector<16x128xf32>
    %40 = vector.extract_strided_slice %35 {offsets = [0, 256], sizes = [16, 128], strides = [1, 1]} : vector<16x512xf32> to vector<16x128xf32>
    %41 = arith.maximumf %39, %40 : vector<16x128xf32>
    %42 = vector.extract_strided_slice %35 {offsets = [0, 384], sizes = [16, 128], strides = [1, 1]} : vector<16x512xf32> to vector<16x128xf32>
    %43 = arith.maximumf %41, %42 : vector<16x128xf32>
    %c4 = arith.constant 4 : index
    %c0_13 = arith.constant 0 : index
    %c0_14 = arith.constant 0 : index
    %44 = vector.load %arg1[%c4, %c0_13, %c0_14] : memref<13x16x128xbf16, #tpu.memory_space<vmem>>, vector<1x16x128xbf16>
    %45 = vector.shape_cast %44 : vector<1x16x128xbf16> to vector<16x128xbf16>
    %cst_15 = arith.constant dense<0.000000e+00> : vector<16x512xf32>
    %46 = tpu.matmul %45, %0, %cst_15 {dimension_numbers = #tpu.dot_dimension_numbers<[1], [0], [0], [1], [0, 0, 1, 1], [], []>} : vector<16x128xbf16>, vector<128x512xbf16>, vector<16x512xf32> -> vector<16x512xf32>
    %47 = vector.extract_strided_slice %46 {offsets = [0, 0], sizes = [16, 128], strides = [1, 1]} : vector<16x512xf32> to vector<16x128xf32>
    %48 = arith.maximumf %43, %47 : vector<16x128xf32>
    %49 = vector.extract_strided_slice %46 {offsets = [0, 128], sizes = [16, 128], strides = [1, 1]} : vector<16x512xf32> to vector<16x128xf32>
    %50 = arith.maximumf %48, %49 : vector<16x128xf32>
    %51 = vector.extract_strided_slice %46 {offsets = [0, 256], sizes = [16, 128], strides = [1, 1]} : vector<16x512xf32> to vector<16x128xf32>
    %52 = arith.maximumf %50, %51 : vector<16x128xf32>
    %53 = vector.extract_strided_slice %46 {offsets = [0, 384], sizes = [16, 128], strides = [1, 1]} : vector<16x512xf32> to vector<16x128xf32>
    %54 = arith.maximumf %52, %53 : vector<16x128xf32>
    %c5 = arith.constant 5 : index
    %c0_16 = arith.constant 0 : index
    %c0_17 = arith.constant 0 : index
    %55 = vector.load %arg1[%c5, %c0_16, %c0_17] : memref<13x16x128xbf16, #tpu.memory_space<vmem>>, vector<1x16x128xbf16>
    %56 = vector.shape_cast %55 : vector<1x16x128xbf16> to vector<16x128xbf16>
    %cst_18 = arith.constant dense<0.000000e+00> : vector<16x512xf32>
    %57 = tpu.matmul %56, %0, %cst_18 {dimension_numbers = #tpu.dot_dimension_numbers<[1], [0], [0], [1], [0, 0, 1, 1], [], []>} : vector<16x128xbf16>, vector<128x512xbf16>, vector<16x512xf32> -> vector<16x512xf32>
    %58 = vector.extract_strided_slice %57 {offsets = [0, 0], sizes = [16, 128], strides = [1, 1]} : vector<16x512xf32> to vector<16x128xf32>
    %59 = arith.maximumf %54, %58 : vector<16x128xf32>
    %60 = vector.extract_strided_slice %57 {offsets = [0, 128], sizes = [16, 128], strides = [1, 1]} : vector<16x512xf32> to vector<16x128xf32>
    %61 = arith.maximumf %59, %60 : vector<16x128xf32>
    %62 = vector.extract_strided_slice %57 {offsets = [0, 256], sizes = [16, 128], strides = [1, 1]} : vector<16x512xf32> to vector<16x128xf32>
    %63 = arith.maximumf %61, %62 : vector<16x128xf32>
    %64 = vector.extract_strided_slice %57 {offsets = [0, 384], sizes = [16, 128], strides = [1, 1]} : vector<16x512xf32> to vector<16x128xf32>
    %65 = arith.maximumf %63, %64 : vector<16x128xf32>
    %c6 = arith.constant 6 : index
    %c0_19 = arith.constant 0 : index
    %c0_20 = arith.constant 0 : index
    %66 = vector.load %arg1[%c6, %c0_19, %c0_20] : memref<13x16x128xbf16, #tpu.memory_space<vmem>>, vector<1x16x128xbf16>
    %67 = vector.shape_cast %66 : vector<1x16x128xbf16> to vector<16x128xbf16>
    %cst_21 = arith.constant dense<0.000000e+00> : vector<16x512xf32>
    %68 = tpu.matmul %67, %0, %cst_21 {dimension_numbers = #tpu.dot_dimension_numbers<[1], [0], [0], [1], [0, 0, 1, 1], [], []>} : vector<16x128xbf16>, vector<128x512xbf16>, vector<16x512xf32> -> vector<16x512xf32>
    %69 = vector.extract_strided_slice %68 {offsets = [0, 0], sizes = [16, 128], strides = [1, 1]} : vector<16x512xf32> to vector<16x128xf32>
    %70 = arith.maximumf %65, %69 : vector<16x128xf32>
    %71 = vector.extract_strided_slice %68 {offsets = [0, 128], sizes = [16, 128], strides = [1, 1]} : vector<16x512xf32> to vector<16x128xf32>
    %72 = arith.maximumf %70, %71 : vector<16x128xf32>
    %73 = vector.extract_strided_slice %68 {offsets = [0, 256], sizes = [16, 128], strides = [1, 1]} : vector<16x512xf32> to vector<16x128xf32>
    %74 = arith.maximumf %72, %73 : vector<16x128xf32>
    %75 = vector.extract_strided_slice %68 {offsets = [0, 384], sizes = [16, 128], strides = [1, 1]} : vector<16x512xf32> to vector<16x128xf32>
    %76 = arith.maximumf %74, %75 : vector<16x128xf32>
    %c7 = arith.constant 7 : index
    %c0_22 = arith.constant 0 : index
    %c0_23 = arith.constant 0 : index
    %77 = vector.load %arg1[%c7, %c0_22, %c0_23] : memref<13x16x128xbf16, #tpu.memory_space<vmem>>, vector<1x16x128xbf16>
    %78 = vector.shape_cast %77 : vector<1x16x128xbf16> to vector<16x128xbf16>
    %cst_24 = arith.constant dense<0.000000e+00> : vector<16x512xf32>
    %79 = tpu.matmul %78, %0, %cst_24 {dimension_numbers = #tpu.dot_dimension_numbers<[1], [0], [0], [1], [0, 0, 1, 1], [], []>} : vector<16x128xbf16>, vector<128x512xbf16>, vector<16x512xf32> -> vector<16x512xf32>
    %80 = vector.extract_strided_slice %79 {offsets = [0, 0], sizes = [16, 128], strides = [1, 1]} : vector<16x512xf32> to vector<16x128xf32>
    %81 = arith.maximumf %76, %80 : vector<16x128xf32>
    %82 = vector.extract_strided_slice %79 {offsets = [0, 128], sizes = [16, 128], strides = [1, 1]} : vector<16x512xf32> to vector<16x128xf32>
    %83 = arith.maximumf %81, %82 : vector<16x128xf32>
    %84 = vector.extract_strided_slice %79 {offsets = [0, 256], sizes = [16, 128], strides = [1, 1]} : vector<16x512xf32> to vector<16x128xf32>
    %85 = arith.maximumf %83, %84 : vector<16x128xf32>
    %86 = vector.extract_strided_slice %79 {offsets = [0, 384], sizes = [16, 128], strides = [1, 1]} : vector<16x512xf32> to vector<16x128xf32>
    %87 = arith.maximumf %85, %86 : vector<16x128xf32>
    %c8 = arith.constant 8 : index
    %c0_25 = arith.constant 0 : index
    %c0_26 = arith.constant 0 : index
    %88 = vector.load %arg1[%c8, %c0_25, %c0_26] : memref<13x16x128xbf16, #tpu.memory_space<vmem>>, vector<1x16x128xbf16>
    %89 = vector.shape_cast %88 : vector<1x16x128xbf16> to vector<16x128xbf16>
    %cst_27 = arith.constant dense<0.000000e+00> : vector<16x512xf32>
    %90 = tpu.matmul %89, %0, %cst_27 {dimension_numbers = #tpu.dot_dimension_numbers<[1], [0], [0], [1], [0, 0, 1, 1], [], []>} : vector<16x128xbf16>, vector<128x512xbf16>, vector<16x512xf32> -> vector<16x512xf32>
    %91 = vector.extract_strided_slice %90 {offsets = [0, 0], sizes = [16, 128], strides = [1, 1]} : vector<16x512xf32> to vector<16x128xf32>
    %92 = arith.maximumf %87, %91 : vector<16x128xf32>
    %93 = vector.extract_strided_slice %90 {offsets = [0, 128], sizes = [16, 128], strides = [1, 1]} : vector<16x512xf32> to vector<16x128xf32>
    %94 = arith.maximumf %92, %93 : vector<16x128xf32>
    %95 = vector.extract_strided_slice %90 {offsets = [0, 256], sizes = [16, 128], strides = [1, 1]} : vector<16x512xf32> to vector<16x128xf32>
    %96 = arith.maximumf %94, %95 : vector<16x128xf32>
    %97 = vector.extract_strided_slice %90 {offsets = [0, 384], sizes = [16, 128], strides = [1, 1]} : vector<16x512xf32> to vector<16x128xf32>
    %98 = arith.maximumf %96, %97 : vector<16x128xf32>
    %c9 = arith.constant 9 : index
    %c0_28 = arith.constant 0 : index
    %c0_29 = arith.constant 0 : index
    %99 = vector.load %arg1[%c9, %c0_28, %c0_29] : memref<13x16x128xbf16, #tpu.memory_space<vmem>>, vector<1x16x128xbf16>
    %100 = vector.shape_cast %99 : vector<1x16x128xbf16> to vector<16x128xbf16>
    %cst_30 = arith.constant dense<0.000000e+00> : vector<16x512xf32>
    %101 = tpu.matmul %100, %0, %cst_30 {dimension_numbers = #tpu.dot_dimension_numbers<[1], [0], [0], [1], [0, 0, 1, 1], [], []>} : vector<16x128xbf16>, vector<128x512xbf16>, vector<16x512xf32> -> vector<16x512xf32>
    %102 = vector.extract_strided_slice %101 {offsets = [0, 0], sizes = [16, 128], strides = [1, 1]} : vector<16x512xf32> to vector<16x128xf32>
    %103 = arith.maximumf %98, %102 : vector<16x128xf32>
    %104 = vector.extract_strided_slice %101 {offsets = [0, 128], sizes = [16, 128], strides = [1, 1]} : vector<16x512xf32> to vector<16x128xf32>
    %105 = arith.maximumf %103, %104 : vector<16x128xf32>
    %106 = vector.extract_strided_slice %101 {offsets = [0, 256], sizes = [16, 128], strides = [1, 1]} : vector<16x512xf32> to vector<16x128xf32>
    %107 = arith.maximumf %105, %106 : vector<16x128xf32>
    %108 = vector.extract_strided_slice %101 {offsets = [0, 384], sizes = [16, 128], strides = [1, 1]} : vector<16x512xf32> to vector<16x128xf32>
    %109 = arith.maximumf %107, %108 : vector<16x128xf32>
    %c10 = arith.constant 10 : index
    %c0_31 = arith.constant 0 : index
    %c0_32 = arith.constant 0 : index
    %110 = vector.load %arg1[%c10, %c0_31, %c0_32] : memref<13x16x128xbf16, #tpu.memory_space<vmem>>, vector<1x16x128xbf16>
    %111 = vector.shape_cast %110 : vector<1x16x128xbf16> to vector<16x128xbf16>
    %cst_33 = arith.constant dense<0.000000e+00> : vector<16x512xf32>
    %112 = tpu.matmul %111, %0, %cst_33 {dimension_numbers = #tpu.dot_dimension_numbers<[1], [0], [0], [1], [0, 0, 1, 1], [], []>} : vector<16x128xbf16>, vector<128x512xbf16>, vector<16x512xf32> -> vector<16x512xf32>
    %113 = vector.extract_strided_slice %112 {offsets = [0, 0], sizes = [16, 128], strides = [1, 1]} : vector<16x512xf32> to vector<16x128xf32>
    %114 = arith.maximumf %109, %113 : vector<16x128xf32>
    %115 = vector.extract_strided_slice %112 {offsets = [0, 128], sizes = [16, 128], strides = [1, 1]} : vector<16x512xf32> to vector<16x128xf32>
    %116 = arith.maximumf %114, %115 : vector<16x128xf32>
    %117 = vector.extract_strided_slice %112 {offsets = [0, 256], sizes = [16, 128], strides = [1, 1]} : vector<16x512xf32> to vector<16x128xf32>
    %118 = arith.maximumf %116, %117 : vector<16x128xf32>
    %119 = vector.extract_strided_slice %112 {offsets = [0, 384], sizes = [16, 128], strides = [1, 1]} : vector<16x512xf32> to vector<16x128xf32>
    %120 = arith.maximumf %118, %119 : vector<16x128xf32>
    %c11 = arith.constant 11 : index
    %c0_34 = arith.constant 0 : index
    %c0_35 = arith.constant 0 : index
    %121 = vector.load %arg1[%c11, %c0_34, %c0_35] : memref<13x16x128xbf16, #tpu.memory_space<vmem>>, vector<1x16x128xbf16>
    %122 = vector.shape_cast %121 : vector<1x16x128xbf16> to vector<16x128xbf16>
    %cst_36 = arith.constant dense<0.000000e+00> : vector<16x512xf32>
    %123 = tpu.matmul %122, %0, %cst_36 {dimension_numbers = #tpu.dot_dimension_numbers<[1], [0], [0], [1], [0, 0, 1, 1], [], []>} : vector<16x128xbf16>, vector<128x512xbf16>, vector<16x512xf32> -> vector<16x512xf32>
    %c0_37 = arith.constant 0 : index
    %c0_38 = arith.constant 0 : index
    %124 = vector.load %arg3[%c0_37, %c0_38] : memref<2x512xf32, #tpu.memory_space<vmem>>, vector<1x512xf32>
    %125 = vector.broadcast %124 : vector<1x512xf32> to vector<16x512xf32>
    %126 = arith.addf %123, %125 : vector<16x512xf32>
    %127 = vector.extract_strided_slice %126 {offsets = [0, 0], sizes = [16, 128], strides = [1, 1]} : vector<16x512xf32> to vector<16x128xf32>
    %128 = arith.maximumf %120, %127 : vector<16x128xf32>
    %129 = vector.extract_strided_slice %126 {offsets = [0, 128], sizes = [16, 128], strides = [1, 1]} : vector<16x512xf32> to vector<16x128xf32>
    %130 = arith.maximumf %128, %129 : vector<16x128xf32>
    %131 = vector.extract_strided_slice %126 {offsets = [0, 256], sizes = [16, 128], strides = [1, 1]} : vector<16x512xf32> to vector<16x128xf32>
    %132 = arith.maximumf %130, %131 : vector<16x128xf32>
    %133 = vector.extract_strided_slice %126 {offsets = [0, 384], sizes = [16, 128], strides = [1, 1]} : vector<16x512xf32> to vector<16x128xf32>
    %134 = arith.maximumf %132, %133 : vector<16x128xf32>
    %c12 = arith.constant 12 : index
    %c0_39 = arith.constant 0 : index
    %c0_40 = arith.constant 0 : index
    %135 = vector.load %arg1[%c12, %c0_39, %c0_40] : memref<13x16x128xbf16, #tpu.memory_space<vmem>>, vector<1x16x128xbf16>
    %136 = vector.shape_cast %135 : vector<1x16x128xbf16> to vector<16x128xbf16>
    %cst_41 = arith.constant dense<0.000000e+00> : vector<16x512xf32>
    %137 = tpu.matmul %136, %0, %cst_41 {dimension_numbers = #tpu.dot_dimension_numbers<[1], [0], [0], [1], [0, 0, 1, 1], [], []>} : vector<16x128xbf16>, vector<128x512xbf16>, vector<16x512xf32> -> vector<16x512xf32>
    %c1_42 = arith.constant 1 : index
    %c0_43 = arith.constant 0 : index
    %138 = vector.load %arg3[%c1_42, %c0_43] : memref<2x512xf32, #tpu.memory_space<vmem>>, vector<1x512xf32>
    %139 = vector.broadcast %138 : vector<1x512xf32> to vector<16x512xf32>
    %140 = arith.addf %137, %139 : vector<16x512xf32>
    %141 = vector.extract_strided_slice %140 {offsets = [0, 0], sizes = [16, 128], strides = [1, 1]} : vector<16x512xf32> to vector<16x128xf32>
    %142 = arith.maximumf %134, %141 : vector<16x128xf32>
    %143 = vector.extract_strided_slice %140 {offsets = [0, 128], sizes = [16, 128], strides = [1, 1]} : vector<16x512xf32> to vector<16x128xf32>
    %144 = arith.maximumf %142, %143 : vector<16x128xf32>
    %145 = vector.extract_strided_slice %140 {offsets = [0, 256], sizes = [16, 128], strides = [1, 1]} : vector<16x512xf32> to vector<16x128xf32>
    %146 = arith.maximumf %144, %145 : vector<16x128xf32>
    %147 = vector.extract_strided_slice %140 {offsets = [0, 384], sizes = [16, 128], strides = [1, 1]} : vector<16x512xf32> to vector<16x128xf32>
    %148 = arith.maximumf %146, %147 : vector<16x128xf32>
    %c0_44 = arith.constant 0 : index
    %c0_45 = arith.constant 0 : index
    %149 = vector.load %arg4[%c0_44, %c0_45] : memref<1x128xf32, #tpu.memory_space<vmem>>, vector<1x128xf32>
    %150 = vector.broadcast %149 : vector<1x128xf32> to vector<16x128xf32>
    %151 = arith.addf %148, %150 : vector<16x128xf32>
    %cst_46 = arith.constant 0.000000e+00 : f32
    %152 = vector.broadcast %cst_46 : f32 to vector<16x128xf32>
    %153 = arith.maximumf %151, %152 : vector<16x128xf32>
    %154 = arith.truncf %153 : vector<16x128xf32> to vector<16x128xbf16>
    %c0_47 = arith.constant 0 : index
    %c0_48 = arith.constant 0 : index
    %155 = vector.load %arg5[%c0_47, %c0_48] : memref<128x256xbf16, #tpu.memory_space<vmem>>, vector<128x256xbf16>
    %cst_49 = arith.constant dense<0.000000e+00> : vector<16x256xf32>
    %156 = tpu.matmul %154, %155, %cst_49 {dimension_numbers = #tpu.dot_dimension_numbers<[1], [0], [0], [1], [0, 0, 1, 1], [], []>} : vector<16x128xbf16>, vector<128x256xbf16>, vector<16x256xf32> -> vector<16x256xf32>
    %c0_50 = arith.constant 0 : index
    %c0_51 = arith.constant 0 : index
    %157 = vector.load %arg6[%c0_50, %c0_51] : memref<1x256xf32, #tpu.memory_space<vmem>>, vector<1x256xf32>
    %158 = vector.broadcast %157 : vector<1x256xf32> to vector<16x256xf32>
    %159 = arith.addf %156, %158 : vector<16x256xf32>
    %160 = vector.extract_strided_slice %159 {offsets = [0, 0], sizes = [16, 128], strides = [1, 1]} : vector<16x256xf32> to vector<16x128xf32>
    %cst_52 = arith.constant 0.000000e+00 : f32
    %161 = vector.broadcast %cst_52 : f32 to vector<16x128xf32>
    %162 = arith.maximumf %160, %161 : vector<16x128xf32>
    %163 = vector.extract_strided_slice %159 {offsets = [0, 128], sizes = [16, 128], strides = [1, 1]} : vector<16x256xf32> to vector<16x128xf32>
    %cst_53 = arith.constant 0.000000e+00 : f32
    %164 = vector.broadcast %cst_53 : f32 to vector<16x128xf32>
    %165 = arith.subf %164, %163 : vector<16x128xf32>
    %166 = math.exp %165 : vector<16x128xf32>
    %cst_54 = arith.constant 1.000000e+00 : f32
    %167 = vector.broadcast %cst_54 : f32 to vector<16x128xf32>
    %168 = arith.addf %167, %166 : vector<16x128xf32>
    %cst_55 = arith.constant 1.000000e+00 : f32
    %169 = vector.broadcast %cst_55 : f32 to vector<16x128xf32>
    %170 = arith.divf %169, %168 : vector<16x128xf32>
    %171 = arith.subf %153, %162 : vector<16x128xf32>
    %172 = arith.mulf %170, %171 : vector<16x128xf32>
    %173 = arith.addf %162, %172 : vector<16x128xf32>
    %174 = arith.truncf %173 : vector<16x128xf32> to vector<16x128xbf16>
    %c0_56 = arith.constant 0 : index
    %c0_57 = arith.constant 0 : index
    %175 = vector.load %arg7[%c0_56, %c0_57] : memref<128x256xbf16, #tpu.memory_space<vmem>>, vector<128x256xbf16>
    %cst_58 = arith.constant dense<0.000000e+00> : vector<16x256xf32>
    %176 = tpu.matmul %174, %175, %cst_58 {dimension_numbers = #tpu.dot_dimension_numbers<[1], [0], [0], [1], [0, 0, 1, 1], [], []>} : vector<16x128xbf16>, vector<128x256xbf16>, vector<16x256xf32> -> vector<16x256xf32>
    %c0_59 = arith.constant 0 : index
    %c0_60 = arith.constant 0 : index
    %177 = vector.load %arg8[%c0_59, %c0_60] : memref<1x256xf32, #tpu.memory_space<vmem>>, vector<1x256xf32>
    %178 = vector.broadcast %177 : vector<1x256xf32> to vector<16x256xf32>
    %179 = arith.addf %176, %178 : vector<16x256xf32>
    %180 = vector.extract_strided_slice %179 {offsets = [0, 0], sizes = [16, 128], strides = [1, 1]} : vector<16x256xf32> to vector<16x128xf32>
    %cst_61 = arith.constant 0.000000e+00 : f32
    %181 = vector.broadcast %cst_61 : f32 to vector<16x128xf32>
    %182 = arith.maximumf %180, %181 : vector<16x128xf32>
    %183 = vector.extract_strided_slice %179 {offsets = [0, 128], sizes = [16, 128], strides = [1, 1]} : vector<16x256xf32> to vector<16x128xf32>
    %cst_62 = arith.constant 0.000000e+00 : f32
    %184 = vector.broadcast %cst_62 : f32 to vector<16x128xf32>
    %185 = arith.subf %184, %183 : vector<16x128xf32>
    %186 = math.exp %185 : vector<16x128xf32>
    %cst_63 = arith.constant 1.000000e+00 : f32
    %187 = vector.broadcast %cst_63 : f32 to vector<16x128xf32>
    %188 = arith.addf %187, %186 : vector<16x128xf32>
    %cst_64 = arith.constant 1.000000e+00 : f32
    %189 = vector.broadcast %cst_64 : f32 to vector<16x128xf32>
    %190 = arith.divf %189, %188 : vector<16x128xf32>
    %191 = arith.subf %173, %182 : vector<16x128xf32>
    %192 = arith.mulf %190, %191 : vector<16x128xf32>
    %193 = arith.addf %182, %192 : vector<16x128xf32>
    %194 = arith.truncf %193 : vector<16x128xf32> to vector<16x128xbf16>
    %c0_65 = arith.constant 0 : index
    %c0_66 = arith.constant 0 : index
    %195 = vector.load %arg9[%c0_65, %c0_66] : memref<128x128xbf16, #tpu.memory_space<vmem>>, vector<128x128xbf16>
    %cst_67 = arith.constant dense<0.000000e+00> : vector<16x128xf32>
    %196 = tpu.matmul %194, %195, %cst_67 {dimension_numbers = #tpu.dot_dimension_numbers<[1], [0], [0], [1], [0, 0, 1, 1], [], []>} : vector<16x128xbf16>, vector<128x128xbf16>, vector<16x128xf32> -> vector<16x128xf32>
    %c0_68 = arith.constant 0 : index
    %c0_69 = arith.constant 0 : index
    %197 = vector.load %arg10[%c0_68, %c0_69] : memref<1x128xf32, #tpu.memory_space<vmem>>, vector<1x128xf32>
    %198 = vector.broadcast %197 : vector<1x128xf32> to vector<16x128xf32>
    %199 = arith.addf %196, %198 : vector<16x128xf32>
    %c0_70 = arith.constant 0 : index
    %c0_71 = arith.constant 0 : index
    %200 = vector.load %arg11[%c0_70, %c0_71] : memref<16x128xf32, #tpu.memory_space<vmem>>, vector<16x128xf32>
    tpu.vector_store %arg11[%c0_70, %c0_71], %199 {strides = array<i32>} : memref<16x128xf32, #tpu.memory_space<vmem>>, vector<16x128xf32>,
    return
  }
  func.func @transform_0(%arg0: i32) -> (i32, i32, i32) {
    %c0_i32 = arith.constant 0 : i32
    %c0_i32_0 = arith.constant 0 : i32
    %c0_i32_1 = arith.constant 0 : i32
    return %c0_i32, %arg0, %c0_i32_0 : i32, i32, i32
  }
  func.func @transform_1(%arg0: i32) -> (i32, i32) {
    %c0_i32 = arith.constant 0 : i32
    %c0_i32_0 = arith.constant 0 : i32
    %c0_i32_1 = arith.constant 0 : i32
    return %c0_i32, %c0_i32_0 : i32, i32
  }
  func.func @transform_2(%arg0: i32) -> (i32, i32) {
    %c0_i32 = arith.constant 0 : i32
    %c0_i32_0 = arith.constant 0 : i32
    %c0_i32_1 = arith.constant 0 : i32
    return %c0_i32, %c0_i32_0 : i32, i32
  }
  func.func @transform_3(%arg0: i32) -> (i32, i32) {
    %c0_i32 = arith.constant 0 : i32
    %c0_i32_0 = arith.constant 0 : i32
    %c0_i32_1 = arith.constant 0 : i32
    return %c0_i32, %c0_i32_0 : i32, i32
  }
  func.func @transform_4(%arg0: i32) -> (i32, i32) {
    %c0_i32 = arith.constant 0 : i32
    %c0_i32_0 = arith.constant 0 : i32
    %c0_i32_1 = arith.constant 0 : i32
    return %c0_i32, %c0_i32_0 : i32, i32
  }
  func.func @transform_5(%arg0: i32) -> (i32, i32) {
    %c0_i32 = arith.constant 0 : i32
    %c0_i32_0 = arith.constant 0 : i32
    %c0_i32_1 = arith.constant 0 : i32
    return %c0_i32, %c0_i32_0 : i32, i32
  }
  func.func @transform_6(%arg0: i32) -> (i32, i32) {
    %c0_i32 = arith.constant 0 : i32
    %c0_i32_0 = arith.constant 0 : i32
    %c0_i32_1 = arith.constant 0 : i32
    return %c0_i32, %c0_i32_0 : i32, i32
  }
  func.func @transform_7(%arg0: i32) -> (i32, i32) {
    %c0_i32 = arith.constant 0 : i32
    %c0_i32_0 = arith.constant 0 : i32
    %c0_i32_1 = arith.constant 0 : i32
    return %c0_i32, %c0_i32_0 : i32, i32
  }
  func.func @transform_8(%arg0: i32) -> (i32, i32) {
    %c0_i32 = arith.constant 0 : i32
    %c0_i32_0 = arith.constant 0 : i32
    %c0_i32_1 = arith.constant 0 : i32
    return %c0_i32, %c0_i32_0 : i32, i32
  }
  func.func @transform_9(%arg0: i32) -> (i32, i32) {
    %c0_i32 = arith.constant 0 : i32
    %c0_i32_0 = arith.constant 0 : i32
    %c0_i32_1 = arith.constant 0 : i32
    return %c0_i32, %c0_i32_0 : i32, i32
  }
  func.func @transform_10(%arg0: i32) -> (i32, i32) {
    %c0_i32 = arith.constant 0 : i32
    %c0_i32_0 = arith.constant 0 : i32
    return %arg0, %c0_i32 : i32, i32
  }
}

</mosaic_0001>

<llo_original>
// kernel: custom_elmo_character_encoder.1
$region0: #{custom_elmo_character_encoder.1}
  #allocation0 [shape = 'u32[]', space=smem, size = 0x4, offset = 0x4, fixed_abs, tag = 'smem constant byte address 0x4 - core index']
  #allocation1 [shape = 'u32[144,128]{1,0:T(1,128)}', space=vmem, size = 0x12000, scoped, tag = 'internal scratch']
  %s0 = inlined_call_operand.vmem [shape: bf16[13,32,128], index: 0, kind: input, shape index: {}]
  %s1 = inlined_call_operand.vmem [shape: bf16[128,512], index: 1, kind: input, shape index: {}]
  %s2 = inlined_call_operand.vmem [shape: f32[2,512], index: 2, kind: input, shape index: {}]
  %s3 = inlined_call_operand.vmem [shape: f32[1,128], index: 3, kind: input, shape index: {}]
  %s4 = inlined_call_operand.vmem [shape: bf16[128,256], index: 4, kind: input, shape index: {}]
  %s5 = inlined_call_operand.vmem [shape: f32[1,256], index: 5, kind: input, shape index: {}]
  %s6 = inlined_call_operand.vmem [shape: bf16[128,256], index: 6, kind: input, shape index: {}]
  %s7 = inlined_call_operand.vmem [shape: f32[1,256], index: 7, kind: input, shape index: {}]
  %s8 = inlined_call_operand.vmem [shape: bf16[128,128], index: 8, kind: input, shape index: {}]
  %s9 = inlined_call_operand.vmem [shape: f32[1,128], index: 9, kind: input, shape index: {}]
  %s10 = inlined_call_operand.vmem [shape: f32[32,128], index: 10, kind: output, shape index: {}]
  %s11 = sld [smem:[#allocation0]]
  $region114: #{custom_elmo_character_encoder.1} parent=0
    _
  %s13 = ssub.s32 1, %s11
  %s14 = scalar_select 0, %s13, %s11
  $region1: #{custom_elmo_character_encoder.1} parent=0
    #allocation2 [shape = 'u8[106496]{0}', space=vmem, size = 0x1a000, scoped, tag = 'input window, operand 0']
    loop: start=0, step=1, limit=4
    $region2: #{custom_elmo_character_encoder.1} parent=1 // loop_pre_header
      _
    $region3: #{custom_elmo_character_encoder.1} parent=1 // loop_header
      %s16 = sphi 0, %s20
      %p17 = scmp.ge.s32.totalorder %s16, 4
      %s26 = sphi 0, %s28
      %s29 = sphi 0, %s26
      %s30 = sphi 0, %s29
      %s46 = sphi 0, %s30
      %s50 = sphi 0, %s50
      %s52 = sphi 0, %s50
      %s53 = sphi 0, %s52
      %s67 = sphi 0, %s53
      %s71 = sphi 0, %s71
      %s73 = sphi 0, %s71
      %s74 = sphi 0, %s73
      %s88 = sphi 0, %s74
      %s92 = sphi 0, %s92
      %s94 = sphi 0, %s92
      %s95 = sphi 0, %s94
      %s109 = sphi 0, %s95
      %s113 = sphi 0, %s113
      %s115 = sphi 0, %s113
      %s116 = sphi 0, %s115
      %s130 = sphi 0, %s116
      %s134 = sphi 0, %s134
      %s136 = sphi 0, %s134
      %s137 = sphi 0, %s136
      %s151 = sphi 0, %s137
      %s155 = sphi 0, %s155
      %s157 = sphi 0, %s155
      %s158 = sphi 0, %s157
      %s172 = sphi 0, %s158
      %s176 = sphi 0, %s176
      %s178 = sphi 0, %s176
      %s179 = sphi 0, %s178
      %s193 = sphi 0, %s179
      %s197 = sphi 0, %s197
      %s199 = sphi 0, %s197
      %s200 = sphi 0, %s199
      %s214 = sphi 0, %s200
      %s218 = sphi 0, %s218
      %s220 = sphi 0, %s218
      %s221 = sphi 0, %s220
      %s235 = sphi 0, %s221
      %s241 = sphi 0, %s243
      %s244 = sphi 0, %s241
      %s245 = sphi 0, %s244
      %s261 = sphi 0, %s245
    $region4: #{custom_elmo_character_encoder.1} parent=1 // loop_header_branch
      %19 = sbr.rel (%p17) target = $region8
    $region5: #{custom_elmo_character_encoder.1} parent=1 // loop_body
      %s21 = ssub.s32 %s16, 1
      %s22 = ssub.s32 %s16, 2
      %s23 = sadd.s32 %s16, 1
      %s24 = ssub.s32 %s16, %s23
      %p25 = scmp.eq.s32.totalorder %s24, 0
      %s27 = sadd.s32 %s26, 1
      %s28 = scalar_select %p25, %s26, %s27
      %p31 = pneg %p25
      %p32 = scmp.eq.s32.totalorder %s16, 1
      %p33 = por %p31, %p32
      %p34 = scmp.ne.s32.totalorder %s26, %s29
      %p35 = scmp.eq.s32.totalorder %s16, 0
      %p36 = por %p34, %p35
      %p37 = scmp.ne.s32.totalorder %s26, %s29
      %p38 = scmp.eq.s32.totalorder %s21, 1
      %p39 = por %p37, %p38
      %p40 = scmp.ne.s32.totalorder %s29, %s30
      %p41 = scmp.eq.s32.totalorder %s21, 0
      %p42 = por %p40, %p41
      %p43 = scmp.ne.s32.totalorder %s29, %s30
      %p44 = scmp.eq.s32.totalorder %s22, 1
      %p45 = por %p43, %p44
      %p47 = scmp.ne.s32.totalorder %s30, %s46
      %p48 = scmp.eq.s32.totalorder %s22, 0
      %p49 = por %p47, %p48
      %s51 = sadd.s32 %s50, 1
      %p54 = scmp.eq.s32.totalorder %s16, 1
      %p55 = scmp.ne.s32.totalorder %s50, %s52
      %p56 = scmp.eq.s32.totalorder %s16, 0
      %p57 = por %p55, %p56
      %p58 = scmp.ne.s32.totalorder %s50, %s52
      %p59 = scmp.eq.s32.totalorder %s21, 1
      %p60 = por %p58, %p59
      %p61 = scmp.ne.s32.totalorder %s52, %s53
      %p62 = scmp.eq.s32.totalorder %s21, 0
      %p63 = por %p61, %p62
      %p64 = scmp.ne.s32.totalorder %s52, %s53
      %p65 = scmp.eq.s32.totalorder %s22, 1
      %p66 = por %p64, %p65
      %p68 = scmp.ne.s32.totalorder %s53, %s67
      %p69 = scmp.eq.s32.totalorder %s22, 0
      %p70 = por %p68, %p69
      %s72 = sadd.s32 %s71, 1
      %p75 = scmp.eq.s32.totalorder %s16, 1
      %p76 = scmp.ne.s32.totalorder %s71, %s73
      %p77 = scmp.eq.s32.totalorder %s16, 0
      %p78 = por %p76, %p77
      %p79 = scmp.ne.s32.totalorder %s71, %s73
      %p80 = scmp.eq.s32.totalorder %s21, 1
      %p81 = por %p79, %p80
      %p82 = scmp.ne.s32.totalorder %s73, %s74
      %p83 = scmp.eq.s32.totalorder %s21, 0
      %p84 = por %p82, %p83
      %p85 = scmp.ne.s32.totalorder %s73, %s74
      %p86 = scmp.eq.s32.totalorder %s22, 1
      %p87 = por %p85, %p86
      %p89 = scmp.ne.s32.totalorder %s74, %s88
      %p90 = scmp.eq.s32.totalorder %s22, 0
      %p91 = por %p89, %p90
      %s93 = sadd.s32 %s92, 1
      %p96 = scmp.eq.s32.totalorder %s16, 1
      %p97 = scmp.ne.s32.totalorder %s92, %s94
      %p98 = scmp.eq.s32.totalorder %s16, 0
      %p99 = por %p97, %p98
      %p100 = scmp.ne.s32.totalorder %s92, %s94
      %p101 = scmp.eq.s32.totalorder %s21, 1
      %p102 = por %p100, %p101
      %p103 = scmp.ne.s32.totalorder %s94, %s95
      %p104 = scmp.eq.s32.totalorder %s21, 0
      %p105 = por %p103, %p104
      %p106 = scmp.ne.s32.totalorder %s94, %s95
      %p107 = scmp.eq.s32.totalorder %s22, 1
      %p108 = por %p106, %p107
      %p110 = scmp.ne.s32.totalorder %s95, %s109
      %p111 = scmp.eq.s32.totalorder %s22, 0
      %p112 = por %p110, %p111
      %s114 = sadd.s32 %s113, 1
      %p117 = scmp.eq.s32.totalorder %s16, 1
      %p118 = scmp.ne.s32.totalorder %s113, %s115
      %p119 = scmp.eq.s32.totalorder %s16, 0
      %p120 = por %p118, %p119
      %p121 = scmp.ne.s32.totalorder %s113, %s115
      %p122 = scmp.eq.s32.totalorder %s21, 1
      %p123 = por %p121, %p122
      %p124 = scmp.ne.s32.totalorder %s115, %s116
      %p125 = scmp.eq.s32.totalorder %s21, 0
      %p126 = por %p124, %p125
      %p127 = scmp.ne.s32.totalorder %s115, %s116
      %p128 = scmp.eq.s32.totalorder %s22, 1
      %p129 = por %p127, %p128
      %p131 = scmp.ne.s32.totalorder %s116, %s130
      %p132 = scmp.eq.s32.totalorder %s22, 0
      %p133 = por %p131, %p132
      %s135 = sadd.s32 %s134, 1
      %p138 = scmp.eq.s32.totalorder %s16, 1
      %p139 = scmp.ne.s32.totalorder %s134, %s136
      %p140 = scmp.eq.s32.totalorder %s16, 0
      %p141 = por %p139, %p140
      %p142 = scmp.ne.s32.totalorder %s134, %s136
      %p143 = scmp.eq.s32.totalorder %s21, 1
      %p144 = por %p142, %p143
      %p145 = scmp.ne.s32.totalorder %s136, %s137
      %p146 = scmp.eq.s32.totalorder %s21, 0
      %p147 = por %p145, %p146
      %p148 = scmp.ne.s32.totalorder %s136, %s137
      %p149 = scmp.eq.s32.totalorder %s22, 1
      %p150 = por %p148, %p149
      %p152 = scmp.ne.s32.totalorder %s137, %s151
      %p153 = scmp.eq.s32.totalorder %s22, 0
      %p154 = por %p152, %p153
      %s156 = sadd.s32 %s155, 1
      %p159 = scmp.eq.s32.totalorder %s16, 1
      %p160 = scmp.ne.s32.totalorder %s155, %s157
      %p161 = scmp.eq.s32.totalorder %s16, 0
      %p162 = por %p160, %p161
      %p163 = scmp.ne.s32.totalorder %s155, %s157
      %p164 = scmp.eq.s32.totalorder %s21, 1
      %p165 = por %p163, %p164
      %p166 = scmp.ne.s32.totalorder %s157, %s158
      %p167 = scmp.eq.s32.totalorder %s21, 0
      %p168 = por %p166, %p167
      %p169 = scmp.ne.s32.totalorder %s157, %s158
      %p170 = scmp.eq.s32.totalorder %s22, 1
      %p171 = por %p169, %p170
      %p173 = scmp.ne.s32.totalorder %s158, %s172
      %p174 = scmp.eq.s32.totalorder %s22, 0
      %p175 = por %p173, %p174
      %s177 = sadd.s32 %s176, 1
      %p180 = scmp.eq.s32.totalorder %s16, 1
      %p181 = scmp.ne.s32.totalorder %s176, %s178
      %p182 = scmp.eq.s32.totalorder %s16, 0
      %p183 = por %p181, %p182
      %p184 = scmp.ne.s32.totalorder %s176, %s178
      %p185 = scmp.eq.s32.totalorder %s21, 1
      %p186 = por %p184, %p185
      %p187 = scmp.ne.s32.totalorder %s178, %s179
      %p188 = scmp.eq.s32.totalorder %s21, 0
      %p189 = por %p187, %p188
      %p190 = scmp.ne.s32.totalorder %s178, %s179
      %p191 = scmp.eq.s32.totalorder %s22, 1
      %p192 = por %p190, %p191
      %p194 = scmp.ne.s32.totalorder %s179, %s193
      %p195 = scmp.eq.s32.totalorder %s22, 0
      %p196 = por %p194, %p195
      %s198 = sadd.s32 %s197, 1
      %p201 = scmp.eq.s32.totalorder %s16, 1
      %p202 = scmp.ne.s32.totalorder %s197, %s199
      %p203 = scmp.eq.s32.totalorder %s16, 0
      %p204 = por %p202, %p203
      %p205 = scmp.ne.s32.totalorder %s197, %s199
      %p206 = scmp.eq.s32.totalorder %s21, 1
      %p207 = por %p205, %p206
      %p208 = scmp.ne.s32.totalorder %s199, %s200
      %p209 = scmp.eq.s32.totalorder %s21, 0
      %p210 = por %p208, %p209
      %p211 = scmp.ne.s32.totalorder %s199, %s200
      %p212 = scmp.eq.s32.totalorder %s22, 1
      %p213 = por %p211, %p212
      %p215 = scmp.ne.s32.totalorder %s200, %s214
      %p216 = scmp.eq.s32.totalorder %s22, 0
      %p217 = por %p215, %p216
      %s219 = sadd.s32 %s218, 1
      %p222 = scmp.eq.s32.totalorder %s16, 1
      %p223 = scmp.ne.s32.totalorder %s218, %s220
      %p224 = scmp.eq.s32.totalorder %s16, 0
      %p225 = por %p223, %p224
      %p226 = scmp.ne.s32.totalorder %s218, %s220
      %p227 = scmp.eq.s32.totalorder %s21, 1
      %p228 = por %p226, %p227
      %p229 = scmp.ne.s32.totalorder %s220, %s221
      %p230 = scmp.eq.s32.totalorder %s21, 0
      %p231 = por %p229, %p230
      %p232 = scmp.ne.s32.totalorder %s220, %s221
      %p233 = scmp.eq.s32.totalorder %s22, 1
      %p234 = por %p232, %p233
      %p236 = scmp.ne.s32.totalorder %s221, %s235
      %p237 = scmp.eq.s32.totalorder %s22, 0
      %p238 = por %p236, %p237
      %s239 = ssub.s32 %s16, %s23
      %p240 = scmp.eq.s32.totalorder %s239, 0
      %s242 = sadd.s32 %s241, 1
      %s243 = scalar_select %p240, %s241, %s242
      %p246 = pneg %p240
      %p247 = scmp.eq.s32.totalorder %s16, 1
      %p248 = por %p246, %p247
      %p249 = scmp.ne.s32.totalorder %s241, %s244
      %p250 = scmp.eq.s32.totalorder %s16, 0
      %p251 = por %p249, %p250
      %p252 = scmp.ne.s32.totalorder %s241, %s244
      %p253 = scmp.eq.s32.totalorder %s21, 1
      %p254 = por %p252, %p253
      %p255 = scmp.ne.s32.totalorder %s244, %s245
      %p256 = scmp.eq.s32.totalorder %s21, 0
      %p257 = por %p255, %p256
      %p258 = scmp.ne.s32.totalorder %s244, %s245
      %p259 = scmp.eq.s32.totalorder %s22, 1
      %p260 = por %p258, %p259
      %p262 = scmp.ne.s32.totalorder %s245, %s261
      %p263 = scmp.eq.s32.totalorder %s22, 0
      %p264 = por %p262, %p263
      %p265 = scmp.le.s32.totalorder 1, %s16
      %p266 = scmp.lt.s32.totalorder %s16, 3
      %p267 = pnand %p265, %p266
      %p268 = pneg %p267
      // Predicated region
      $region9: #{custom_elmo_character_encoder.1} parent=5 // pred_check
        _
      $region10: #{custom_elmo_character_encoder.1} parent=5 // pred_check_branch
        %270 = sbr.rel (%p267) target = $region12
      $region11: #{custom_elmo_character_encoder.1} parent=5 // pred_region
        %s271 = ssub.s32 %s16, 1
        // Predicated region
        $region13: #{custom_elmo_character_encoder.1} parent=11 // pred_check
          %p272 = pneg %p63
        $region14: #{custom_elmo_character_encoder.1} parent=11 // pred_check_branch
          %274 = sbr.rel (%p272) target = $region16
        $region15: #{custom_elmo_character_encoder.1} parent=11 // pred_region
          _
        $region16: #{custom_elmo_character_encoder.1} parent=11 // pred_fallthru
          _
        // Predicated region
        $region17: #{custom_elmo_character_encoder.1} parent=11 // pred_check
          %p275 = pneg %p84
        $region18: #{custom_elmo_character_encoder.1} parent=11 // pred_check_branch
          %277 = sbr.rel (%p275) target = $region20
        $region19: #{custom_elmo_character_encoder.1} parent=11 // pred_region
          _
        $region20: #{custom_elmo_character_encoder.1} parent=11 // pred_fallthru
          _
        // Predicated region
        $region21: #{custom_elmo_character_encoder.1} parent=11 // pred_check
          %p278 = pneg %p105
        $region22: #{custom_elmo_character_encoder.1} parent=11 // pred_check_branch
          %280 = sbr.rel (%p278) target = $region24
        $region23: #{custom_elmo_character_encoder.1} parent=11 // pred_region
          _
        $region24: #{custom_elmo_character_encoder.1} parent=11 // pred_fallthru
          _
        // Predicated region
        $region25: #{custom_elmo_character_encoder.1} parent=11 // pred_check
          %p281 = pneg %p126
        $region26: #{custom_elmo_character_encoder.1} parent=11 // pred_check_branch
          %283 = sbr.rel (%p281) target = $region28
        $region27: #{custom_elmo_character_encoder.1} parent=11 // pred_region
          _
        $region28: #{custom_elmo_character_encoder.1} parent=11 // pred_fallthru
          _
        // Predicated region
        $region29: #{custom_elmo_character_encoder.1} parent=11 // pred_check
          %p284 = pneg %p147
        $region30: #{custom_elmo_character_encoder.1} parent=11 // pred_check_branch
          %286 = sbr.rel (%p284) target = $region32
        $region31: #{custom_elmo_character_encoder.1} parent=11 // pred_region
          _
        $region32: #{custom_elmo_character_encoder.1} parent=11 // pred_fallthru
          _
        // Predicated region
        $region33: #{custom_elmo_character_encoder.1} parent=11 // pred_check
          %p287 = pneg %p168
        $region34: #{custom_elmo_character_encoder.1} parent=11 // pred_check_branch
          %289 = sbr.rel (%p287) target = $region36
        $region35: #{custom_elmo_character_encoder.1} parent=11 // pred_region
          _
        $region36: #{custom_elmo_character_encoder.1} parent=11 // pred_fallthru
          _
        // Predicated region
        $region37: #{custom_elmo_character_encoder.1} parent=11 // pred_check
          %p290 = pneg %p189
        $region38: #{custom_elmo_character_encoder.1} parent=11 // pred_check_branch
          %292 = sbr.rel (%p290) target = $region40
        $region39: #{custom_elmo_character_encoder.1} parent=11 // pred_region
          _
        $region40: #{custom_elmo_character_encoder.1} parent=11 // pred_fallthru
          _
        // Predicated region
        $region41: #{custom_elmo_character_encoder.1} parent=11 // pred_check
          %p293 = pneg %p210
        $region42: #{custom_elmo_character_encoder.1} parent=11 // pred_check_branch
          %295 = sbr.rel (%p293) target = $region44
        $region43: #{custom_elmo_character_encoder.1} parent=11 // pred_region
          _
        $region44: #{custom_elmo_character_encoder.1} parent=11 // pred_fallthru
          _
        // Predicated region
        $region45: #{custom_elmo_character_encoder.1} parent=11 // pred_check
          %p296 = pneg %p231
        $region46: #{custom_elmo_character_encoder.1} parent=11 // pred_check_branch
          %298 = sbr.rel (%p296) target = $region48
        $region47: #{custom_elmo_character_encoder.1} parent=11 // pred_region
          _
        $region48: #{custom_elmo_character_encoder.1} parent=11 // pred_fallthru
          _
      $region12: #{custom_elmo_character_encoder.1} parent=5 // pred_fallthru
        _
      %p299 = scmp.lt.s32.totalorder %s16, 2
      // Predicated region
      $region49: #{custom_elmo_character_encoder.1} parent=5 // pred_check
        %p300 = pneg %p299
      $region50: #{custom_elmo_character_encoder.1} parent=5 // pred_check_branch
        %302 = sbr.rel (%p300) target = $region52
      $region51: #{custom_elmo_character_encoder.1} parent=5 // pred_region
        // Predicated region
        $region53: #{custom_elmo_character_encoder.1} parent=51 // pred_check
          %p303 = pneg %p36
        $region54: #{custom_elmo_character_encoder.1} parent=51 // pred_check_branch
          %305 = sbr.rel (%p303) target = $region56
        $region55: #{custom_elmo_character_encoder.1} parent=51 // pred_region
          %s306 = sand.u32 %s26, 1
          %s307 = sand.u32 %s26, 1
          %s308 = smul.addr %s307, 104
          %s309 = scalar_lea.vmem [#allocation2], %s308
          %s310 = smul.u32 2, %s16
          %s311 = smul.addr %s310, 4
          %s312 = scalar_lea.vmem %s0, %s311
          // Predicated region
          $region57: #{custom_elmo_character_encoder.1} parent=55 // pred_check
            _
          $region58: #{custom_elmo_character_encoder.1} parent=55 // pred_check_branch
            %314 = sbr.rel (0) target = $region60
          $region59: #{custom_elmo_character_encoder.1} parent=55 // pred_region
            // Predicated region
            $region61: #{custom_elmo_character_encoder.1} parent=59 // pred_check
              _
            $region62: #{custom_elmo_character_encoder.1} parent=59 // pred_check_branch
              %316 = sbr.rel target = $region64
            $region63: #{custom_elmo_character_encoder.1} parent=59 // pred_region
              // Predicated region
              $region76: #{custom_elmo_character_encoder.1} parent=63 // pred_check
                _
              $region77: #{custom_elmo_character_encoder.1} parent=63 // pred_check_branch
                %382 = sbr.rel (0) target = $region79
              $region78: #{custom_elmo_character_encoder.1} parent=63 // pred_region
                loop: start=0, step=1, limit=1
                $region80: #{custom_elmo_character_encoder.1} parent=78 // loop_pre_header
                  _
                $region81: #{custom_elmo_character_encoder.1} parent=78 // loop_header
                  %s384 = sphi 0, %s388
                  %p385 = scmp.ge.s32.totalorder %s384, 1
                  %s389 = sphi %s312, %s312
                  %s390 = sphi %s309, %s309
                $region82: #{custom_elmo_character_encoder.1} parent=78 // loop_header_branch
                  %387 = sbr.rel (%p385) target = $region86
                $region83: #{custom_elmo_character_encoder.1} parent=78 // loop_body
                  _
                $region84: #{custom_elmo_character_encoder.1} parent=78 // loop_footer
                  %s388 = sadd.s32 1, %s384
                $region85: #{custom_elmo_character_encoder.1} parent=78 // loop_footer_branch
                  %383 = sbr.rel target = $region81
                $region86: #{custom_elmo_character_encoder.1} parent=78 // loop_exit
                  _
                %s392 = ssub.s32 16, 1
                loop: start=0, step=1, limit=1
                $region87: #{custom_elmo_character_encoder.1} parent=78 // loop_pre_header
                  _
                $region88: #{custom_elmo_character_encoder.1} parent=78 // loop_header
                  %s394 = sphi 0, %s398
                  %p395 = scmp.ge.s32.totalorder %s394, 1
                  %s399 = sphi %s312, %s312
                  %s400 = sphi %s309, %s309
                $region89: #{custom_elmo_character_encoder.1} parent=78 // loop_header_branch
                  %397 = sbr.rel (%p395) target = $region93
                $region90: #{custom_elmo_character_encoder.1} parent=78 // loop_body
                  %v401 = vld [vmem:[%s399] sm:%s392]
                  %402 = vst [vmem:[%s400] sm:%s392] %v401
                  %v403 = vld [vmem:[%s399 + $0x4] sm:%s392]
                  %404 = vst [vmem:[%s400 + $0x4] sm:%s392] %v403
                  %v405 = vld [vmem:[%s399 + $0x10] sm:%s392]
                  %406 = vst [vmem:[%s400 + $0x8] sm:%s392] %v405
                  %v407 = vld [vmem:[%s399 + $0x14] sm:%s392]
                  %408 = vst [vmem:[%s400 + $0xc] sm:%s392] %v407
                  %v409 = vld [vmem:[%s399 + $0x20] sm:%s392]
                  %410 = vst [vmem:[%s400 + $0x10] sm:%s392] %v409
                  %v411 = vld [vmem:[%s399 + $0x24] sm:%s392]
                  %412 = vst [vmem:[%s400 + $0x14] sm:%s392] %v411
                  %v413 = vld [vmem:[%s399 + $0x30] sm:%s392]
                  %414 = vst [vmem:[%s400 + $0x18] sm:%s392] %v413
                  %v415 = vld [vmem:[%s399 + $0x34] sm:%s392]
                  %416 = vst [vmem:[%s400 + $0x1c] sm:%s392] %v415
                  %v417 = vld [vmem:[%s399 + $0x40] sm:%s392]
                  %418 = vst [vmem:[%s400 + $0x20] sm:%s392] %v417
                  %v419 = vld [vmem:[%s399 + $0x44] sm:%s392]
                  %420 = vst [vmem:[%s400 + $0x24] sm:%s392] %v419
                  %v421 = vld [vmem:[%s399 + $0x50] sm:%s392]
                  %422 = vst [vmem:[%s400 + $0x28] sm:%s392] %v421
                  %v423 = vld [vmem:[%s399 + $0x54] sm:%s392]
                  %424 = vst [vmem:[%s400 + $0x2c] sm:%s392] %v423
                  %v425 = vld [vmem:[%s399 + $0x60] sm:%s392]
                  %426 = vst [vmem:[%s400 + $0x30] sm:%s392] %v425
                  %v427 = vld [vmem:[%s399 + $0x64] sm:%s392]
                  %428 = vst [vmem:[%s400 + $0x34] sm:%s392] %v427
                  %v429 = vld [vmem:[%s399 + $0x70] sm:%s392]
                  %430 = vst [vmem:[%s400 + $0x38] sm:%s392] %v429
                  %v431 = vld [vmem:[%s399 + $0x74] sm:%s392]
                  %432 = vst [vmem:[%s400 + $0x3c] sm:%s392] %v431
                  %v433 = vld [vmem:[%s399 + $0x80] sm:%s392]
                  %434 = vst [vmem:[%s400 + $0x40] sm:%s392] %v433
                  %v435 = vld [vmem:[%s399 + $0x84] sm:%s392]
                  %436 = vst [vmem:[%s400 + $0x44] sm:%s392] %v435
                  %v437 = vld [vmem:[%s399 + $0x90] sm:%s392]
                  %438 = vst [vmem:[%s400 + $0x48] sm:%s392] %v437
                  %v439 = vld [vmem:[%s399 + $0x94] sm:%s392]
                  %440 = vst [vmem:[%s400 + $0x4c] sm:%s392] %v439
                  %v441 = vld [vmem:[%s399 + $0xa0] sm:%s392]
                  %442 = vst [vmem:[%s400 + $0x50] sm:%s392] %v441
                  %v443 = vld [vmem:[%s399 + $0xa4] sm:%s392]
                  %444 = vst [vmem:[%s400 + $0x54] sm:%s392] %v443
                  %v445 = vld [vmem:[%s399 + $0xb0] sm:%s392]
                  %446 = vst [vmem:[%s400 + $0x58] sm:%s392] %v445
                  %v447 = vld [vmem:[%s399 + $0xb4] sm:%s392]
                  %448 = vst [vmem:[%s400 + $0x5c] sm:%s392] %v447
                  %v449 = vld [vmem:[%s399 + $0xc0] sm:%s392]
                  %450 = vst [vmem:[%s400 + $0x60] sm:%s392] %v449
                  %v451 = vld [vmem:[%s399 + $0xc4] sm:%s392]
                  %452 = vst [vmem:[%s400 + $0x64] sm:%s392] %v451
                $region91: #{custom_elmo_character_encoder.1} parent=78 // loop_footer
                  %s398 = sadd.s32 1, %s394
                $region92: #{custom_elmo_character_encoder.1} parent=78 // loop_footer_branch
                  %393 = sbr.rel target = $region88
                $region93: #{custom_elmo_character_encoder.1} parent=78 // loop_exit
                  _
              $region79: #{custom_elmo_character_encoder.1} parent=63 // pred_fallthru
                _
            $region64: #{custom_elmo_character_encoder.1} parent=59 // pred_fallthru
              _
            // Predicated region
            $region65: #{custom_elmo_character_encoder.1} parent=59 // pred_check
              _
            $region66: #{custom_elmo_character_encoder.1} parent=59 // pred_check_branch
              %318 = sbr.rel (0) target = $region68
            $region67: #{custom_elmo_character_encoder.1} parent=59 // pred_region
              %s320 = ssub.s32 16, 1
              loop: start=0, step=1, limit=1
              $region69: #{custom_elmo_character_encoder.1} parent=67 // loop_pre_header
                _
              $region70: #{custom_elmo_character_encoder.1} parent=67 // loop_header
                %s322 = sphi 0, %s326
                %p323 = scmp.ge.s32.totalorder %s322, 1
                %s327 = sphi %s312, %s312
                %s328 = sphi %s309, %s309
              $region71: #{custom_elmo_character_encoder.1} parent=67 // loop_header_branch
                %325 = sbr.rel (%p323) target = $region75
              $region72: #{custom_elmo_character_encoder.1} parent=67 // loop_body
                %v329 = vld [vmem:[%s327] sm:%s320]
                %330 = vst [vmem:[%s328] sm:%s320] %v329
                %v331 = vld [vmem:[%s327 + $0x4] sm:%s320]
                %332 = vst [vmem:[%s328 + $0x4] sm:%s320] %v331
                %v333 = vld [vmem:[%s327 + $0x10] sm:%s320]
                %334 = vst [vmem:[%s328 + $0x8] sm:%s320] %v333
                %v335 = vld [vmem:[%s327 + $0x14] sm:%s320]
                %336 = vst [vmem:[%s328 + $0xc] sm:%s320] %v335
                %v337 = vld [vmem:[%s327 + $0x20] sm:%s320]
                %338 = vst [vmem:[%s328 + $0x10] sm:%s320] %v337
                %v339 = vld [vmem:[%s327 + $0x24] sm:%s320]
                %340 = vst [vmem:[%s328 + $0x14] sm:%s320] %v339
                %v341 = vld [vmem:[%s327 + $0x30] sm:%s320]
                %342 = vst [vmem:[%s328 + $0x18] sm:%s320] %v341
                %v343 = vld [vmem:[%s327 + $0x34] sm:%s320]
                %344 = vst [vmem:[%s328 + $0x1c] sm:%s320] %v343
                %v345 = vld [vmem:[%s327 + $0x40] sm:%s320]
                %346 = vst [vmem:[%s328 + $0x20] sm:%s320] %v345
                %v347 = vld [vmem:[%s327 + $0x44] sm:%s320]
                %348 = vst [vmem:[%s328 + $0x24] sm:%s320] %v347
                %v349 = vld [vmem:[%s327 + $0x50] sm:%s320]
                %350 = vst [vmem:[%s328 + $0x28] sm:%s320] %v349
                %v351 = vld [vmem:[%s327 + $0x54] sm:%s320]
                %352 = vst [vmem:[%s328 + $0x2c] sm:%s320] %v351
                %v353 = vld [vmem:[%s327 + $0x60] sm:%s320]
                %354 = vst [vmem:[%s328 + $0x30] sm:%s320] %v353
                %v355 = vld [vmem:[%s327 + $0x64] sm:%s320]
                %356 = vst [vmem:[%s328 + $0x34] sm:%s320] %v355
                %v357 = vld [vmem:[%s327 + $0x70] sm:%s320]
                %358 = vst [vmem:[%s328 + $0x38] sm:%s320] %v357
                %v359 = vld [vmem:[%s327 + $0x74] sm:%s320]
                %360 = vst [vmem:[%s328 + $0x3c] sm:%s320] %v359
                %v361 = vld [vmem:[%s327 + $0x80] sm:%s320]
                %362 = vst [vmem:[%s328 + $0x40] sm:%s320] %v361
                %v363 = vld [vmem:[%s327 + $0x84] sm:%s320]
                %364 = vst [vmem:[%s328 + $0x44] sm:%s320] %v363
                %v365 = vld [vmem:[%s327 + $0x90] sm:%s320]
                %366 = vst [vmem:[%s328 + $0x48] sm:%s320] %v365
                %v367 = vld [vmem:[%s327 + $0x94] sm:%s320]
                %368 = vst [vmem:[%s328 + $0x4c] sm:%s320] %v367
                %v369 = vld [vmem:[%s327 + $0xa0] sm:%s320]
                %370 = vst [vmem:[%s328 + $0x50] sm:%s320] %v369
                %v371 = vld [vmem:[%s327 + $0xa4] sm:%s320]
                %372 = vst [vmem:[%s328 + $0x54] sm:%s320] %v371
                %v373 = vld [vmem:[%s327 + $0xb0] sm:%s320]
                %374 = vst [vmem:[%s328 + $0x58] sm:%s320] %v373
                %v375 = vld [vmem:[%s327 + $0xb4] sm:%s320]
                %376 = vst [vmem:[%s328 + $0x5c] sm:%s320] %v375
                %v377 = vld [vmem:[%s327 + $0xc0] sm:%s320]
                %378 = vst [vmem:[%s328 + $0x60] sm:%s320] %v377
                %v379 = vld [vmem:[%s327 + $0xc4] sm:%s320]
                %380 = vst [vmem:[%s328 + $0x64] sm:%s320] %v379
              $region73: #{custom_elmo_character_encoder.1} parent=67 // loop_footer
                %s326 = sadd.s32 1, %s322
              $region74: #{custom_elmo_character_encoder.1} parent=67 // loop_footer_branch
                %321 = sbr.rel target = $region70
              $region75: #{custom_elmo_character_encoder.1} parent=67 // loop_exit
                _
            $region68: #{custom_elmo_character_encoder.1} parent=59 // pred_fallthru
              _
          $region60: #{custom_elmo_character_encoder.1} parent=55 // pred_fallthru
            _
          %453 = vnop
        $region56: #{custom_elmo_character_encoder.1} parent=51 // pred_fallthru
          _
      $region52: #{custom_elmo_character_encoder.1} parent=5 // pred_fallthru
        _
      %p454 = scmp.le.s32.totalorder 1, %s16
      %p455 = scmp.lt.s32.totalorder %s16, 3
      %p456 = pnand %p454, %p455
      %p457 = pneg %p456
      // Predicated region
      $region94: #{custom_elmo_character_encoder.1} parent=5 // pred_check
        _
      $region95: #{custom_elmo_character_encoder.1} parent=5 // pred_check_branch
        %459 = sbr.rel (%p456) target = $region97
      $region96: #{custom_elmo_character_encoder.1} parent=5 // pred_region
        %s460 = ssub.s32 %s16, 1
        %s461 = sand.u32 %s29, 1
        %s462 = sand.u32 %s29, 1
        %s463 = smul.addr %s462, 104
        %s464 = scalar_lea.vmem [#allocation2], %s463
        // Predicated region
        $region98: #{custom_elmo_character_encoder.1} parent=96 // pred_check
          %p465 = pneg %p42
        $region99: #{custom_elmo_character_encoder.1} parent=96 // pred_check_branch
          %467 = sbr.rel (%p465) target = $region101
        $region100: #{custom_elmo_character_encoder.1} parent=96 // pred_region
          _
        $region101: #{custom_elmo_character_encoder.1} parent=96 // pred_fallthru
          _
        %s468 = sand.u32 %s29, 1
        %s469 = sand.u32 %s29, 1
        %s470 = smul.addr %s469, 104
        %s471 = scalar_lea.vmem [#allocation2], %s470
        %p472 = pneg %p42
        %p473 = pneg %p39
        %p474 = pneg %p63
        %p475 = pneg %p60
        %p476 = pneg %p84
        %p477 = pneg %p81
        %p478 = pneg %p105
        %p479 = pneg %p102
        %p480 = pneg %p126
        %p481 = pneg %p123
        %p482 = pneg %p147
        %p483 = pneg %p144
        %p484 = pneg %p168
        %p485 = pneg %p165
        %p486 = pneg %p189
        %p487 = pneg %p186
        %p488 = pneg %p210
        %p489 = pneg %p207
        %p490 = pneg %p231
        %p491 = pneg %p228
        %p492 = pneg %p257
        %p493 = pneg %p254
        %s494 = smul.u32 2, %s21
        %p495 = scmp.lt.s32.totalorder %s494, 3
        %s496 = scalar_select %p495, %s494, 3
        %s497 = smul.addr %s496, 8
        %s498 = scalar_lea.vmem %s10, %s497
        %s499 = smul.u32 2, %s21
        %s500 = smul.u32 2, %s21
        %p501 = scmp.lt.s32.totalorder %s500, 3
        %s502 = scalar_select %p501, %s500, 3
        %s503 = smul.addr %s502, 8
        %s504 = scalar_lea.vmem %s10, %s503
        %s505 = smul.u32 2, %s21
        %v507 = vld [vmem:[%s1] sm:$0xff]
        %v508 = vld [vmem:[%s1 + $0x8] sm:$0xff]
        %v509 = vld [vmem:[%s1 + $0x10] sm:$0xff]
        %v510 = vld [vmem:[%s1 + $0x18] sm:$0xff]
        %v511 = vld [vmem:[%s1 + $0x20] sm:$0xff]
        %v512 = vld [vmem:[%s1 + $0x28] sm:$0xff]
        %v513 = vld [vmem:[%s1 + $0x30] sm:$0xff]
        %v514 = vld [vmem:[%s1 + $0x38] sm:$0xff]
        %v515 = vld [vmem:[%s1 + $0x40] sm:$0xff]
        %v516 = vld [vmem:[%s1 + $0x48] sm:$0xff]
        %v517 = vld [vmem:[%s1 + $0x50] sm:$0xff]
        %v518 = vld [vmem:[%s1 + $0x58] sm:$0xff]
        %v519 = vld [vmem:[%s1 + $0x60] sm:$0xff]
        %v520 = vld [vmem:[%s1 + $0x68] sm:$0xff]
        %v521 = vld [vmem:[%s1 + $0x70] sm:$0xff]
        %v522 = vld [vmem:[%s1 + $0x78] sm:$0xff]
        %v523 = vld [vmem:[%s1 + $0x80] sm:$0xff]
        %v524 = vld [vmem:[%s1 + $0x88] sm:$0xff]
        %v525 = vld [vmem:[%s1 + $0x90] sm:$0xff]
        %v526 = vld [vmem:[%s1 + $0x98] sm:$0xff]
        %v527 = vld [vmem:[%s1 + $0xa0] sm:$0xff]
        %v528 = vld [vmem:[%s1 + $0xa8] sm:$0xff]
        %v529 = vld [vmem:[%s1 + $0xb0] sm:$0xff]
        %v530 = vld [vmem:[%s1 + $0xb8] sm:$0xff]
        %v531 = vld [vmem:[%s1 + $0xc0] sm:$0xff]
        %v532 = vld [vmem:[%s1 + $0xc8] sm:$0xff]
        %v533 = vld [vmem:[%s1 + $0xd0] sm:$0xff]
        %v534 = vld [vmem:[%s1 + $0xd8] sm:$0xff]
        %v535 = vld [vmem:[%s1 + $0xe0] sm:$0xff]
        %v536 = vld [vmem:[%s1 + $0xe8] sm:$0xff]
        %v537 = vld [vmem:[%s1 + $0xf0] sm:$0xff]
        %v538 = vld [vmem:[%s1 + $0xf8] sm:$0xff]
        %v539 = vld [vmem:[%s464] sm:$0xf]
        %v540 = vld [vmem:[%s464 + $0x4] sm:$0xf]
        %v543 = vunpack.c.l.b16 %v539
        %v544 = vunpack.c.l.b16 %v540
        %v545 = vpack.c.b16 %v544, %v543
        %v579 = vunpack.c.l.b16 %v507
        %v580 = vunpack.c.h.b16 %v507
        %v581 = vunpack.c.l.b16 %v508
        %v582 = vunpack.c.h.b16 %v508
        %v583 = vunpack.c.l.b16 %v509
        %v584 = vunpack.c.h.b16 %v509
        %v585 = vunpack.c.l.b16 %v510
        %v586 = vunpack.c.h.b16 %v510
        %v587 = vunpack.c.l.b16 %v511
        %v588 = vunpack.c.h.b16 %v511
        %v589 = vunpack.c.l.b16 %v512
        %v590 = vunpack.c.h.b16 %v512
        %v591 = vunpack.c.l.b16 %v513
        %v592 = vunpack.c.h.b16 %v513
        %v593 = vunpack.c.l.b16 %v514
        %v594 = vunpack.c.h.b16 %v514
        %v595 = vunpack.c.l.b16 %v515
        %v596 = vunpack.c.h.b16 %v515
        %v597 = vunpack.c.l.b16 %v516
        %v598 = vunpack.c.h.b16 %v516
        %v599 = vunpack.c.l.b16 %v517
        %v600 = vunpack.c.h.b16 %v517
        %v601 = vunpack.c.l.b16 %v518
        %v602 = vunpack.c.h.b16 %v518
        %v603 = vunpack.c.l.b16 %v519
        %v604 = vunpack.c.h.b16 %v519
        %v605 = vunpack.c.l.b16 %v520
        %v606 = vunpack.c.h.b16 %v520
        %v607 = vunpack.c.l.b16 %v521
        %v608 = vunpack.c.h.b16 %v521
        %v609 = vunpack.c.l.b16 %v522
        %v610 = vunpack.c.h.b16 %v522
        %v611 = vunpack.c.l.b16 %v523
        %v612 = vunpack.c.h.b16 %v523
        %v613 = vunpack.c.l.b16 %v524
        %v614 = vunpack.c.h.b16 %v524
        %v615 = vunpack.c.l.b16 %v525
        %v616 = vunpack.c.h.b16 %v525
        %v617 = vunpack.c.l.b16 %v526
        %v618 = vunpack.c.h.b16 %v526
        %v619 = vunpack.c.l.b16 %v527
        %v620 = vunpack.c.h.b16 %v527
        %v621 = vunpack.c.l.b16 %v528
        %v622 = vunpack.c.h.b16 %v528
        %v623 = vunpack.c.l.b16 %v529
        %v624 = vunpack.c.h.b16 %v529
        %v625 = vunpack.c.l.b16 %v530
        %v626 = vunpack.c.h.b16 %v530
        %v627 = vunpack.c.l.b16 %v531
        %v628 = vunpack.c.h.b16 %v531
        %v629 = vunpack.c.l.b16 %v532
        %v630 = vunpack.c.h.b16 %v532
        %v631 = vunpack.c.l.b16 %v533
        %v632 = vunpack.c.h.b16 %v533
        %v633 = vunpack.c.l.b16 %v534
        %v634 = vunpack.c.h.b16 %v534
        %v635 = vunpack.c.l.b16 %v535
        %v636 = vunpack.c.h.b16 %v535
        %v637 = vunpack.c.l.b16 %v536
        %v638 = vunpack.c.h.b16 %v536
        %v639 = vunpack.c.l.b16 %v537
        %v640 = vunpack.c.h.b16 %v537
        %v641 = vunpack.c.l.b16 %v538
        %v642 = vunpack.c.h.b16 %v538
        %v643 = vpack.c.b16 %v583, %v579
        %v644 = vpack.c.b16 %v584, %v580
        %v645 = vpack.c.b16 %v585, %v581
        %v646 = vpack.c.b16 %v586, %v582
        %v647 = vpack.c.b16 %v591, %v587
        %v648 = vpack.c.b16 %v592, %v588
        %v649 = vpack.c.b16 %v593, %v589
        %v650 = vpack.c.b16 %v594, %v590
        %v651 = vpack.c.b16 %v599, %v595
        %v652 = vpack.c.b16 %v600, %v596
        %v653 = vpack.c.b16 %v601, %v597
        %v654 = vpack.c.b16 %v602, %v598
        %v655 = vpack.c.b16 %v607, %v603
        %v656 = vpack.c.b16 %v608, %v604
        %v657 = vpack.c.b16 %v609, %v605
        %v658 = vpack.c.b16 %v610, %v606
        %v659 = vpack.c.b16 %v615, %v611
        %v660 = vpack.c.b16 %v616, %v612
        %v661 = vpack.c.b16 %v617, %v613
        %v662 = vpack.c.b16 %v618, %v614
        %v663 = vpack.c.b16 %v623, %v619
        %v664 = vpack.c.b16 %v624, %v620
        %v665 = vpack.c.b16 %v625, %v621
        %v666 = vpack.c.b16 %v626, %v622
        %v667 = vpack.c.b16 %v631, %v627
        %v668 = vpack.c.b16 %v632, %v628
        %v669 = vpack.c.b16 %v633, %v629
        %v670 = vpack.c.b16 %v634, %v630
        %v671 = vpack.c.b16 %v639, %v635
        %v672 = vpack.c.b16 %v640, %v636
        %v673 = vpack.c.b16 %v641, %v637
        %v674 = vpack.c.b16 %v642, %v638
        %707 = vmatprep.subr.bf16.mxu0 %v672
        %708 = vmatpush1.bf16.msra.mxu0 %v671
        %709 = vmatprep.subr.bf16.mxu0 %v668
        %710 = vmatpush1.bf16.msra.mxu0 %v667
        %711 = vmatprep.subr.bf16.mxu0 %v664
        %712 = vmatpush1.bf16.msra.mxu0 %v663
        %713 = vmatprep.subr.bf16.mxu0 %v660
        %714 = vmatpush1.bf16.msra.mxu0 %v659
        %715 = vmatprep.subr.bf16.mxu0 %v656
        %716 = vmatpush1.bf16.msra.mxu0 %v655
        %717 = vmatprep.subr.bf16.mxu0 %v652
        %718 = vmatpush1.bf16.msra.mxu0 %v651
        %719 = vmatprep.subr.bf16.mxu0 %v648
        %720 = vmatpush1.bf16.msra.mxu0 %v647
        %721 = vmatprep.subr.bf16.mxu0 %v644
        %722 = vmatpush1.bf16.msra.mxu0 %v643
        %723 = vmatprep.subr.bf16.mxu0 0
        %724 = vmatpush2.bf16.msra.mxu0 0
        %725 = vmatprep.subr.bf16.mxu0 0
        %726 = vmatpush2.bf16.msra.mxu0 0
        %727 = vmatprep.subr.bf16.mxu0 0
        %728 = vmatpush2.bf16.msra.mxu0 0
        %729 = vmatprep.subr.bf16.mxu0 0
        %730 = vmatpush2.bf16.msra.mxu0 0
        %731 = vmatprep.subr.bf16.mxu0 0
        %732 = vmatpush2.bf16.msra.mxu0 0
        %733 = vmatprep.subr.bf16.mxu0 0
        %734 = vmatpush2.bf16.msra.mxu0 0
        %735 = vmatprep.subr.bf16.mxu0 0
        %736 = vmatpush2.bf16.msra.mxu0 0
        %737 = vmatprep.subr.bf16.mxu0 0
        %738 = vmatpush2.bf16.msra.mxu0 0
        %739 = vmatprep.mubr.bf16.mxu0 0
        %740 = vmatmul.mubr.bf16.gmra.mxu0 %v545
        %v741 = vpop.f32.mrf.mxu0
        %v742 = vadd.f32 0.0, %v741
        %v743 = vpop.f32.mrf.mxu0
        %v744 = vadd.f32 0.0, %v743
        %v745 = vpop.f32.mrf.mxu0
        %v746 = vadd.f32 0.0, %v745
        %v747 = vpop.f32.mrf.mxu0
        %v748 = vadd.f32 0.0, %v747
        %749 = vdwg.mxu0
        %750 = vmatprep.subr.bf16.mxu0 %v674
        %751 = vmatpush1.bf16.msra.mxu0 %v673
        %752 = vmatprep.subr.bf16.mxu0 %v670
        %753 = vmatpush1.bf16.msra.mxu0 %v669
        %754 = vmatprep.subr.bf16.mxu0 %v666
        %755 = vmatpush1.bf16.msra.mxu0 %v665
        %756 = vmatprep.subr.bf16.mxu0 %v662
        %757 = vmatpush1.bf16.msra.mxu0 %v661
        %758 = vmatprep.subr.bf16.mxu0 %v658
        %759 = vmatpush1.bf16.msra.mxu0 %v657
        %760 = vmatprep.subr.bf16.mxu0 %v654
        %761 = vmatpush1.bf16.msra.mxu0 %v653
        %762 = vmatprep.subr.bf16.mxu0 %v650
        %763 = vmatpush1.bf16.msra.mxu0 %v649
        %764 = vmatprep.subr.bf16.mxu0 %v646
        %765 = vmatpush1.bf16.msra.mxu0 %v645
        %766 = vmatprep.subr.bf16.mxu0 0
        %767 = vmatpush2.bf16.msra.mxu0 0
        %768 = vmatprep.subr.bf16.mxu0 0
        %769 = vmatpush2.bf16.msra.mxu0 0
        %770 = vmatprep.subr.bf16.mxu0 0
        %771 = vmatpush2.bf16.msra.mxu0 0
        %772 = vmatprep.subr.bf16.mxu0 0
        %773 = vmatpush2.bf16.msra.mxu0 0
        %774 = vmatprep.subr.bf16.mxu0 0
        %775 = vmatpush2.bf16.msra.mxu0 0
        %776 = vmatprep.subr.bf16.mxu0 0
        %777 = vmatpush2.bf16.msra.mxu0 0
        %778 = vmatprep.subr.bf16.mxu0 0
        %779 = vmatpush2.bf16.msra.mxu0 0
        %780 = vmatprep.subr.bf16.mxu0 0
        %781 = vmatpush2.bf16.msra.mxu0 0
        %782 = vmatprep.mubr.bf16.mxu0 0
        %783 = vmatmul.mubr.bf16.gmra.mxu0 %v545
        %v784 = vpop.f32.mrf.mxu0
        %v785 = vadd.f32 0.0, %v784
        %v786 = vpop.f32.mrf.mxu0
        %v787 = vadd.f32 0.0, %v786
        %v788 = vpop.f32.mrf.mxu0
        %v789 = vadd.f32 0.0, %v788
        %v790 = vpop.f32.mrf.mxu0
        %v791 = vadd.f32 0.0, %v790
        %792 = vdwg.mxu0
        %v793 = vmax.f32 %v742, %v744
        %v794 = vmax.f32 %v746, %v748
        %v795 = vmax.f32 %v793, %v785
        %v796 = vmax.f32 %v794, %v789
        %v797 = vmax.f32 %v795, %v787
        %v798 = vmax.f32 %v796, %v791
        %s799 = scalar_lea.vmem %s464, 8 [#allocation2]
        %v800 = vld [vmem:[%s799] sm:$0xf]
        %v801 = vld [vmem:[%s799 + $0x4] sm:$0xf]
        %v804 = vunpack.c.l.b16 %v800
        %v805 = vunpack.c.l.b16 %v801
        %v806 = vpack.c.b16 %v805, %v804
        %808 = vmatprep.subr.bf16.mxu0 %v672
        %809 = vmatpush1.bf16.msra.mxu0 %v671
        %810 = vmatprep.subr.bf16.mxu0 %v668
        %811 = vmatpush1.bf16.msra.mxu0 %v667
        %812 = vmatprep.subr.bf16.mxu0 %v664
        %813 = vmatpush1.bf16.msra.mxu0 %v663
        %814 = vmatprep.subr.bf16.mxu0 %v660
        %815 = vmatpush1.bf16.msra.mxu0 %v659
        %816 = vmatprep.subr.bf16.mxu0 %v656
        %817 = vmatpush1.bf16.msra.mxu0 %v655
        %818 = vmatprep.subr.bf16.mxu0 %v652
        %819 = vmatpush1.bf16.msra.mxu0 %v651
        %820 = vmatprep.subr.bf16.mxu0 %v648
        %821 = vmatpush1.bf16.msra.mxu0 %v647
        %822 = vmatprep.subr.bf16.mxu0 %v644
        %823 = vmatpush1.bf16.msra.mxu0 %v643
        %824 = vmatprep.subr.bf16.mxu0 0
        %825 = vmatpush2.bf16.msra.mxu0 0
        %826 = vmatprep.subr.bf16.mxu0 0
        %827 = vmatpush2.bf16.msra.mxu0 0
        %828 = vmatprep.subr.bf16.mxu0 0
        %829 = vmatpush2.bf16.msra.mxu0 0
        %830 = vmatprep.subr.bf16.mxu0 0
        %831 = vmatpush2.bf16.msra.mxu0 0
        %832 = vmatprep.subr.bf16.mxu0 0
        %833 = vmatpush2.bf16.msra.mxu0 0
        %834 = vmatprep.subr.bf16.mxu0 0
        %835 = vmatpush2.bf16.msra.mxu0 0
        %836 = vmatprep.subr.bf16.mxu0 0
        %837 = vmatpush2.bf16.msra.mxu0 0
        %838 = vmatprep.subr.bf16.mxu0 0
        %839 = vmatpush2.bf16.msra.mxu0 0
        %840 = vmatprep.mubr.bf16.mxu0 0
        %841 = vmatmul.mubr.bf16.gmra.mxu0 %v806
        %v842 = vpop.f32.mrf.mxu0
        %v843 = vadd.f32 0.0, %v842
        %v844 = vpop.f32.mrf.mxu0
        %v845 = vadd.f32 0.0, %v844
        %v846 = vpop.f32.mrf.mxu0
        %v847 = vadd.f32 0.0, %v846
        %v848 = vpop.f32.mrf.mxu0
        %v849 = vadd.f32 0.0, %v848
        %850 = vdwg.mxu0
        %851 = vmatprep.subr.bf16.mxu0 %v674
        %852 = vmatpush1.bf16.msra.mxu0 %v673
        %853 = vmatprep.subr.bf16.mxu0 %v670
        %854 = vmatpush1.bf16.msra.mxu0 %v669
        %855 = vmatprep.subr.bf16.mxu0 %v666
        %856 = vmatpush1.bf16.msra.mxu0 %v665
        %857 = vmatprep.subr.bf16.mxu0 %v662
        %858 = vmatpush1.bf16.msra.mxu0 %v661
        %859 = vmatprep.subr.bf16.mxu0 %v658
        %860 = vmatpush1.bf16.msra.mxu0 %v657
        %861 = vmatprep.subr.bf16.mxu0 %v654
        %862 = vmatpush1.bf16.msra.mxu0 %v653
        %863 = vmatprep.subr.bf16.mxu0 %v650
        %864 = vmatpush1.bf16.msra.mxu0 %v649
        %865 = vmatprep.subr.bf16.mxu0 %v646
        %866 = vmatpush1.bf16.msra.mxu0 %v645
        %867 = vmatprep.subr.bf16.mxu0 0
        %868 = vmatpush2.bf16.msra.mxu0 0
        %869 = vmatprep.subr.bf16.mxu0 0
        %870 = vmatpush2.bf16.msra.mxu0 0
        %871 = vmatprep.subr.bf16.mxu0 0
        %872 = vmatpush2.bf16.msra.mxu0 0
        %873 = vmatprep.subr.bf16.mxu0 0
        %874 = vmatpush2.bf16.msra.mxu0 0
        %875 = vmatprep.subr.bf16.mxu0 0
        %876 = vmatpush2.bf16.msra.mxu0 0
        %877 = vmatprep.subr.bf16.mxu0 0
        %878 = vmatpush2.bf16.msra.mxu0 0
        %879 = vmatprep.subr.bf16.mxu0 0
        %880 = vmatpush2.bf16.msra.mxu0 0
        %881 = vmatprep.subr.bf16.mxu0 0
        %882 = vmatpush2.bf16.msra.mxu0 0
        %883 = vmatprep.mubr.bf16.mxu0 0
        %884 = vmatmul.mubr.bf16.gmra.mxu0 %v806
        %v885 = vpop.f32.mrf.mxu0
        %v886 = vadd.f32 0.0, %v885
        %v887 = vpop.f32.mrf.mxu0
        %v888 = vadd.f32 0.0, %v887
        %v889 = vpop.f32.mrf.mxu0
        %v890 = vadd.f32 0.0, %v889
        %v891 = vpop.f32.mrf.mxu0
        %v892 = vadd.f32 0.0, %v891
        %893 = vdwg.mxu0
        %v894 = vmax.f32 %v797, %v843
        %v895 = vmax.f32 %v798, %v847
        %v896 = vmax.f32 %v894, %v845
        %v897 = vmax.f32 %v895, %v849
        %v898 = vmax.f32 %v896, %v886
        %v899 = vmax.f32 %v897, %v890
        %v900 = vmax.f32 %v898, %v888
        %v901 = vmax.f32 %v899, %v892
        %s902 = scalar_lea.vmem %s464, 16 [#allocation2]
        %v903 = vld [vmem:[%s902] sm:$0xf]
        %v904 = vld [vmem:[%s902 + $0x4] sm:$0xf]
        %v907 = vunpack.c.l.b16 %v903
        %v908 = vunpack.c.l.b16 %v904
        %v909 = vpack.c.b16 %v908, %v907
        %911 = vmatprep.subr.bf16.mxu0 %v672
        %912 = vmatpush1.bf16.msra.mxu0 %v671
        %913 = vmatprep.subr.bf16.mxu0 %v668
        %914 = vmatpush1.bf16.msra.mxu0 %v667
        %915 = vmatprep.subr.bf16.mxu0 %v664
        %916 = vmatpush1.bf16.msra.mxu0 %v663
        %917 = vmatprep.subr.bf16.mxu0 %v660
        %918 = vmatpush1.bf16.msra.mxu0 %v659
        %919 = vmatprep.subr.bf16.mxu0 %v656
        %920 = vmatpush1.bf16.msra.mxu0 %v655
        %921 = vmatprep.subr.bf16.mxu0 %v652
        %922 = vmatpush1.bf16.msra.mxu0 %v651
        %923 = vmatprep.subr.bf16.mxu0 %v648
        %924 = vmatpush1.bf16.msra.mxu0 %v647
        %925 = vmatprep.subr.bf16.mxu0 %v644
        %926 = vmatpush1.bf16.msra.mxu0 %v643
        %927 = vmatprep.subr.bf16.mxu0 0
        %928 = vmatpush2.bf16.msra.mxu0 0
        %929 = vmatprep.subr.bf16.mxu0 0
        %930 = vmatpush2.bf16.msra.mxu0 0
        %931 = vmatprep.subr.bf16.mxu0 0
        %932 = vmatpush2.bf16.msra.mxu0 0
        %933 = vmatprep.subr.bf16.mxu0 0
        %934 = vmatpush2.bf16.msra.mxu0 0
        %935 = vmatprep.subr.bf16.mxu0 0
        %936 = vmatpush2.bf16.msra.mxu0 0
        %937 = vmatprep.subr.bf16.mxu0 0
        %938 = vmatpush2.bf16.msra.mxu0 0
        %939 = vmatprep.subr.bf16.mxu0 0
        %940 = vmatpush2.bf16.msra.mxu0 0
        %941 = vmatprep.subr.bf16.mxu0 0
        %942 = vmatpush2.bf16.msra.mxu0 0
        %943 = vmatprep.mubr.bf16.mxu0 0
        %944 = vmatmul.mubr.bf16.gmra.mxu0 %v909
        %v945 = vpop.f32.mrf.mxu0
        %v946 = vadd.f32 0.0, %v945
        %v947 = vpop.f32.mrf.mxu0
        %v948 = vadd.f32 0.0, %v947
        %v949 = vpop.f32.mrf.mxu0
        %v950 = vadd.f32 0.0, %v949
        %v951 = vpop.f32.mrf.mxu0
        %v952 = vadd.f32 0.0, %v951
        %953 = vdwg.mxu0
        %954 = vmatprep.subr.bf16.mxu0 %v674
        %955 = vmatpush1.bf16.msra.mxu0 %v673
        %956 = vmatprep.subr.bf16.mxu0 %v670
        %957 = vmatpush1.bf16.msra.mxu0 %v669
        %958 = vmatprep.subr.bf16.mxu0 %v666
        %959 = vmatpush1.bf16.msra.mxu0 %v665
        %960 = vmatprep.subr.bf16.mxu0 %v662
        %961 = vmatpush1.bf16.msra.mxu0 %v661
        %962 = vmatprep.subr.bf16.mxu0 %v658
        %963 = vmatpush1.bf16.msra.mxu0 %v657
        %964 = vmatprep.subr.bf16.mxu0 %v654
        %965 = vmatpush1.bf16.msra.mxu0 %v653
        %966 = vmatprep.subr.bf16.mxu0 %v650
        %967 = vmatpush1.bf16.msra.mxu0 %v649
        %968 = vmatprep.subr.bf16.mxu0 %v646
        %969 = vmatpush1.bf16.msra.mxu0 %v645
        %970 = vmatprep.subr.bf16.mxu0 0
        %971 = vmatpush2.bf16.msra.mxu0 0
        %972 = vmatprep.subr.bf16.mxu0 0
        %973 = vmatpush2.bf16.msra.mxu0 0
        %974 = vmatprep.subr.bf16.mxu0 0
        %975 = vmatpush2.bf16.msra.mxu0 0
        %976 = vmatprep.subr.bf16.mxu0 0
        %977 = vmatpush2.bf16.msra.mxu0 0
        %978 = vmatprep.subr.bf16.mxu0 0
        %979 = vmatpush2.bf16.msra.mxu0 0
        %980 = vmatprep.subr.bf16.mxu0 0
        %981 = vmatpush2.bf16.msra.mxu0 0
        %982 = vmatprep.subr.bf16.mxu0 0
        %983 = vmatpush2.bf16.msra.mxu0 0
        %984 = vmatprep.subr.bf16.mxu0 0
        %985 = vmatpush2.bf16.msra.mxu0 0
        %986 = vmatprep.mubr.bf16.mxu0 0
        %987 = vmatmul.mubr.bf16.gmra.mxu0 %v909
        %v988 = vpop.f32.mrf.mxu0
        %v989 = vadd.f32 0.0, %v988
        %v990 = vpop.f32.mrf.mxu0
        %v991 = vadd.f32 0.0, %v990
        %v992 = vpop.f32.mrf.mxu0
        %v993 = vadd.f32 0.0, %v992
        %v994 = vpop.f32.mrf.mxu0
        %v995 = vadd.f32 0.0, %v994
        %996 = vdwg.mxu0
        %v997 = vmax.f32 %v900, %v946
        %v998 = vmax.f32 %v901, %v950
        %v999 = vmax.f32 %v997, %v948
        %v1000 = vmax.f32 %v998, %v952
        %v1001 = vmax.f32 %v999, %v989
        %v1002 = vmax.f32 %v1000, %v993
        %v1003 = vmax.f32 %v1001, %v991
        %v1004 = vmax.f32 %v1002, %v995
        %s1005 = scalar_lea.vmem %s464, 24 [#allocation2]
        %v1006 = vld [vmem:[%s1005] sm:$0xf]
        %v1007 = vld [vmem:[%s1005 + $0x4] sm:$0xf]
        %v1010 = vunpack.c.l.b16 %v1006
        %v1011 = vunpack.c.l.b16 %v1007
        %v1012 = vpack.c.b16 %v1011, %v1010
        %1014 = vmatprep.subr.bf16.mxu0 %v672
        %1015 = vmatpush1.bf16.msra.mxu0 %v671
        %1016 = vmatprep.subr.bf16.mxu0 %v668
        %1017 = vmatpush1.bf16.msra.mxu0 %v667
        %1018 = vmatprep.subr.bf16.mxu0 %v664
        %1019 = vmatpush1.bf16.msra.mxu0 %v663
        %1020 = vmatprep.subr.bf16.mxu0 %v660
        %1021 = vmatpush1.bf16.msra.mxu0 %v659
        %1022 = vmatprep.subr.bf16.mxu0 %v656
        %1023 = vmatpush1.bf16.msra.mxu0 %v655
        %1024 = vmatprep.subr.bf16.mxu0 %v652
        %1025 = vmatpush1.bf16.msra.mxu0 %v651
        %1026 = vmatprep.subr.bf16.mxu0 %v648
        %1027 = vmatpush1.bf16.msra.mxu0 %v647
        %1028 = vmatprep.subr.bf16.mxu0 %v644
        %1029 = vmatpush1.bf16.msra.mxu0 %v643
        %1030 = vmatprep.subr.bf16.mxu0 0
        %1031 = vmatpush2.bf16.msra.mxu0 0
        %1032 = vmatprep.subr.bf16.mxu0 0
        %1033 = vmatpush2.bf16.msra.mxu0 0
        %1034 = vmatprep.subr.bf16.mxu0 0
        %1035 = vmatpush2.bf16.msra.mxu0 0
        %1036 = vmatprep.subr.bf16.mxu0 0
        %1037 = vmatpush2.bf16.msra.mxu0 0
        %1038 = vmatprep.subr.bf16.mxu0 0
        %1039 = vmatpush2.bf16.msra.mxu0 0
        %1040 = vmatprep.subr.bf16.mxu0 0
        %1041 = vmatpush2.bf16.msra.mxu0 0
        %1042 = vmatprep.subr.bf16.mxu0 0
        %1043 = vmatpush2.bf16.msra.mxu0 0
        %1044 = vmatprep.subr.bf16.mxu0 0
        %1045 = vmatpush2.bf16.msra.mxu0 0
        %1046 = vmatprep.mubr.bf16.mxu0 0
        %1047 = vmatmul.mubr.bf16.gmra.mxu0 %v1012
        %v1048 = vpop.f32.mrf.mxu0
        %v1049 = vadd.f32 0.0, %v1048
        %v1050 = vpop.f32.mrf.mxu0
        %v1051 = vadd.f32 0.0, %v1050
        %v1052 = vpop.f32.mrf.mxu0
        %v1053 = vadd.f32 0.0, %v1052
        %v1054 = vpop.f32.mrf.mxu0
        %v1055 = vadd.f32 0.0, %v1054
        %1056 = vdwg.mxu0
        %1057 = vmatprep.subr.bf16.mxu0 %v674
        %1058 = vmatpush1.bf16.msra.mxu0 %v673
        %1059 = vmatprep.subr.bf16.mxu0 %v670
        %1060 = vmatpush1.bf16.msra.mxu0 %v669
        %1061 = vmatprep.subr.bf16.mxu0 %v666
        %1062 = vmatpush1.bf16.msra.mxu0 %v665
        %1063 = vmatprep.subr.bf16.mxu0 %v662
        %1064 = vmatpush1.bf16.msra.mxu0 %v661
        %1065 = vmatprep.subr.bf16.mxu0 %v658
        %1066 = vmatpush1.bf16.msra.mxu0 %v657
        %1067 = vmatprep.subr.bf16.mxu0 %v654
        %1068 = vmatpush1.bf16.msra.mxu0 %v653
        %1069 = vmatprep.subr.bf16.mxu0 %v650
        %1070 = vmatpush1.bf16.msra.mxu0 %v649
        %1071 = vmatprep.subr.bf16.mxu0 %v646
        %1072 = vmatpush1.bf16.msra.mxu0 %v645
        %1073 = vmatprep.subr.bf16.mxu0 0
        %1074 = vmatpush2.bf16.msra.mxu0 0
        %1075 = vmatprep.subr.bf16.mxu0 0
        %1076 = vmatpush2.bf16.msra.mxu0 0
        %1077 = vmatprep.subr.bf16.mxu0 0
        %1078 = vmatpush2.bf16.msra.mxu0 0
        %1079 = vmatprep.subr.bf16.mxu0 0
        %1080 = vmatpush2.bf16.msra.mxu0 0
        %1081 = vmatprep.subr.bf16.mxu0 0
        %1082 = vmatpush2.bf16.msra.mxu0 0
        %1083 = vmatprep.subr.bf16.mxu0 0
        %1084 = vmatpush2.bf16.msra.mxu0 0
        %1085 = vmatprep.subr.bf16.mxu0 0
        %1086 = vmatpush2.bf16.msra.mxu0 0
        %1087 = vmatprep.subr.bf16.mxu0 0
        %1088 = vmatpush2.bf16.msra.mxu0 0
        %1089 = vmatprep.mubr.bf16.mxu0 0
        %1090 = vmatmul.mubr.bf16.gmra.mxu0 %v1012
        %v1091 = vpop.f32.mrf.mxu0
        %v1092 = vadd.f32 0.0, %v1091
        %v1093 = vpop.f32.mrf.mxu0
        %v1094 = vadd.f32 0.0, %v1093
        %v1095 = vpop.f32.mrf.mxu0
        %v1096 = vadd.f32 0.0, %v1095
        %v1097 = vpop.f32.mrf.mxu0
        %v1098 = vadd.f32 0.0, %v1097
        %1099 = vdwg.mxu0
        %v1100 = vmax.f32 %v1003, %v1049
        %v1101 = vmax.f32 %v1004, %v1053
        %v1102 = vmax.f32 %v1100, %v1051
        %v1103 = vmax.f32 %v1101, %v1055
        %v1104 = vmax.f32 %v1102, %v1092
        %v1105 = vmax.f32 %v1103, %v1096
        %v1106 = vmax.f32 %v1104, %v1094
        %v1107 = vmax.f32 %v1105, %v1098
        %s1108 = scalar_lea.vmem %s464, 32 [#allocation2]
        %v1109 = vld [vmem:[%s1108] sm:$0xf]
        %v1110 = vld [vmem:[%s1108 + $0x4] sm:$0xf]
        %v1113 = vunpack.c.l.b16 %v1109
        %v1114 = vunpack.c.l.b16 %v1110
        %v1115 = vpack.c.b16 %v1114, %v1113
        %1117 = vmatprep.subr.bf16.mxu0 %v672
        %1118 = vmatpush1.bf16.msra.mxu0 %v671
        %1119 = vmatprep.subr.bf16.mxu0 %v668
        %1120 = vmatpush1.bf16.msra.mxu0 %v667
        %1121 = vmatprep.subr.bf16.mxu0 %v664
        %1122 = vmatpush1.bf16.msra.mxu0 %v663
        %1123 = vmatprep.subr.bf16.mxu0 %v660
        %1124 = vmatpush1.bf16.msra.mxu0 %v659
        %1125 = vmatprep.subr.bf16.mxu0 %v656
        %1126 = vmatpush1.bf16.msra.mxu0 %v655
        %1127 = vmatprep.subr.bf16.mxu0 %v652
        %1128 = vmatpush1.bf16.msra.mxu0 %v651
        %1129 = vmatprep.subr.bf16.mxu0 %v648
        %1130 = vmatpush1.bf16.msra.mxu0 %v647
        %1131 = vmatprep.subr.bf16.mxu0 %v644
        %1132 = vmatpush1.bf16.msra.mxu0 %v643
        %1133 = vmatprep.subr.bf16.mxu0 0
        %1134 = vmatpush2.bf16.msra.mxu0 0
        %1135 = vmatprep.subr.bf16.mxu0 0
        %1136 = vmatpush2.bf16.msra.mxu0 0
        %1137 = vmatprep.subr.bf16.mxu0 0
        %1138 = vmatpush2.bf16.msra.mxu0 0
        %1139 = vmatprep.subr.bf16.mxu0 0
        %1140 = vmatpush2.bf16.msra.mxu0 0
        %1141 = vmatprep.subr.bf16.mxu0 0
        %1142 = vmatpush2.bf16.msra.mxu0 0
        %1143 = vmatprep.subr.bf16.mxu0 0
        %1144 = vmatpush2.bf16.msra.mxu0 0
        %1145 = vmatprep.subr.bf16.mxu0 0
        %1146 = vmatpush2.bf16.msra.mxu0 0
        %1147 = vmatprep.subr.bf16.mxu0 0
        %1148 = vmatpush2.bf16.msra.mxu0 0
        %1149 = vmatprep.mubr.bf16.mxu0 0
        %1150 = vmatmul.mubr.bf16.gmra.mxu0 %v1115
        %v1151 = vpop.f32.mrf.mxu0
        %v1152 = vadd.f32 0.0, %v1151
        %v1153 = vpop.f32.mrf.mxu0
        %v1154 = vadd.f32 0.0, %v1153
        %v1155 = vpop.f32.mrf.mxu0
        %v1156 = vadd.f32 0.0, %v1155
        %v1157 = vpop.f32.mrf.mxu0
        %v1158 = vadd.f32 0.0, %v1157
        %1159 = vdwg.mxu0
        %1160 = vmatprep.subr.bf16.mxu0 %v674
        %1161 = vmatpush1.bf16.msra.mxu0 %v673
        %1162 = vmatprep.subr.bf16.mxu0 %v670
        %1163 = vmatpush1.bf16.msra.mxu0 %v669
        %1164 = vmatprep.subr.bf16.mxu0 %v666
        %1165 = vmatpush1.bf16.msra.mxu0 %v665
        %1166 = vmatprep.subr.bf16.mxu0 %v662
        %1167 = vmatpush1.bf16.msra.mxu0 %v661
        %1168 = vmatprep.subr.bf16.mxu0 %v658
        %1169 = vmatpush1.bf16.msra.mxu0 %v657
        %1170 = vmatprep.subr.bf16.mxu0 %v654
        %1171 = vmatpush1.bf16.msra.mxu0 %v653
        %1172 = vmatprep.subr.bf16.mxu0 %v650
        %1173 = vmatpush1.bf16.msra.mxu0 %v649
        %1174 = vmatprep.subr.bf16.mxu0 %v646
        %1175 = vmatpush1.bf16.msra.mxu0 %v645
        %1176 = vmatprep.subr.bf16.mxu0 0
        %1177 = vmatpush2.bf16.msra.mxu0 0
        %1178 = vmatprep.subr.bf16.mxu0 0
        %1179 = vmatpush2.bf16.msra.mxu0 0
        %1180 = vmatprep.subr.bf16.mxu0 0
        %1181 = vmatpush2.bf16.msra.mxu0 0
        %1182 = vmatprep.subr.bf16.mxu0 0
        %1183 = vmatpush2.bf16.msra.mxu0 0
        %1184 = vmatprep.subr.bf16.mxu0 0
        %1185 = vmatpush2.bf16.msra.mxu0 0
        %1186 = vmatprep.subr.bf16.mxu0 0
        %1187 = vmatpush2.bf16.msra.mxu0 0
        %1188 = vmatprep.subr.bf16.mxu0 0
        %1189 = vmatpush2.bf16.msra.mxu0 0
        %1190 = vmatprep.subr.bf16.mxu0 0
        %1191 = vmatpush2.bf16.msra.mxu0 0
        %1192 = vmatprep.mubr.bf16.mxu0 0
        %1193 = vmatmul.mubr.bf16.gmra.mxu0 %v1115
        %v1194 = vpop.f32.mrf.mxu0
        %v1195 = vadd.f32 0.0, %v1194
        %v1196 = vpop.f32.mrf.mxu0
        %v1197 = vadd.f32 0.0, %v1196
        %v1198 = vpop.f32.mrf.mxu0
        %v1199 = vadd.f32 0.0, %v1198
        %v1200 = vpop.f32.mrf.mxu0
        %v1201 = vadd.f32 0.0, %v1200
        %1202 = vdwg.mxu0
        %v1203 = vmax.f32 %v1106, %v1152
        %v1204 = vmax.f32 %v1107, %v1156
        %v1205 = vmax.f32 %v1203, %v1154
        %v1206 = vmax.f32 %v1204, %v1158
        %v1207 = vmax.f32 %v1205, %v1195
        %v1208 = vmax.f32 %v1206, %v1199
        %v1209 = vmax.f32 %v1207, %v1197
        %v1210 = vmax.f32 %v1208, %v1201
        %s1211 = scalar_lea.vmem %s464, 40 [#allocation2]
        %v1212 = vld [vmem:[%s1211] sm:$0xf]
        %v1213 = vld [vmem:[%s1211 + $0x4] sm:$0xf]
        %v1216 = vunpack.c.l.b16 %v1212
        %v1217 = vunpack.c.l.b16 %v1213
        %v1218 = vpack.c.b16 %v1217, %v1216
        %1220 = vmatprep.subr.bf16.mxu0 %v672
        %1221 = vmatpush1.bf16.msra.mxu0 %v671
        %1222 = vmatprep.subr.bf16.mxu0 %v668
        %1223 = vmatpush1.bf16.msra.mxu0 %v667
        %1224 = vmatprep.subr.bf16.mxu0 %v664
        %1225 = vmatpush1.bf16.msra.mxu0 %v663
        %1226 = vmatprep.subr.bf16.mxu0 %v660
        %1227 = vmatpush1.bf16.msra.mxu0 %v659
        %1228 = vmatprep.subr.bf16.mxu0 %v656
        %1229 = vmatpush1.bf16.msra.mxu0 %v655
        %1230 = vmatprep.subr.bf16.mxu0 %v652
        %1231 = vmatpush1.bf16.msra.mxu0 %v651
        %1232 = vmatprep.subr.bf16.mxu0 %v648
        %1233 = vmatpush1.bf16.msra.mxu0 %v647
        %1234 = vmatprep.subr.bf16.mxu0 %v644
        %1235 = vmatpush1.bf16.msra.mxu0 %v643
        %1236 = vmatprep.subr.bf16.mxu0 0
        %1237 = vmatpush2.bf16.msra.mxu0 0
        %1238 = vmatprep.subr.bf16.mxu0 0
        %1239 = vmatpush2.bf16.msra.mxu0 0
        %1240 = vmatprep.subr.bf16.mxu0 0
        %1241 = vmatpush2.bf16.msra.mxu0 0
        %1242 = vmatprep.subr.bf16.mxu0 0
        %1243 = vmatpush2.bf16.msra.mxu0 0
        %1244 = vmatprep.subr.bf16.mxu0 0
        %1245 = vmatpush2.bf16.msra.mxu0 0
        %1246 = vmatprep.subr.bf16.mxu0 0
        %1247 = vmatpush2.bf16.msra.mxu0 0
        %1248 = vmatprep.subr.bf16.mxu0 0
        %1249 = vmatpush2.bf16.msra.mxu0 0
        %1250 = vmatprep.subr.bf16.mxu0 0
        %1251 = vmatpush2.bf16.msra.mxu0 0
        %1252 = vmatprep.mubr.bf16.mxu0 0
        %1253 = vmatmul.mubr.bf16.gmra.mxu0 %v1218
        %v1254 = vpop.f32.mrf.mxu0
        %v1255 = vadd.f32 0.0, %v1254
        %v1256 = vpop.f32.mrf.mxu0
        %v1257 = vadd.f32 0.0, %v1256
        %v1258 = vpop.f32.mrf.mxu0
        %v1259 = vadd.f32 0.0, %v1258
        %v1260 = vpop.f32.mrf.mxu0
        %v1261 = vadd.f32 0.0, %v1260
        %1262 = vdwg.mxu0
        %1263 = vmatprep.subr.bf16.mxu0 %v674
        %1264 = vmatpush1.bf16.msra.mxu0 %v673
        %1265 = vmatprep.subr.bf16.mxu0 %v670
        %1266 = vmatpush1.bf16.msra.mxu0 %v669
        %1267 = vmatprep.subr.bf16.mxu0 %v666
        %1268 = vmatpush1.bf16.msra.mxu0 %v665
        %1269 = vmatprep.subr.bf16.mxu0 %v662
        %1270 = vmatpush1.bf16.msra.mxu0 %v661
        %1271 = vmatprep.subr.bf16.mxu0 %v658
        %1272 = vmatpush1.bf16.msra.mxu0 %v657
        %1273 = vmatprep.subr.bf16.mxu0 %v654
        %1274 = vmatpush1.bf16.msra.mxu0 %v653
        %1275 = vmatprep.subr.bf16.mxu0 %v650
        %1276 = vmatpush1.bf16.msra.mxu0 %v649
        %1277 = vmatprep.subr.bf16.mxu0 %v646
        %1278 = vmatpush1.bf16.msra.mxu0 %v645
        %1279 = vmatprep.subr.bf16.mxu0 0
        %1280 = vmatpush2.bf16.msra.mxu0 0
        %1281 = vmatprep.subr.bf16.mxu0 0
        %1282 = vmatpush2.bf16.msra.mxu0 0
        %1283 = vmatprep.subr.bf16.mxu0 0
        %1284 = vmatpush2.bf16.msra.mxu0 0
        %1285 = vmatprep.subr.bf16.mxu0 0
        %1286 = vmatpush2.bf16.msra.mxu0 0
        %1287 = vmatprep.subr.bf16.mxu0 0
        %1288 = vmatpush2.bf16.msra.mxu0 0
        %1289 = vmatprep.subr.bf16.mxu0 0
        %1290 = vmatpush2.bf16.msra.mxu0 0
        %1291 = vmatprep.subr.bf16.mxu0 0
        %1292 = vmatpush2.bf16.msra.mxu0 0
        %1293 = vmatprep.subr.bf16.mxu0 0
        %1294 = vmatpush2.bf16.msra.mxu0 0
        %1295 = vmatprep.mubr.bf16.mxu0 0
        %1296 = vmatmul.mubr.bf16.gmra.mxu0 %v1218
        %v1297 = vpop.f32.mrf.mxu0
        %v1298 = vadd.f32 0.0, %v1297
        %v1299 = vpop.f32.mrf.mxu0
        %v1300 = vadd.f32 0.0, %v1299
        %v1301 = vpop.f32.mrf.mxu0
        %v1302 = vadd.f32 0.0, %v1301
        %v1303 = vpop.f32.mrf.mxu0
        %v1304 = vadd.f32 0.0, %v1303
        %1305 = vdwg.mxu0
        %v1306 = vmax.f32 %v1209, %v1255
        %v1307 = vmax.f32 %v1210, %v1259
        %v1308 = vmax.f32 %v1306, %v1257
        %v1309 = vmax.f32 %v1307, %v1261
        %v1310 = vmax.f32 %v1308, %v1298
        %v1311 = vmax.f32 %v1309, %v1302
        %v1312 = vmax.f32 %v1310, %v1300
        %v1313 = vmax.f32 %v1311, %v1304
        %s1314 = scalar_lea.vmem %s464, 48 [#allocation2]
        %v1315 = vld [vmem:[%s1314] sm:$0xf]
        %v1316 = vld [vmem:[%s1314 + $0x4] sm:$0xf]
        %v1319 = vunpack.c.l.b16 %v1315
        %v1320 = vunpack.c.l.b16 %v1316
        %v1321 = vpack.c.b16 %v1320, %v1319
        %1323 = vmatprep.subr.bf16.mxu0 %v672
        %1324 = vmatpush1.bf16.msra.mxu0 %v671
        %1325 = vmatprep.subr.bf16.mxu0 %v668
        %1326 = vmatpush1.bf16.msra.mxu0 %v667
        %1327 = vmatprep.subr.bf16.mxu0 %v664
        %1328 = vmatpush1.bf16.msra.mxu0 %v663
        %1329 = vmatprep.subr.bf16.mxu0 %v660
        %1330 = vmatpush1.bf16.msra.mxu0 %v659
        %1331 = vmatprep.subr.bf16.mxu0 %v656
        %1332 = vmatpush1.bf16.msra.mxu0 %v655
        %1333 = vmatprep.subr.bf16.mxu0 %v652
        %1334 = vmatpush1.bf16.msra.mxu0 %v651
        %1335 = vmatprep.subr.bf16.mxu0 %v648
        %1336 = vmatpush1.bf16.msra.mxu0 %v647
        %1337 = vmatprep.subr.bf16.mxu0 %v644
        %1338 = vmatpush1.bf16.msra.mxu0 %v643
        %1339 = vmatprep.subr.bf16.mxu0 0
        %1340 = vmatpush2.bf16.msra.mxu0 0
        %1341 = vmatprep.subr.bf16.mxu0 0
        %1342 = vmatpush2.bf16.msra.mxu0 0
        %1343 = vmatprep.subr.bf16.mxu0 0
        %1344 = vmatpush2.bf16.msra.mxu0 0
        %1345 = vmatprep.subr.bf16.mxu0 0
        %1346 = vmatpush2.bf16.msra.mxu0 0
        %1347 = vmatprep.subr.bf16.mxu0 0
        %1348 = vmatpush2.bf16.msra.mxu0 0
        %1349 = vmatprep.subr.bf16.mxu0 0
        %1350 = vmatpush2.bf16.msra.mxu0 0
        %1351 = vmatprep.subr.bf16.mxu0 0
        %1352 = vmatpush2.bf16.msra.mxu0 0
        %1353 = vmatprep.subr.bf16.mxu0 0
        %1354 = vmatpush2.bf16.msra.mxu0 0
        %1355 = vmatprep.mubr.bf16.mxu0 0
        %1356 = vmatmul.mubr.bf16.gmra.mxu0 %v1321
        %v1357 = vpop.f32.mrf.mxu0
        %v1358 = vadd.f32 0.0, %v1357
        %v1359 = vpop.f32.mrf.mxu0
        %v1360 = vadd.f32 0.0, %v1359
        %v1361 = vpop.f32.mrf.mxu0
        %v1362 = vadd.f32 0.0, %v1361
        %v1363 = vpop.f32.mrf.mxu0
        %v1364 = vadd.f32 0.0, %v1363
        %1365 = vdwg.mxu0
        %1366 = vmatprep.subr.bf16.mxu0 %v674
        %1367 = vmatpush1.bf16.msra.mxu0 %v673
        %1368 = vmatprep.subr.bf16.mxu0 %v670
        %1369 = vmatpush1.bf16.msra.mxu0 %v669
        %1370 = vmatprep.subr.bf16.mxu0 %v666
        %1371 = vmatpush1.bf16.msra.mxu0 %v665
        %1372 = vmatprep.subr.bf16.mxu0 %v662
        %1373 = vmatpush1.bf16.msra.mxu0 %v661
        %1374 = vmatprep.subr.bf16.mxu0 %v658
        %1375 = vmatpush1.bf16.msra.mxu0 %v657
        %1376 = vmatprep.subr.bf16.mxu0 %v654
        %1377 = vmatpush1.bf16.msra.mxu0 %v653
        %1378 = vmatprep.subr.bf16.mxu0 %v650
        %1379 = vmatpush1.bf16.msra.mxu0 %v649
        %1380 = vmatprep.subr.bf16.mxu0 %v646
        %1381 = vmatpush1.bf16.msra.mxu0 %v645
        %1382 = vmatprep.subr.bf16.mxu0 0
        %1383 = vmatpush2.bf16.msra.mxu0 0
        %1384 = vmatprep.subr.bf16.mxu0 0
        %1385 = vmatpush2.bf16.msra.mxu0 0
        %1386 = vmatprep.subr.bf16.mxu0 0
        %1387 = vmatpush2.bf16.msra.mxu0 0
        %1388 = vmatprep.subr.bf16.mxu0 0
        %1389 = vmatpush2.bf16.msra.mxu0 0
        %1390 = vmatprep.subr.bf16.mxu0 0
        %1391 = vmatpush2.bf16.msra.mxu0 0
        %1392 = vmatprep.subr.bf16.mxu0 0
        %1393 = vmatpush2.bf16.msra.mxu0 0
        %1394 = vmatprep.subr.bf16.mxu0 0
        %1395 = vmatpush2.bf16.msra.mxu0 0
        %1396 = vmatprep.subr.bf16.mxu0 0
        %1397 = vmatpush2.bf16.msra.mxu0 0
        %1398 = vmatprep.mubr.bf16.mxu0 0
        %1399 = vmatmul.mubr.bf16.gmra.mxu0 %v1321
        %v1400 = vpop.f32.mrf.mxu0
        %v1401 = vadd.f32 0.0, %v1400
        %v1402 = vpop.f32.mrf.mxu0
        %v1403 = vadd.f32 0.0, %v1402
        %v1404 = vpop.f32.mrf.mxu0
        %v1405 = vadd.f32 0.0, %v1404
        %v1406 = vpop.f32.mrf.mxu0
        %v1407 = vadd.f32 0.0, %v1406
        %1408 = vdwg.mxu0
        %v1409 = vmax.f32 %v1312, %v1358
        %v1410 = vmax.f32 %v1313, %v1362
        %v1411 = vmax.f32 %v1409, %v1360
        %v1412 = vmax.f32 %v1410, %v1364
        %v1413 = vmax.f32 %v1411, %v1401
        %v1414 = vmax.f32 %v1412, %v1405
        %v1415 = vmax.f32 %v1413, %v1403
        %v1416 = vmax.f32 %v1414, %v1407
        %s1417 = scalar_lea.vmem %s464, 56 [#allocation2]
        %v1418 = vld [vmem:[%s1417] sm:$0xf]
        %v1419 = vld [vmem:[%s1417 + $0x4] sm:$0xf]
        %v1422 = vunpack.c.l.b16 %v1418
        %v1423 = vunpack.c.l.b16 %v1419
        %v1424 = vpack.c.b16 %v1423, %v1422
        %1426 = vmatprep.subr.bf16.mxu0 %v672
        %1427 = vmatpush1.bf16.msra.mxu0 %v671
        %1428 = vmatprep.subr.bf16.mxu0 %v668
        %1429 = vmatpush1.bf16.msra.mxu0 %v667
        %1430 = vmatprep.subr.bf16.mxu0 %v664
        %1431 = vmatpush1.bf16.msra.mxu0 %v663
        %1432 = vmatprep.subr.bf16.mxu0 %v660
        %1433 = vmatpush1.bf16.msra.mxu0 %v659
        %1434 = vmatprep.subr.bf16.mxu0 %v656
        %1435 = vmatpush1.bf16.msra.mxu0 %v655
        %1436 = vmatprep.subr.bf16.mxu0 %v652
        %1437 = vmatpush1.bf16.msra.mxu0 %v651
        %1438 = vmatprep.subr.bf16.mxu0 %v648
        %1439 = vmatpush1.bf16.msra.mxu0 %v647
        %1440 = vmatprep.subr.bf16.mxu0 %v644
        %1441 = vmatpush1.bf16.msra.mxu0 %v643
        %1442 = vmatprep.subr.bf16.mxu0 0
        %1443 = vmatpush2.bf16.msra.mxu0 0
        %1444 = vmatprep.subr.bf16.mxu0 0
        %1445 = vmatpush2.bf16.msra.mxu0 0
        %1446 = vmatprep.subr.bf16.mxu0 0
        %1447 = vmatpush2.bf16.msra.mxu0 0
        %1448 = vmatprep.subr.bf16.mxu0 0
        %1449 = vmatpush2.bf16.msra.mxu0 0
        %1450 = vmatprep.subr.bf16.mxu0 0
        %1451 = vmatpush2.bf16.msra.mxu0 0
        %1452 = vmatprep.subr.bf16.mxu0 0
        %1453 = vmatpush2.bf16.msra.mxu0 0
        %1454 = vmatprep.subr.bf16.mxu0 0
        %1455 = vmatpush2.bf16.msra.mxu0 0
        %1456 = vmatprep.subr.bf16.mxu0 0
        %1457 = vmatpush2.bf16.msra.mxu0 0
        %1458 = vmatprep.mubr.bf16.mxu0 0
        %1459 = vmatmul.mubr.bf16.gmra.mxu0 %v1424
        %v1460 = vpop.f32.mrf.mxu0
        %v1461 = vadd.f32 0.0, %v1460
        %v1462 = vpop.f32.mrf.mxu0
        %v1463 = vadd.f32 0.0, %v1462
        %v1464 = vpop.f32.mrf.mxu0
        %v1465 = vadd.f32 0.0, %v1464
        %v1466 = vpop.f32.mrf.mxu0
        %v1467 = vadd.f32 0.0, %v1466
        %1468 = vdwg.mxu0
        %1469 = vmatprep.subr.bf16.mxu0 %v674
        %1470 = vmatpush1.bf16.msra.mxu0 %v673
        %1471 = vmatprep.subr.bf16.mxu0 %v670
        %1472 = vmatpush1.bf16.msra.mxu0 %v669
        %1473 = vmatprep.subr.bf16.mxu0 %v666
        %1474 = vmatpush1.bf16.msra.mxu0 %v665
        %1475 = vmatprep.subr.bf16.mxu0 %v662
        %1476 = vmatpush1.bf16.msra.mxu0 %v661
        %1477 = vmatprep.subr.bf16.mxu0 %v658
        %1478 = vmatpush1.bf16.msra.mxu0 %v657
        %1479 = vmatprep.subr.bf16.mxu0 %v654
        %1480 = vmatpush1.bf16.msra.mxu0 %v653
        %1481 = vmatprep.subr.bf16.mxu0 %v650
        %1482 = vmatpush1.bf16.msra.mxu0 %v649
        %1483 = vmatprep.subr.bf16.mxu0 %v646
        %1484 = vmatpush1.bf16.msra.mxu0 %v645
        %1485 = vmatprep.subr.bf16.mxu0 0
        %1486 = vmatpush2.bf16.msra.mxu0 0
        %1487 = vmatprep.subr.bf16.mxu0 0
        %1488 = vmatpush2.bf16.msra.mxu0 0
        %1489 = vmatprep.subr.bf16.mxu0 0
        %1490 = vmatpush2.bf16.msra.mxu0 0
        %1491 = vmatprep.subr.bf16.mxu0 0
        %1492 = vmatpush2.bf16.msra.mxu0 0
        %1493 = vmatprep.subr.bf16.mxu0 0
        %1494 = vmatpush2.bf16.msra.mxu0 0
        %1495 = vmatprep.subr.bf16.mxu0 0
        %1496 = vmatpush2.bf16.msra.mxu0 0
        %1497 = vmatprep.subr.bf16.mxu0 0
        %1498 = vmatpush2.bf16.msra.mxu0 0
        %1499 = vmatprep.subr.bf16.mxu0 0
        %1500 = vmatpush2.bf16.msra.mxu0 0
        %1501 = vmatprep.mubr.bf16.mxu0 0
        %1502 = vmatmul.mubr.bf16.gmra.mxu0 %v1424
        %v1503 = vpop.f32.mrf.mxu0
        %v1504 = vadd.f32 0.0, %v1503
        %v1505 = vpop.f32.mrf.mxu0
        %v1506 = vadd.f32 0.0, %v1505
        %v1507 = vpop.f32.mrf.mxu0
        %v1508 = vadd.f32 0.0, %v1507
        %v1509 = vpop.f32.mrf.mxu0
        %v1510 = vadd.f32 0.0, %v1509
        %1511 = vdwg.mxu0
        %v1512 = vmax.f32 %v1415, %v1461
        %v1513 = vmax.f32 %v1416, %v1465
        %v1514 = vmax.f32 %v1512, %v1463
        %v1515 = vmax.f32 %v1513, %v1467
        %v1516 = vmax.f32 %v1514, %v1504
        %v1517 = vmax.f32 %v1515, %v1508
        %v1518 = vmax.f32 %v1516, %v1506
        %v1519 = vmax.f32 %v1517, %v1510
        %s1520 = scalar_lea.vmem %s464, 64 [#allocation2]
        %v1521 = vld [vmem:[%s1520] sm:$0xf]
        %v1522 = vld [vmem:[%s1520 + $0x4] sm:$0xf]
        %v1525 = vunpack.c.l.b16 %v1521
        %v1526 = vunpack.c.l.b16 %v1522
        %v1527 = vpack.c.b16 %v1526, %v1525
        %1529 = vmatprep.subr.bf16.mxu0 %v672
        %1530 = vmatpush1.bf16.msra.mxu0 %v671
        %1531 = vmatprep.subr.bf16.mxu0 %v668
        %1532 = vmatpush1.bf16.msra.mxu0 %v667
        %1533 = vmatprep.subr.bf16.mxu0 %v664
        %1534 = vmatpush1.bf16.msra.mxu0 %v663
        %1535 = vmatprep.subr.bf16.mxu0 %v660
        %1536 = vmatpush1.bf16.msra.mxu0 %v659
        %1537 = vmatprep.subr.bf16.mxu0 %v656
        %1538 = vmatpush1.bf16.msra.mxu0 %v655
        %1539 = vmatprep.subr.bf16.mxu0 %v652
        %1540 = vmatpush1.bf16.msra.mxu0 %v651
        %1541 = vmatprep.subr.bf16.mxu0 %v648
        %1542 = vmatpush1.bf16.msra.mxu0 %v647
        %1543 = vmatprep.subr.bf16.mxu0 %v644
        %1544 = vmatpush1.bf16.msra.mxu0 %v643
        %1545 = vmatprep.subr.bf16.mxu0 0
        %1546 = vmatpush2.bf16.msra.mxu0 0
        %1547 = vmatprep.subr.bf16.mxu0 0
        %1548 = vmatpush2.bf16.msra.mxu0 0
        %1549 = vmatprep.subr.bf16.mxu0 0
        %1550 = vmatpush2.bf16.msra.mxu0 0
        %1551 = vmatprep.subr.bf16.mxu0 0
        %1552 = vmatpush2.bf16.msra.mxu0 0
        %1553 = vmatprep.subr.bf16.mxu0 0
        %1554 = vmatpush2.bf16.msra.mxu0 0
        %1555 = vmatprep.subr.bf16.mxu0 0
        %1556 = vmatpush2.bf16.msra.mxu0 0
        %1557 = vmatprep.subr.bf16.mxu0 0
        %1558 = vmatpush2.bf16.msra.mxu0 0
        %1559 = vmatprep.subr.bf16.mxu0 0
        %1560 = vmatpush2.bf16.msra.mxu0 0
        %1561 = vmatprep.mubr.bf16.mxu0 0
        %1562 = vmatmul.mubr.bf16.gmra.mxu0 %v1527
        %v1563 = vpop.f32.mrf.mxu0
        %v1564 = vadd.f32 0.0, %v1563
        %v1565 = vpop.f32.mrf.mxu0
        %v1566 = vadd.f32 0.0, %v1565
        %v1567 = vpop.f32.mrf.mxu0
        %v1568 = vadd.f32 0.0, %v1567
        %v1569 = vpop.f32.mrf.mxu0
        %v1570 = vadd.f32 0.0, %v1569
        %1571 = vdwg.mxu0
        %1572 = vmatprep.subr.bf16.mxu0 %v674
        %1573 = vmatpush1.bf16.msra.mxu0 %v673
        %1574 = vmatprep.subr.bf16.mxu0 %v670
        %1575 = vmatpush1.bf16.msra.mxu0 %v669
        %1576 = vmatprep.subr.bf16.mxu0 %v666
        %1577 = vmatpush1.bf16.msra.mxu0 %v665
        %1578 = vmatprep.subr.bf16.mxu0 %v662
        %1579 = vmatpush1.bf16.msra.mxu0 %v661
        %1580 = vmatprep.subr.bf16.mxu0 %v658
        %1581 = vmatpush1.bf16.msra.mxu0 %v657
        %1582 = vmatprep.subr.bf16.mxu0 %v654
        %1583 = vmatpush1.bf16.msra.mxu0 %v653
        %1584 = vmatprep.subr.bf16.mxu0 %v650
        %1585 = vmatpush1.bf16.msra.mxu0 %v649
        %1586 = vmatprep.subr.bf16.mxu0 %v646
        %1587 = vmatpush1.bf16.msra.mxu0 %v645
        %1588 = vmatprep.subr.bf16.mxu0 0
        %1589 = vmatpush2.bf16.msra.mxu0 0
        %1590 = vmatprep.subr.bf16.mxu0 0
        %1591 = vmatpush2.bf16.msra.mxu0 0
        %1592 = vmatprep.subr.bf16.mxu0 0
        %1593 = vmatpush2.bf16.msra.mxu0 0
        %1594 = vmatprep.subr.bf16.mxu0 0
        %1595 = vmatpush2.bf16.msra.mxu0 0
        %1596 = vmatprep.subr.bf16.mxu0 0
        %1597 = vmatpush2.bf16.msra.mxu0 0
        %1598 = vmatprep.subr.bf16.mxu0 0
        %1599 = vmatpush2.bf16.msra.mxu0 0
        %1600 = vmatprep.subr.bf16.mxu0 0
        %1601 = vmatpush2.bf16.msra.mxu0 0
        %1602 = vmatprep.subr.bf16.mxu0 0
        %1603 = vmatpush2.bf16.msra.mxu0 0
        %1604 = vmatprep.mubr.bf16.mxu0 0
        %1605 = vmatmul.mubr.bf16.gmra.mxu0 %v1527
        %v1606 = vpop.f32.mrf.mxu0
        %v1607 = vadd.f32 0.0, %v1606
        %v1608 = vpop.f32.mrf.mxu0
        %v1609 = vadd.f32 0.0, %v1608
        %v1610 = vpop.f32.mrf.mxu0
        %v1611 = vadd.f32 0.0, %v1610
        %v1612 = vpop.f32.mrf.mxu0
        %v1613 = vadd.f32 0.0, %v1612
        %1614 = vdwg.mxu0
        %v1615 = vmax.f32 %v1518, %v1564
        %v1616 = vmax.f32 %v1519, %v1568
        %v1617 = vmax.f32 %v1615, %v1566
        %v1618 = vmax.f32 %v1616, %v1570
        %v1619 = vmax.f32 %v1617, %v1607
        %v1620 = vmax.f32 %v1618, %v1611
        %v1621 = vmax.f32 %v1619, %v1609
        %v1622 = vmax.f32 %v1620, %v1613
        %s1623 = scalar_lea.vmem %s464, 72 [#allocation2]
        %v1624 = vld [vmem:[%s1623] sm:$0xf]
        %v1625 = vld [vmem:[%s1623 + $0x4] sm:$0xf]
        %v1628 = vunpack.c.l.b16 %v1624
        %v1629 = vunpack.c.l.b16 %v1625
        %v1630 = vpack.c.b16 %v1629, %v1628
        %1632 = vmatprep.subr.bf16.mxu0 %v672
        %1633 = vmatpush1.bf16.msra.mxu0 %v671
        %1634 = vmatprep.subr.bf16.mxu0 %v668
        %1635 = vmatpush1.bf16.msra.mxu0 %v667
        %1636 = vmatprep.subr.bf16.mxu0 %v664
        %1637 = vmatpush1.bf16.msra.mxu0 %v663
        %1638 = vmatprep.subr.bf16.mxu0 %v660
        %1639 = vmatpush1.bf16.msra.mxu0 %v659
        %1640 = vmatprep.subr.bf16.mxu0 %v656
        %1641 = vmatpush1.bf16.msra.mxu0 %v655
        %1642 = vmatprep.subr.bf16.mxu0 %v652
        %1643 = vmatpush1.bf16.msra.mxu0 %v651
        %1644 = vmatprep.subr.bf16.mxu0 %v648
        %1645 = vmatpush1.bf16.msra.mxu0 %v647
        %1646 = vmatprep.subr.bf16.mxu0 %v644
        %1647 = vmatpush1.bf16.msra.mxu0 %v643
        %1648 = vmatprep.subr.bf16.mxu0 0
        %1649 = vmatpush2.bf16.msra.mxu0 0
        %1650 = vmatprep.subr.bf16.mxu0 0
        %1651 = vmatpush2.bf16.msra.mxu0 0
        %1652 = vmatprep.subr.bf16.mxu0 0
        %1653 = vmatpush2.bf16.msra.mxu0 0
        %1654 = vmatprep.subr.bf16.mxu0 0
        %1655 = vmatpush2.bf16.msra.mxu0 0
        %1656 = vmatprep.subr.bf16.mxu0 0
        %1657 = vmatpush2.bf16.msra.mxu0 0
        %1658 = vmatprep.subr.bf16.mxu0 0
        %1659 = vmatpush2.bf16.msra.mxu0 0
        %1660 = vmatprep.subr.bf16.mxu0 0
        %1661 = vmatpush2.bf16.msra.mxu0 0
        %1662 = vmatprep.subr.bf16.mxu0 0
        %1663 = vmatpush2.bf16.msra.mxu0 0
        %1664 = vmatprep.mubr.bf16.mxu0 0
        %1665 = vmatmul.mubr.bf16.gmra.mxu0 %v1630
        %v1666 = vpop.f32.mrf.mxu0
        %v1667 = vadd.f32 0.0, %v1666
        %v1668 = vpop.f32.mrf.mxu0
        %v1669 = vadd.f32 0.0, %v1668
        %v1670 = vpop.f32.mrf.mxu0
        %v1671 = vadd.f32 0.0, %v1670
        %v1672 = vpop.f32.mrf.mxu0
        %v1673 = vadd.f32 0.0, %v1672
        %1674 = vdwg.mxu0
        %1675 = vmatprep.subr.bf16.mxu0 %v674
        %1676 = vmatpush1.bf16.msra.mxu0 %v673
        %1677 = vmatprep.subr.bf16.mxu0 %v670
        %1678 = vmatpush1.bf16.msra.mxu0 %v669
        %1679 = vmatprep.subr.bf16.mxu0 %v666
        %1680 = vmatpush1.bf16.msra.mxu0 %v665
        %1681 = vmatprep.subr.bf16.mxu0 %v662
        %1682 = vmatpush1.bf16.msra.mxu0 %v661
        %1683 = vmatprep.subr.bf16.mxu0 %v658
        %1684 = vmatpush1.bf16.msra.mxu0 %v657
        %1685 = vmatprep.subr.bf16.mxu0 %v654
        %1686 = vmatpush1.bf16.msra.mxu0 %v653
        %1687 = vmatprep.subr.bf16.mxu0 %v650
        %1688 = vmatpush1.bf16.msra.mxu0 %v649
        %1689 = vmatprep.subr.bf16.mxu0 %v646
        %1690 = vmatpush1.bf16.msra.mxu0 %v645
        %1691 = vmatprep.subr.bf16.mxu0 0
        %1692 = vmatpush2.bf16.msra.mxu0 0
        %1693 = vmatprep.subr.bf16.mxu0 0
        %1694 = vmatpush2.bf16.msra.mxu0 0
        %1695 = vmatprep.subr.bf16.mxu0 0
        %1696 = vmatpush2.bf16.msra.mxu0 0
        %1697 = vmatprep.subr.bf16.mxu0 0
        %1698 = vmatpush2.bf16.msra.mxu0 0
        %1699 = vmatprep.subr.bf16.mxu0 0
        %1700 = vmatpush2.bf16.msra.mxu0 0
        %1701 = vmatprep.subr.bf16.mxu0 0
        %1702 = vmatpush2.bf16.msra.mxu0 0
        %1703 = vmatprep.subr.bf16.mxu0 0
        %1704 = vmatpush2.bf16.msra.mxu0 0
        %1705 = vmatprep.subr.bf16.mxu0 0
        %1706 = vmatpush2.bf16.msra.mxu0 0
        %1707 = vmatprep.mubr.bf16.mxu0 0
        %1708 = vmatmul.mubr.bf16.gmra.mxu0 %v1630
        %v1709 = vpop.f32.mrf.mxu0
        %v1710 = vadd.f32 0.0, %v1709
        %v1711 = vpop.f32.mrf.mxu0
        %v1712 = vadd.f32 0.0, %v1711
        %v1713 = vpop.f32.mrf.mxu0
        %v1714 = vadd.f32 0.0, %v1713
        %v1715 = vpop.f32.mrf.mxu0
        %v1716 = vadd.f32 0.0, %v1715
        %1717 = vdwg.mxu0
        %v1718 = vmax.f32 %v1621, %v1667
        %v1719 = vmax.f32 %v1622, %v1671
        %v1720 = vmax.f32 %v1718, %v1669
        %v1721 = vmax.f32 %v1719, %v1673
        %v1722 = vmax.f32 %v1720, %v1710
        %v1723 = vmax.f32 %v1721, %v1714
        %v1724 = vmax.f32 %v1722, %v1712
        %v1725 = vmax.f32 %v1723, %v1716
        %s1726 = scalar_lea.vmem %s464, 80 [#allocation2]
        %v1727 = vld [vmem:[%s1726] sm:$0xf]
        %v1728 = vld [vmem:[%s1726 + $0x4] sm:$0xf]
        %v1731 = vunpack.c.l.b16 %v1727
        %v1732 = vunpack.c.l.b16 %v1728
        %v1733 = vpack.c.b16 %v1732, %v1731
        %1735 = vmatprep.subr.bf16.mxu0 %v672
        %1736 = vmatpush1.bf16.msra.mxu0 %v671
        %1737 = vmatprep.subr.bf16.mxu0 %v668
        %1738 = vmatpush1.bf16.msra.mxu0 %v667
        %1739 = vmatprep.subr.bf16.mxu0 %v664
        %1740 = vmatpush1.bf16.msra.mxu0 %v663
        %1741 = vmatprep.subr.bf16.mxu0 %v660
        %1742 = vmatpush1.bf16.msra.mxu0 %v659
        %1743 = vmatprep.subr.bf16.mxu0 %v656
        %1744 = vmatpush1.bf16.msra.mxu0 %v655
        %1745 = vmatprep.subr.bf16.mxu0 %v652
        %1746 = vmatpush1.bf16.msra.mxu0 %v651
        %1747 = vmatprep.subr.bf16.mxu0 %v648
        %1748 = vmatpush1.bf16.msra.mxu0 %v647
        %1749 = vmatprep.subr.bf16.mxu0 %v644
        %1750 = vmatpush1.bf16.msra.mxu0 %v643
        %1751 = vmatprep.subr.bf16.mxu0 0
        %1752 = vmatpush2.bf16.msra.mxu0 0
        %1753 = vmatprep.subr.bf16.mxu0 0
        %1754 = vmatpush2.bf16.msra.mxu0 0
        %1755 = vmatprep.subr.bf16.mxu0 0
        %1756 = vmatpush2.bf16.msra.mxu0 0
        %1757 = vmatprep.subr.bf16.mxu0 0
        %1758 = vmatpush2.bf16.msra.mxu0 0
        %1759 = vmatprep.subr.bf16.mxu0 0
        %1760 = vmatpush2.bf16.msra.mxu0 0
        %1761 = vmatprep.subr.bf16.mxu0 0
        %1762 = vmatpush2.bf16.msra.mxu0 0
        %1763 = vmatprep.subr.bf16.mxu0 0
        %1764 = vmatpush2.bf16.msra.mxu0 0
        %1765 = vmatprep.subr.bf16.mxu0 0
        %1766 = vmatpush2.bf16.msra.mxu0 0
        %1767 = vmatprep.mubr.bf16.mxu0 0
        %1768 = vmatmul.mubr.bf16.gmra.mxu0 %v1733
        %v1769 = vpop.f32.mrf.mxu0
        %v1770 = vadd.f32 0.0, %v1769
        %v1771 = vpop.f32.mrf.mxu0
        %v1772 = vadd.f32 0.0, %v1771
        %v1773 = vpop.f32.mrf.mxu0
        %v1774 = vadd.f32 0.0, %v1773
        %v1775 = vpop.f32.mrf.mxu0
        %v1776 = vadd.f32 0.0, %v1775
        %1777 = vdwg.mxu0
        %1778 = vmatprep.subr.bf16.mxu0 %v674
        %1779 = vmatpush1.bf16.msra.mxu0 %v673
        %1780 = vmatprep.subr.bf16.mxu0 %v670
        %1781 = vmatpush1.bf16.msra.mxu0 %v669
        %1782 = vmatprep.subr.bf16.mxu0 %v666
        %1783 = vmatpush1.bf16.msra.mxu0 %v665
        %1784 = vmatprep.subr.bf16.mxu0 %v662
        %1785 = vmatpush1.bf16.msra.mxu0 %v661
        %1786 = vmatprep.subr.bf16.mxu0 %v658
        %1787 = vmatpush1.bf16.msra.mxu0 %v657
        %1788 = vmatprep.subr.bf16.mxu0 %v654
        %1789 = vmatpush1.bf16.msra.mxu0 %v653
        %1790 = vmatprep.subr.bf16.mxu0 %v650
        %1791 = vmatpush1.bf16.msra.mxu0 %v649
        %1792 = vmatprep.subr.bf16.mxu0 %v646
        %1793 = vmatpush1.bf16.msra.mxu0 %v645
        %1794 = vmatprep.subr.bf16.mxu0 0
        %1795 = vmatpush2.bf16.msra.mxu0 0
        %1796 = vmatprep.subr.bf16.mxu0 0
        %1797 = vmatpush2.bf16.msra.mxu0 0
        %1798 = vmatprep.subr.bf16.mxu0 0
        %1799 = vmatpush2.bf16.msra.mxu0 0
        %1800 = vmatprep.subr.bf16.mxu0 0
        %1801 = vmatpush2.bf16.msra.mxu0 0
        %1802 = vmatprep.subr.bf16.mxu0 0
        %1803 = vmatpush2.bf16.msra.mxu0 0
        %1804 = vmatprep.subr.bf16.mxu0 0
        %1805 = vmatpush2.bf16.msra.mxu0 0
        %1806 = vmatprep.subr.bf16.mxu0 0
        %1807 = vmatpush2.bf16.msra.mxu0 0
        %1808 = vmatprep.subr.bf16.mxu0 0
        %1809 = vmatpush2.bf16.msra.mxu0 0
        %1810 = vmatprep.mubr.bf16.mxu0 0
        %1811 = vmatmul.mubr.bf16.gmra.mxu0 %v1733
        %v1812 = vpop.f32.mrf.mxu0
        %v1813 = vadd.f32 0.0, %v1812
        %v1814 = vpop.f32.mrf.mxu0
        %v1815 = vadd.f32 0.0, %v1814
        %v1816 = vpop.f32.mrf.mxu0
        %v1817 = vadd.f32 0.0, %v1816
        %v1818 = vpop.f32.mrf.mxu0
        %v1819 = vadd.f32 0.0, %v1818
        %1820 = vdwg.mxu0
        %v1821 = vmax.f32 %v1724, %v1770
        %v1822 = vmax.f32 %v1725, %v1774
        %v1823 = vmax.f32 %v1821, %v1772
        %v1824 = vmax.f32 %v1822, %v1776
        %v1825 = vmax.f32 %v1823, %v1813
        %v1826 = vmax.f32 %v1824, %v1817
        %v1827 = vmax.f32 %v1825, %v1815
        %v1828 = vmax.f32 %v1826, %v1819
        %s1829 = scalar_lea.vmem %s464, 88 [#allocation2]
        %v1830 = vld [vmem:[%s1829] sm:$0xf]
        %v1831 = vld [vmem:[%s1829 + $0x4] sm:$0xf]
        %v1832 = vld [vmem:[%s2] ss:$2 sm:$0xf]
        %v1834 = vlaneseq
        %v1835 = vshrl.u32 %v1834, 7
        %v1836 = vsub.s32 0, %v1835
        %v1837 = vrot.slane %v1832, %v1836
        %v1838 = vlaneseq
        %v1839 = vshrl.u32 %v1838, 7
        %v1840 = vsub.s32 1, %v1839
        %v1841 = vrot.slane %v1832, %v1840
        %v1842 = vlaneseq
        %v1843 = vshrl.u32 %v1842, 7
        %v1844 = vsub.s32 2, %v1843
        %v1845 = vrot.slane %v1832, %v1844
        %v1846 = vlaneseq
        %v1847 = vshrl.u32 %v1846, 7
        %v1848 = vsub.s32 3, %v1847
        %v1849 = vrot.slane %v1832, %v1848
        %v1856 = vunpack.c.l.b16 %v1830
        %v1857 = vunpack.c.l.b16 %v1831
        %v1858 = vpack.c.b16 %v1857, %v1856
        %1860 = vmatprep.subr.bf16.mxu0 %v672
        %1861 = vmatpush1.bf16.msra.mxu0 %v671
        %1862 = vmatprep.subr.bf16.mxu0 %v668
        %1863 = vmatpush1.bf16.msra.mxu0 %v667
        %1864 = vmatprep.subr.bf16.mxu0 %v664
        %1865 = vmatpush1.bf16.msra.mxu0 %v663
        %1866 = vmatprep.subr.bf16.mxu0 %v660
        %1867 = vmatpush1.bf16.msra.mxu0 %v659
        %1868 = vmatprep.subr.bf16.mxu0 %v656
        %1869 = vmatpush1.bf16.msra.mxu0 %v655
        %1870 = vmatprep.subr.bf16.mxu0 %v652
        %1871 = vmatpush1.bf16.msra.mxu0 %v651
        %1872 = vmatprep.subr.bf16.mxu0 %v648
        %1873 = vmatpush1.bf16.msra.mxu0 %v647
        %1874 = vmatprep.subr.bf16.mxu0 %v644
        %1875 = vmatpush1.bf16.msra.mxu0 %v643
        %1876 = vmatprep.subr.bf16.mxu0 0
        %1877 = vmatpush2.bf16.msra.mxu0 0
        %1878 = vmatprep.subr.bf16.mxu0 0
        %1879 = vmatpush2.bf16.msra.mxu0 0
        %1880 = vmatprep.subr.bf16.mxu0 0
        %1881 = vmatpush2.bf16.msra.mxu0 0
        %1882 = vmatprep.subr.bf16.mxu0 0
        %1883 = vmatpush2.bf16.msra.mxu0 0
        %1884 = vmatprep.subr.bf16.mxu0 0
        %1885 = vmatpush2.bf16.msra.mxu0 0
        %1886 = vmatprep.subr.bf16.mxu0 0
        %1887 = vmatpush2.bf16.msra.mxu0 0
        %1888 = vmatprep.subr.bf16.mxu0 0
        %1889 = vmatpush2.bf16.msra.mxu0 0
        %1890 = vmatprep.subr.bf16.mxu0 0
        %1891 = vmatpush2.bf16.msra.mxu0 0
        %1892 = vmatprep.mubr.bf16.mxu0 0
        %1893 = vmatmul.mubr.bf16.gmra.mxu0 %v1858
        %v1894 = vpop.f32.mrf.mxu0
        %v1895 = vadd.f32 %v1837, %v1894
        %v1896 = vpop.f32.mrf.mxu0
        %v1897 = vadd.f32 %v1841, %v1896
        %v1898 = vpop.f32.mrf.mxu0
        %v1899 = vadd.f32 %v1837, %v1898
        %v1900 = vpop.f32.mrf.mxu0
        %v1901 = vadd.f32 %v1841, %v1900
        %1902 = vdwg.mxu0
        %1903 = vmatprep.subr.bf16.mxu0 %v674
        %1904 = vmatpush1.bf16.msra.mxu0 %v673
        %1905 = vmatprep.subr.bf16.mxu0 %v670
        %1906 = vmatpush1.bf16.msra.mxu0 %v669
        %1907 = vmatprep.subr.bf16.mxu0 %v666
        %1908 = vmatpush1.bf16.msra.mxu0 %v665
        %1909 = vmatprep.subr.bf16.mxu0 %v662
        %1910 = vmatpush1.bf16.msra.mxu0 %v661
        %1911 = vmatprep.subr.bf16.mxu0 %v658
        %1912 = vmatpush1.bf16.msra.mxu0 %v657
        %1913 = vmatprep.subr.bf16.mxu0 %v654
        %1914 = vmatpush1.bf16.msra.mxu0 %v653
        %1915 = vmatprep.subr.bf16.mxu0 %v650
        %1916 = vmatpush1.bf16.msra.mxu0 %v649
        %1917 = vmatprep.subr.bf16.mxu0 %v646
        %1918 = vmatpush1.bf16.msra.mxu0 %v645
        %1919 = vmatprep.subr.bf16.mxu0 0
        %1920 = vmatpush2.bf16.msra.mxu0 0
        %1921 = vmatprep.subr.bf16.mxu0 0
        %1922 = vmatpush2.bf16.msra.mxu0 0
        %1923 = vmatprep.subr.bf16.mxu0 0
        %1924 = vmatpush2.bf16.msra.mxu0 0
        %1925 = vmatprep.subr.bf16.mxu0 0
        %1926 = vmatpush2.bf16.msra.mxu0 0
        %1927 = vmatprep.subr.bf16.mxu0 0
        %1928 = vmatpush2.bf16.msra.mxu0 0
        %1929 = vmatprep.subr.bf16.mxu0 0
        %1930 = vmatpush2.bf16.msra.mxu0 0
        %1931 = vmatprep.subr.bf16.mxu0 0
        %1932 = vmatpush2.bf16.msra.mxu0 0
        %1933 = vmatprep.subr.bf16.mxu0 0
        %1934 = vmatpush2.bf16.msra.mxu0 0
        %1935 = vmatprep.mubr.bf16.mxu0 0
        %1936 = vmatmul.mubr.bf16.gmra.mxu0 %v1858
        %v1937 = vpop.f32.mrf.mxu0
        %v1938 = vadd.f32 %v1845, %v1937
        %v1939 = vpop.f32.mrf.mxu0
        %v1940 = vadd.f32 %v1849, %v1939
        %v1941 = vpop.f32.mrf.mxu0
        %v1942 = vadd.f32 %v1845, %v1941
        %v1943 = vpop.f32.mrf.mxu0
        %v1944 = vadd.f32 %v1849, %v1943
        %1945 = vdwg.mxu0
        %v1946 = vmax.f32 %v1827, %v1895
        %v1947 = vmax.f32 %v1828, %v1899
        %v1948 = vmax.f32 %v1946, %v1897
        %v1949 = vmax.f32 %v1947, %v1901
        %v1950 = vmax.f32 %v1948, %v1938
        %v1951 = vmax.f32 %v1949, %v1942
        %v1952 = vmax.f32 %v1950, %v1940
        %v1953 = vmax.f32 %v1951, %v1944
        %s1954 = scalar_lea.vmem %s464, 96 [#allocation2]
        %v1955 = vld [vmem:[%s1954] sm:$0xf]
        %v1956 = vld [vmem:[%s1954 + $0x4] sm:$0xf]
        %s1957 = scalar_lea.vmem %s2, 1
        %v1958 = vld [vmem:[%s1957] ss:$2 sm:$0xf]
        %v1960 = vlaneseq
        %v1961 = vshrl.u32 %v1960, 7
        %v1962 = vsub.s32 0, %v1961
        %v1963 = vrot.slane %v1958, %v1962
        %v1964 = vlaneseq
        %v1965 = vshrl.u32 %v1964, 7
        %v1966 = vsub.s32 1, %v1965
        %v1967 = vrot.slane %v1958, %v1966
        %v1968 = vlaneseq
        %v1969 = vshrl.u32 %v1968, 7
        %v1970 = vsub.s32 2, %v1969
        %v1971 = vrot.slane %v1958, %v1970
        %v1972 = vlaneseq
        %v1973 = vshrl.u32 %v1972, 7
        %v1974 = vsub.s32 3, %v1973
        %v1975 = vrot.slane %v1958, %v1974
        %v1982 = vunpack.c.l.b16 %v1955
        %v1983 = vunpack.c.l.b16 %v1956
        %v1984 = vpack.c.b16 %v1983, %v1982
        %1986 = vmatprep.subr.bf16.mxu0 %v672
        %1987 = vmatpush1.bf16.msra.mxu0 %v671
        %1988 = vmatprep.subr.bf16.mxu0 %v668
        %1989 = vmatpush1.bf16.msra.mxu0 %v667
        %1990 = vmatprep.subr.bf16.mxu0 %v664
        %1991 = vmatpush1.bf16.msra.mxu0 %v663
        %1992 = vmatprep.subr.bf16.mxu0 %v660
        %1993 = vmatpush1.bf16.msra.mxu0 %v659
        %1994 = vmatprep.subr.bf16.mxu0 %v656
        %1995 = vmatpush1.bf16.msra.mxu0 %v655
        %1996 = vmatprep.subr.bf16.mxu0 %v652
        %1997 = vmatpush1.bf16.msra.mxu0 %v651
        %1998 = vmatprep.subr.bf16.mxu0 %v648
        %1999 = vmatpush1.bf16.msra.mxu0 %v647
        %2000 = vmatprep.subr.bf16.mxu0 %v644
        %2001 = vmatpush1.bf16.msra.mxu0 %v643
        %2002 = vmatprep.subr.bf16.mxu0 0
        %2003 = vmatpush2.bf16.msra.mxu0 0
        %2004 = vmatprep.subr.bf16.mxu0 0
        %2005 = vmatpush2.bf16.msra.mxu0 0
        %2006 = vmatprep.subr.bf16.mxu0 0
        %2007 = vmatpush2.bf16.msra.mxu0 0
        %2008 = vmatprep.subr.bf16.mxu0 0
        %2009 = vmatpush2.bf16.msra.mxu0 0
        %2010 = vmatprep.subr.bf16.mxu0 0
        %2011 = vmatpush2.bf16.msra.mxu0 0
        %2012 = vmatprep.subr.bf16.mxu0 0
        %2013 = vmatpush2.bf16.msra.mxu0 0
        %2014 = vmatprep.subr.bf16.mxu0 0
        %2015 = vmatpush2.bf16.msra.mxu0 0
        %2016 = vmatprep.subr.bf16.mxu0 0
        %2017 = vmatpush2.bf16.msra.mxu0 0
        %2018 = vmatprep.mubr.bf16.mxu0 0
        %2019 = vmatmul.mubr.bf16.gmra.mxu0 %v1984
        %v2020 = vpop.f32.mrf.mxu0
        %v2021 = vadd.f32 %v1963, %v2020
        %v2022 = vpop.f32.mrf.mxu0
        %v2023 = vadd.f32 %v1967, %v2022
        %v2024 = vpop.f32.mrf.mxu0
        %v2025 = vadd.f32 %v1963, %v2024
        %v2026 = vpop.f32.mrf.mxu0
        %v2027 = vadd.f32 %v1967, %v2026
        %2028 = vdwg.mxu0
        %2029 = vmatprep.subr.bf16.mxu0 %v674
        %2030 = vmatpush1.bf16.msra.mxu0 %v673
        %2031 = vmatprep.subr.bf16.mxu0 %v670
        %2032 = vmatpush1.bf16.msra.mxu0 %v669
        %2033 = vmatprep.subr.bf16.mxu0 %v666
        %2034 = vmatpush1.bf16.msra.mxu0 %v665
        %2035 = vmatprep.subr.bf16.mxu0 %v662
        %2036 = vmatpush1.bf16.msra.mxu0 %v661
        %2037 = vmatprep.subr.bf16.mxu0 %v658
        %2038 = vmatpush1.bf16.msra.mxu0 %v657
        %2039 = vmatprep.subr.bf16.mxu0 %v654
        %2040 = vmatpush1.bf16.msra.mxu0 %v653
        %2041 = vmatprep.subr.bf16.mxu0 %v650
        %2042 = vmatpush1.bf16.msra.mxu0 %v649
        %2043 = vmatprep.subr.bf16.mxu0 %v646
        %2044 = vmatpush1.bf16.msra.mxu0 %v645
        %2045 = vmatprep.subr.bf16.mxu0 0
        %2046 = vmatpush2.bf16.msra.mxu0 0
        %2047 = vmatprep.subr.bf16.mxu0 0
        %2048 = vmatpush2.bf16.msra.mxu0 0
        %2049 = vmatprep.subr.bf16.mxu0 0
        %2050 = vmatpush2.bf16.msra.mxu0 0
        %2051 = vmatprep.subr.bf16.mxu0 0
        %2052 = vmatpush2.bf16.msra.mxu0 0
        %2053 = vmatprep.subr.bf16.mxu0 0
        %2054 = vmatpush2.bf16.msra.mxu0 0
        %2055 = vmatprep.subr.bf16.mxu0 0
        %2056 = vmatpush2.bf16.msra.mxu0 0
        %2057 = vmatprep.subr.bf16.mxu0 0
        %2058 = vmatpush2.bf16.msra.mxu0 0
        %2059 = vmatprep.subr.bf16.mxu0 0
        %2060 = vmatpush2.bf16.msra.mxu0 0
        %2061 = vmatprep.mubr.bf16.mxu0 0
        %2062 = vmatmul.mubr.bf16.gmra.mxu0 %v1984
        %v2063 = vpop.f32.mrf.mxu0
        %v2064 = vadd.f32 %v1971, %v2063
        %v2065 = vpop.f32.mrf.mxu0
        %v2066 = vadd.f32 %v1975, %v2065
        %v2067 = vpop.f32.mrf.mxu0
        %v2068 = vadd.f32 %v1971, %v2067
        %v2069 = vpop.f32.mrf.mxu0
        %v2070 = vadd.f32 %v1975, %v2069
        %2071 = vdwg.mxu0
        %v2072 = vmax.f32 %v1952, %v2021
        %v2073 = vmax.f32 %v1953, %v2025
        %v2074 = vmax.f32 %v2072, %v2023
        %v2075 = vmax.f32 %v2073, %v2027
        %v2076 = vmax.f32 %v2074, %v2064
        %v2077 = vmax.f32 %v2075, %v2068
        %v2078 = vmax.f32 %v2076, %v2066
        %v2079 = vmax.f32 %v2077, %v2070
        %v2080 = vld [vmem:[%s3] sm:$0x1]
        %v2082 = vlaneseq
        %v2083 = vshrl.u32 %v2082, 7
        %v2084 = vsub.s32 0, %v2083
        %v2085 = vrot.slane %v2080, %v2084
        %v2087 = vadd.f32 %v2078, %v2085
        %v2088 = vadd.f32 %v2079, %v2085
        %v2089 = vmax.f32 %v2087, 0.0
        %v2090 = vmax.f32 %v2088, 0.0
        %v2091 = vpack.c.bf16 %v2090, %v2089
        %v2092 = vld [vmem:[%s4] sm:$0xff]
        %v2093 = vld [vmem:[%s4 + $0x8] sm:$0xff]
        %v2094 = vld [vmem:[%s4 + $0x10] sm:$0xff]
        %v2095 = vld [vmem:[%s4 + $0x18] sm:$0xff]
        %v2096 = vld [vmem:[%s4 + $0x20] sm:$0xff]
        %v2097 = vld [vmem:[%s4 + $0x28] sm:$0xff]
        %v2098 = vld [vmem:[%s4 + $0x30] sm:$0xff]
        %v2099 = vld [vmem:[%s4 + $0x38] sm:$0xff]
        %v2100 = vld [vmem:[%s4 + $0x40] sm:$0xff]
        %v2101 = vld [vmem:[%s4 + $0x48] sm:$0xff]
        %v2102 = vld [vmem:[%s4 + $0x50] sm:$0xff]
        %v2103 = vld [vmem:[%s4 + $0x58] sm:$0xff]
        %v2104 = vld [vmem:[%s4 + $0x60] sm:$0xff]
        %v2105 = vld [vmem:[%s4 + $0x68] sm:$0xff]
        %v2106 = vld [vmem:[%s4 + $0x70] sm:$0xff]
        %v2107 = vld [vmem:[%s4 + $0x78] sm:$0xff]
        %v2108 = vld [vmem:[%s5] sm:$0x3]
        %v2110 = vlaneseq
        %v2111 = vshrl.u32 %v2110, 7
        %v2112 = vsub.s32 0, %v2111
        %v2113 = vrot.slane %v2108, %v2112
        %v2114 = vlaneseq
        %v2115 = vshrl.u32 %v2114, 7
        %v2116 = vsub.s32 1, %v2115
        %v2117 = vrot.slane %v2108, %v2116
        %v2136 = vunpack.c.l.b16 %v2092
        %v2137 = vunpack.c.h.b16 %v2092
        %v2138 = vunpack.c.l.b16 %v2093
        %v2139 = vunpack.c.h.b16 %v2093
        %v2140 = vunpack.c.l.b16 %v2094
        %v2141 = vunpack.c.h.b16 %v2094
        %v2142 = vunpack.c.l.b16 %v2095
        %v2143 = vunpack.c.h.b16 %v2095
        %v2144 = vunpack.c.l.b16 %v2096
        %v2145 = vunpack.c.h.b16 %v2096
        %v2146 = vunpack.c.l.b16 %v2097
        %v2147 = vunpack.c.h.b16 %v2097
        %v2148 = vunpack.c.l.b16 %v2098
        %v2149 = vunpack.c.h.b16 %v2098
        %v2150 = vunpack.c.l.b16 %v2099
        %v2151 = vunpack.c.h.b16 %v2099
        %v2152 = vunpack.c.l.b16 %v2100
        %v2153 = vunpack.c.h.b16 %v2100
        %v2154 = vunpack.c.l.b16 %v2101
        %v2155 = vunpack.c.h.b16 %v2101
        %v2156 = vunpack.c.l.b16 %v2102
        %v2157 = vunpack.c.h.b16 %v2102
        %v2158 = vunpack.c.l.b16 %v2103
        %v2159 = vunpack.c.h.b16 %v2103
        %v2160 = vunpack.c.l.b16 %v2104
        %v2161 = vunpack.c.h.b16 %v2104
        %v2162 = vunpack.c.l.b16 %v2105
        %v2163 = vunpack.c.h.b16 %v2105
        %v2164 = vunpack.c.l.b16 %v2106
        %v2165 = vunpack.c.h.b16 %v2106
        %v2166 = vunpack.c.l.b16 %v2107
        %v2167 = vunpack.c.h.b16 %v2107
        %v2168 = vpack.c.b16 %v2138, %v2136
        %v2169 = vpack.c.b16 %v2139, %v2137
        %v2170 = vpack.c.b16 %v2142, %v2140
        %v2171 = vpack.c.b16 %v2143, %v2141
        %v2172 = vpack.c.b16 %v2146, %v2144
        %v2173 = vpack.c.b16 %v2147, %v2145
        %v2174 = vpack.c.b16 %v2150, %v2148
        %v2175 = vpack.c.b16 %v2151, %v2149
        %v2176 = vpack.c.b16 %v2154, %v2152
        %v2177 = vpack.c.b16 %v2155, %v2153
        %v2178 = vpack.c.b16 %v2158, %v2156
        %v2179 = vpack.c.b16 %v2159, %v2157
        %v2180 = vpack.c.b16 %v2162, %v2160
        %v2181 = vpack.c.b16 %v2163, %v2161
        %v2182 = vpack.c.b16 %v2166, %v2164
        %v2183 = vpack.c.b16 %v2167, %v2165
        %2200 = vmatprep.subr.bf16.mxu0 %v2183
        %2201 = vmatpush1.bf16.msra.mxu0 %v2182
        %2202 = vmatprep.subr.bf16.mxu0 %v2181
        %2203 = vmatpush1.bf16.msra.mxu0 %v2180
        %2204 = vmatprep.subr.bf16.mxu0 %v2179
        %2205 = vmatpush1.bf16.msra.mxu0 %v2178
        %2206 = vmatprep.subr.bf16.mxu0 %v2177
        %2207 = vmatpush1.bf16.msra.mxu0 %v2176
        %2208 = vmatprep.subr.bf16.mxu0 %v2175
        %2209 = vmatpush1.bf16.msra.mxu0 %v2174
        %2210 = vmatprep.subr.bf16.mxu0 %v2173
        %2211 = vmatpush1.bf16.msra.mxu0 %v2172
        %2212 = vmatprep.subr.bf16.mxu0 %v2171
        %2213 = vmatpush1.bf16.msra.mxu0 %v2170
        %2214 = vmatprep.subr.bf16.mxu0 %v2169
        %2215 = vmatpush1.bf16.msra.mxu0 %v2168
        %2216 = vmatprep.subr.bf16.mxu0 0
        %2217 = vmatpush2.bf16.msra.mxu0 0
        %2218 = vmatprep.subr.bf16.mxu0 0
        %2219 = vmatpush2.bf16.msra.mxu0 0
        %2220 = vmatprep.subr.bf16.mxu0 0
        %2221 = vmatpush2.bf16.msra.mxu0 0
        %2222 = vmatprep.subr.bf16.mxu0 0
        %2223 = vmatpush2.bf16.msra.mxu0 0
        %2224 = vmatprep.subr.bf16.mxu0 0
        %2225 = vmatpush2.bf16.msra.mxu0 0
        %2226 = vmatprep.subr.bf16.mxu0 0
        %2227 = vmatpush2.bf16.msra.mxu0 0
        %2228 = vmatprep.subr.bf16.mxu0 0
        %2229 = vmatpush2.bf16.msra.mxu0 0
        %2230 = vmatprep.subr.bf16.mxu0 0
        %2231 = vmatpush2.bf16.msra.mxu0 0
        %2232 = vmatprep.mubr.bf16.mxu0 0
        %2233 = vmatmul.mubr.bf16.gmra.mxu0 %v2091
        %v2234 = vpop.f32.mrf.mxu0
        %v2235 = vadd.f32 %v2113, %v2234
        %v2236 = vpop.f32.mrf.mxu0
        %v2237 = vadd.f32 %v2117, %v2236
        %v2238 = vpop.f32.mrf.mxu0
        %v2239 = vadd.f32 %v2113, %v2238
        %v2240 = vpop.f32.mrf.mxu0
        %v2241 = vadd.f32 %v2117, %v2240
        %2242 = vdwg.mxu0
        %v2243 = vmax.f32 %v2235, 0.0
        %v2244 = vmax.f32 %v2239, 0.0
        %v2245 = vsub.f32 0.0, %v2237
        %v2246 = vsub.f32 0.0, %v2241
        %v2247 = vmul.f32 %v2245, 1.442695
        %v2248 = vpow.pop %v2247
        %v2249 = vmul.f32 %v2246, 1.442695
        %v2250 = vpow.pop %v2249
        %v2251 = vadd.f32 %v2248, 1.0
        %v2252 = vadd.f32 %v2250, 1.0
        %v2253 = vrcp.pop %v2251
        %v2254 = vmul.f32 1.0, %v2253
        %v2255 = vrcp.pop %v2252
        %v2256 = vmul.f32 1.0, %v2255
        %v2257 = vsub.f32 %v2089, %v2243
        %v2258 = vsub.f32 %v2090, %v2244
        %v2259 = vmul.f32 %v2254, %v2257
        %v2260 = vmul.f32 %v2256, %v2258
        %v2261 = vadd.f32 %v2243, %v2259
        %v2262 = vadd.f32 %v2244, %v2260
        %v2263 = vpack.c.bf16 %v2262, %v2261
        %v2264 = vld [vmem:[%s6] sm:$0xff]
        %v2265 = vld [vmem:[%s6 + $0x8] sm:$0xff]
        %v2266 = vld [vmem:[%s6 + $0x10] sm:$0xff]
        %v2267 = vld [vmem:[%s6 + $0x18] sm:$0xff]
        %v2268 = vld [vmem:[%s6 + $0x20] sm:$0xff]
        %v2269 = vld [vmem:[%s6 + $0x28] sm:$0xff]
        %v2270 = vld [vmem:[%s6 + $0x30] sm:$0xff]
        %v2271 = vld [vmem:[%s6 + $0x38] sm:$0xff]
        %v2272 = vld [vmem:[%s6 + $0x40] sm:$0xff]
        %v2273 = vld [vmem:[%s6 + $0x48] sm:$0xff]
        %v2274 = vld [vmem:[%s6 + $0x50] sm:$0xff]
        %v2275 = vld [vmem:[%s6 + $0x58] sm:$0xff]
        %v2276 = vld [vmem:[%s6 + $0x60] sm:$0xff]
        %v2277 = vld [vmem:[%s6 + $0x68] sm:$0xff]
        %v2278 = vld [vmem:[%s6 + $0x70] sm:$0xff]
        %v2279 = vld [vmem:[%s6 + $0x78] sm:$0xff]
        %v2280 = vld [vmem:[%s7] sm:$0x3]
        %v2282 = vlaneseq
        %v2283 = vshrl.u32 %v2282, 7
        %v2284 = vsub.s32 0, %v2283
        %v2285 = vrot.slane %v2280, %v2284
        %v2286 = vlaneseq
        %v2287 = vshrl.u32 %v2286, 7
        %v2288 = vsub.s32 1, %v2287
        %v2289 = vrot.slane %v2280, %v2288
        %v2308 = vunpack.c.l.b16 %v2264
        %v2309 = vunpack.c.h.b16 %v2264
        %v2310 = vunpack.c.l.b16 %v2265
        %v2311 = vunpack.c.h.b16 %v2265
        %v2312 = vunpack.c.l.b16 %v2266
        %v2313 = vunpack.c.h.b16 %v2266
        %v2314 = vunpack.c.l.b16 %v2267
        %v2315 = vunpack.c.h.b16 %v2267
        %v2316 = vunpack.c.l.b16 %v2268
        %v2317 = vunpack.c.h.b16 %v2268
        %v2318 = vunpack.c.l.b16 %v2269
        %v2319 = vunpack.c.h.b16 %v2269
        %v2320 = vunpack.c.l.b16 %v2270
        %v2321 = vunpack.c.h.b16 %v2270
        %v2322 = vunpack.c.l.b16 %v2271
        %v2323 = vunpack.c.h.b16 %v2271
        %v2324 = vunpack.c.l.b16 %v2272
        %v2325 = vunpack.c.h.b16 %v2272
        %v2326 = vunpack.c.l.b16 %v2273
        %v2327 = vunpack.c.h.b16 %v2273
        %v2328 = vunpack.c.l.b16 %v2274
        %v2329 = vunpack.c.h.b16 %v2274
        %v2330 = vunpack.c.l.b16 %v2275
        %v2331 = vunpack.c.h.b16 %v2275
        %v2332 = vunpack.c.l.b16 %v2276
        %v2333 = vunpack.c.h.b16 %v2276
        %v2334 = vunpack.c.l.b16 %v2277
        %v2335 = vunpack.c.h.b16 %v2277
        %v2336 = vunpack.c.l.b16 %v2278
        %v2337 = vunpack.c.h.b16 %v2278
        %v2338 = vunpack.c.l.b16 %v2279
        %v2339 = vunpack.c.h.b16 %v2279
        %v2340 = vpack.c.b16 %v2310, %v2308
        %v2341 = vpack.c.b16 %v2311, %v2309
        %v2342 = vpack.c.b16 %v2314, %v2312
        %v2343 = vpack.c.b16 %v2315, %v2313
        %v2344 = vpack.c.b16 %v2318, %v2316
        %v2345 = vpack.c.b16 %v2319, %v2317
        %v2346 = vpack.c.b16 %v2322, %v2320
        %v2347 = vpack.c.b16 %v2323, %v2321
        %v2348 = vpack.c.b16 %v2326, %v2324
        %v2349 = vpack.c.b16 %v2327, %v2325
        %v2350 = vpack.c.b16 %v2330, %v2328
        %v2351 = vpack.c.b16 %v2331, %v2329
        %v2352 = vpack.c.b16 %v2334, %v2332
        %v2353 = vpack.c.b16 %v2335, %v2333
        %v2354 = vpack.c.b16 %v2338, %v2336
        %v2355 = vpack.c.b16 %v2339, %v2337
        %2372 = vmatprep.subr.bf16.mxu0 %v2355
        %2373 = vmatpush1.bf16.msra.mxu0 %v2354
        %2374 = vmatprep.subr.bf16.mxu0 %v2353
        %2375 = vmatpush1.bf16.msra.mxu0 %v2352
        %2376 = vmatprep.subr.bf16.mxu0 %v2351
        %2377 = vmatpush1.bf16.msra.mxu0 %v2350
        %2378 = vmatprep.subr.bf16.mxu0 %v2349
        %2379 = vmatpush1.bf16.msra.mxu0 %v2348
        %2380 = vmatprep.subr.bf16.mxu0 %v2347
        %2381 = vmatpush1.bf16.msra.mxu0 %v2346
        %2382 = vmatprep.subr.bf16.mxu0 %v2345
        %2383 = vmatpush1.bf16.msra.mxu0 %v2344
        %2384 = vmatprep.subr.bf16.mxu0 %v2343
        %2385 = vmatpush1.bf16.msra.mxu0 %v2342
        %2386 = vmatprep.subr.bf16.mxu0 %v2341
        %2387 = vmatpush1.bf16.msra.mxu0 %v2340
        %2388 = vmatprep.subr.bf16.mxu0 0
        %2389 = vmatpush2.bf16.msra.mxu0 0
        %2390 = vmatprep.subr.bf16.mxu0 0
        %2391 = vmatpush2.bf16.msra.mxu0 0
        %2392 = vmatprep.subr.bf16.mxu0 0
        %2393 = vmatpush2.bf16.msra.mxu0 0
        %2394 = vmatprep.subr.bf16.mxu0 0
        %2395 = vmatpush2.bf16.msra.mxu0 0
        %2396 = vmatprep.subr.bf16.mxu0 0
        %2397 = vmatpush2.bf16.msra.mxu0 0
        %2398 = vmatprep.subr.bf16.mxu0 0
        %2399 = vmatpush2.bf16.msra.mxu0 0
        %2400 = vmatprep.subr.bf16.mxu0 0
        %2401 = vmatpush2.bf16.msra.mxu0 0
        %2402 = vmatprep.subr.bf16.mxu0 0
        %2403 = vmatpush2.bf16.msra.mxu0 0
        %2404 = vmatprep.mubr.bf16.mxu0 0
        %2405 = vmatmul.mubr.bf16.gmra.mxu0 %v2263
        %v2406 = vpop.f32.mrf.mxu0
        %v2407 = vadd.f32 %v2285, %v2406
        %v2408 = vpop.f32.mrf.mxu0
        %v2409 = vadd.f32 %v2289, %v2408
        %v2410 = vpop.f32.mrf.mxu0
        %v2411 = vadd.f32 %v2285, %v2410
        %v2412 = vpop.f32.mrf.mxu0
        %v2413 = vadd.f32 %v2289, %v2412
        %2414 = vdwg.mxu0
        %v2415 = vmax.f32 %v2407, 0.0
        %v2416 = vmax.f32 %v2411, 0.0
        %v2417 = vsub.f32 0.0, %v2409
        %v2418 = vsub.f32 0.0, %v2413
        %v2419 = vmul.f32 %v2417, 1.442695
        %v2420 = vpow.pop %v2419
        %v2421 = vmul.f32 %v2418, 1.442695
        %v2422 = vpow.pop %v2421
        %v2423 = vadd.f32 %v2420, 1.0
        %v2424 = vadd.f32 %v2422, 1.0
        %v2425 = vrcp.pop %v2423
        %v2426 = vmul.f32 1.0, %v2425
        %v2427 = vrcp.pop %v2424
        %v2428 = vmul.f32 1.0, %v2427
        %v2429 = vsub.f32 %v2261, %v2415
        %v2430 = vsub.f32 %v2262, %v2416
        %v2431 = vmul.f32 %v2426, %v2429
        %v2432 = vmul.f32 %v2428, %v2430
        %v2433 = vadd.f32 %v2415, %v2431
        %v2434 = vadd.f32 %v2416, %v2432
        %v2435 = vpack.c.bf16 %v2434, %v2433
        %v2436 = vld [vmem:[%s8] sm:$0xf]
        %v2437 = vld [vmem:[%s8 + $0x4] sm:$0xf]
        %v2438 = vld [vmem:[%s8 + $0x8] sm:$0xf]
        %v2439 = vld [vmem:[%s8 + $0xc] sm:$0xf]
        %v2440 = vld [vmem:[%s8 + $0x10] sm:$0xf]
        %v2441 = vld [vmem:[%s8 + $0x14] sm:$0xf]
        %v2442 = vld [vmem:[%s8 + $0x18] sm:$0xf]
        %v2443 = vld [vmem:[%s8 + $0x1c] sm:$0xf]
        %v2444 = vld [vmem:[%s8 + $0x20] sm:$0xf]
        %v2445 = vld [vmem:[%s8 + $0x24] sm:$0xf]
        %v2446 = vld [vmem:[%s8 + $0x28] sm:$0xf]
        %v2447 = vld [vmem:[%s8 + $0x2c] sm:$0xf]
        %v2448 = vld [vmem:[%s8 + $0x30] sm:$0xf]
        %v2449 = vld [vmem:[%s8 + $0x34] sm:$0xf]
        %v2450 = vld [vmem:[%s8 + $0x38] sm:$0xf]
        %v2451 = vld [vmem:[%s8 + $0x3c] sm:$0xf]
        %v2452 = vld [vmem:[%s9] sm:$0x1]
        %v2454 = vlaneseq
        %v2455 = vshrl.u32 %v2454, 7
        %v2456 = vsub.s32 0, %v2455
        %v2457 = vrot.slane %v2452, %v2456
        %v2475 = vunpack.c.l.b16 %v2436
        %v2476 = vunpack.c.l.b16 %v2437
        %v2477 = vunpack.c.l.b16 %v2438
        %v2478 = vunpack.c.l.b16 %v2439
        %v2479 = vunpack.c.l.b16 %v2440
        %v2480 = vunpack.c.l.b16 %v2441
        %v2481 = vunpack.c.l.b16 %v2442
        %v2482 = vunpack.c.l.b16 %v2443
        %v2483 = vunpack.c.l.b16 %v2444
        %v2484 = vunpack.c.l.b16 %v2445
        %v2485 = vunpack.c.l.b16 %v2446
        %v2486 = vunpack.c.l.b16 %v2447
        %v2487 = vunpack.c.l.b16 %v2448
        %v2488 = vunpack.c.l.b16 %v2449
        %v2489 = vunpack.c.l.b16 %v2450
        %v2490 = vunpack.c.l.b16 %v2451
        %v2491 = vpack.c.b16 %v2476, %v2475
        %v2492 = vpack.c.b16 %v2478, %v2477
        %v2493 = vpack.c.b16 %v2480, %v2479
        %v2494 = vpack.c.b16 %v2482, %v2481
        %v2495 = vpack.c.b16 %v2484, %v2483
        %v2496 = vpack.c.b16 %v2486, %v2485
        %v2497 = vpack.c.b16 %v2488, %v2487
        %v2498 = vpack.c.b16 %v2490, %v2489
        %2507 = vmatprep.subr.bf16.mxu0 0
        %2508 = vmatpush1.bf16.msra.mxu0 %v2498
        %2509 = vmatprep.subr.bf16.mxu0 0
        %2510 = vmatpush1.bf16.msra.mxu0 %v2497
        %2511 = vmatprep.subr.bf16.mxu0 0
        %2512 = vmatpush1.bf16.msra.mxu0 %v2496
        %2513 = vmatprep.subr.bf16.mxu0 0
        %2514 = vmatpush1.bf16.msra.mxu0 %v2495
        %2515 = vmatprep.subr.bf16.mxu0 0
        %2516 = vmatpush1.bf16.msra.mxu0 %v2494
        %2517 = vmatprep.subr.bf16.mxu0 0
        %2518 = vmatpush1.bf16.msra.mxu0 %v2493
        %2519 = vmatprep.subr.bf16.mxu0 0
        %2520 = vmatpush1.bf16.msra.mxu0 %v2492
        %2521 = vmatprep.subr.bf16.mxu0 0
        %2522 = vmatpush1.bf16.msra.mxu0 %v2491
        %2523 = vmatprep.subr.bf16.mxu0 0
        %2524 = vmatpush2.bf16.msra.mxu0 0
        %2525 = vmatprep.subr.bf16.mxu0 0
        %2526 = vmatpush2.bf16.msra.mxu0 0
        %2527 = vmatprep.subr.bf16.mxu0 0
        %2528 = vmatpush2.bf16.msra.mxu0 0
        %2529 = vmatprep.subr.bf16.mxu0 0
        %2530 = vmatpush2.bf16.msra.mxu0 0
        %2531 = vmatprep.subr.bf16.mxu0 0
        %2532 = vmatpush2.bf16.msra.mxu0 0
        %2533 = vmatprep.subr.bf16.mxu0 0
        %2534 = vmatpush2.bf16.msra.mxu0 0
        %2535 = vmatprep.subr.bf16.mxu0 0
        %2536 = vmatpush2.bf16.msra.mxu0 0
        %2537 = vmatprep.subr.bf16.mxu0 0
        %2538 = vmatpush2.bf16.msra.mxu0 0
        %2539 = vmatprep.mubr.bf16.mxu0 0
        %2540 = vmatmul.mubr.bf16.gmra.mxu0 %v2435
        %v2541 = vpop.f32.mrf.mxu0
        %v2542 = vadd.f32 %v2457, %v2541
        %v2543 = vpop.f32.mrf.mxu0
        %v2544 = vpop.f32.mrf.mxu0
        %v2545 = vadd.f32 %v2457, %v2544
        %v2546 = vpop.f32.mrf.mxu0
        %2547 = vdwg.mxu0
        %2548 = vst [vmem:[%s504] sm:$0xff] %v2542
        %2549 = vst [vmem:[%s504 + $0x8] sm:$0xff] %v2545
        %s2550 = smul.u32 2, %s21
        %p2551 = scmp.lt.s32.totalorder %s2550, 3
        %s2552 = scalar_select %p2551, %s2550, 3
        %s2553 = smul.addr %s2552, 8
        %s2554 = scalar_lea.vmem %s10, %s2553
        // Predicated region
        $region102: #{custom_elmo_character_encoder.1} parent=96 // pred_check
          %p2555 = pneg %p254
        $region103: #{custom_elmo_character_encoder.1} parent=96 // pred_check_branch
          %2557 = sbr.rel (%p2555) target = $region105
        $region104: #{custom_elmo_character_encoder.1} parent=96 // pred_region
          %s2558 = smul.u32 2, %s21
        $region105: #{custom_elmo_character_encoder.1} parent=96 // pred_fallthru
          _
      $region97: #{custom_elmo_character_encoder.1} parent=5 // pred_fallthru
        _
      %p2559 = scmp.le.s32.totalorder 2, %s16
      // Predicated region
      $region106: #{custom_elmo_character_encoder.1} parent=5 // pred_check
        %p2560 = pneg %p2559
      $region107: #{custom_elmo_character_encoder.1} parent=5 // pred_check_branch
        %2562 = sbr.rel (%p2560) target = $region109
      $region108: #{custom_elmo_character_encoder.1} parent=5 // pred_region
        %s2563 = ssub.s32 %s16, 2
        // Predicated region
        $region110: #{custom_elmo_character_encoder.1} parent=108 // pred_check
          %p2564 = pneg %p260
        $region111: #{custom_elmo_character_encoder.1} parent=108 // pred_check_branch
          %2566 = sbr.rel (%p2564) target = $region113
        $region112: #{custom_elmo_character_encoder.1} parent=108 // pred_region
          %s2567 = smul.u32 2, %s22
          %p2568 = scmp.lt.s32.totalorder %s2567, 3
          %s2569 = scalar_select %p2568, %s2567, 3
          %s2570 = smul.addr %s2569, 8
          %s2571 = scalar_lea.vmem %s10, %s2570
        $region113: #{custom_elmo_character_encoder.1} parent=108 // pred_fallthru
          _
      $region109: #{custom_elmo_character_encoder.1} parent=5 // pred_fallthru
        _
    $region6: #{custom_elmo_character_encoder.1} parent=1 // loop_footer
      %s20 = sadd.s32 1, %s16
    $region7: #{custom_elmo_character_encoder.1} parent=1 // loop_footer_branch
      %15 = sbr.rel target = $region3
    $region8: #{custom_elmo_character_encoder.1} parent=1 // loop_exit
      _

</llo_original>
